<compile_context>
chip_gen: v7x
topology: tpu7x:2x2x1
jax: 0.10.0
libtpu: 0.0.40
codegen_flags: <defaults>
</compile_context>

<pallas_src>
import math

import jax
import jax.numpy as jnp
import numpy as np
from jax.experimental import pallas as pl
from jax.experimental.pallas import tpu as pltpu

# ---------------- small synthetic config (consistent with the module) --------
HIDDEN = 64          # config.text_config.hidden_size
N_HEADS = 4          # perceiver_config.resampler_n_heads
HEAD_DIM = 32        # perceiver_config.resampler_head_dim
N_KV_HEADS = 2       # perceiver_config.num_key_value_heads
N_REP = N_HEADS // N_KV_HEADS
N_LATENTS = 8        # perceiver_config.resampler_n_latents
DEPTH = 2            # perceiver_config.resampler_depth
INTERMEDIATE = HIDDEN * 4
RMS_EPS = 1e-6

BATCH = 2
SEQ = 16
KV_LEN = SEQ + N_LATENTS

NEG_INF = float(jnp.finfo(jnp.float32).min)
_N_LAYER_W = 10      # weight tensors per perceiver layer


def _rms_norm(x, w, eps=RMS_EPS):
    # x: [rows, HIDDEN] f32, w: [1, HIDDEN] f32
    var = jnp.mean(x * x, axis=-1, keepdims=True)
    return (x * jax.lax.rsqrt(var + eps)) * w


# ------------------------------ fused kernel ----------------------------------
def _resampler_kernel(*refs):
    """Whole Idefics2PerceiverResampler for one batch element per grid step."""
    n_w = DEPTH * _N_LAYER_W
    ctx_ref = refs[0]            # (1, SEQ, HIDDEN)        f32
    mask_ref = refs[1]           # (1, 1, KV_LEN)          f32 additive mask
    lat0_ref = refs[2]           # (N_LATENTS, HIDDEN)     f32 learned latents
    w_refs = refs[3:3 + n_w]     # per-layer weights (10 per layer, see wrapper)
    fnorm_ref = refs[3 + n_w]    # (1, HIDDEN)             f32
    out_ref = refs[4 + n_w]      # (1, N_LATENTS, HIDDEN)  f32
    hid_scr = refs[5 + n_w]      # (KV_LEN, HIDDEN)        f32 VMEM scratch

    bf16 = jnp.bfloat16
    f32 = jnp.float32
    scale = 1.0 / math.sqrt(HEAD_DIM)

    context = ctx_ref[0]                               # [S, H]  f32
    mask = mask_ref[0]                                 # [1, KV] f32
    latents = lat0_ref[...]                            # [L, H]  f32

    for layer in range(DEPTH):
        (lat_nw, ctx_nw, wq3, wk3, wv3, wo3,
         post_nw, wg, wu, wd) = w_refs[layer * _N_LAYER_W:(layer + 1) * _N_LAYER_W]

        # ---- input_latents_norm / input_context_norm (f32) ----
        lat_n = _rms_norm(latents, lat_nw[...])        # [L, H]
        ctx_n = _rms_norm(context, ctx_nw[...])        # [S, H]

        # hidden = concat([context, latents]) built in VMEM scratch (no concat copy)
        hid_scr[pl.ds(0, SEQ), :] = ctx_n
        hid_scr[pl.ds(SEQ, N_LATENTS), :] = lat_n

        lat_bf = lat_n.astype(bf16)                    # [L, H]  bf16
        hid_bf = hid_scr[...].astype(bf16)             # [KV, H] bf16

        # ---- head-batched Q/K/V projections (bf16 in, f32 accumulate) ----
        q3 = jnp.einsum(
            "hlc,hcd->hld",
            jnp.broadcast_to(lat_bf[None], (N_HEADS, N_LATENTS, HIDDEN)),
            wq3[...], preferred_element_type=f32)                      # [Hh, L, D]
        hid_g = jnp.broadcast_to(hid_bf[None], (N_KV_HEADS, KV_LEN, HIDDEN))
        k3 = jnp.einsum("gkc,gcd->gkd", hid_g, wk3[...],
                        preferred_element_type=f32)                    # [G, KV, D]
        v3 = jnp.einsum("gkc,gcd->gkd", hid_g, wv3[...],
                        preferred_element_type=f32)                    # [G, KV, D]

        # GQA repeat_kv: kv group g serves heads [g*N_REP, (g+1)*N_REP)
        k4 = jnp.broadcast_to(
            k3.astype(bf16)[:, None],
            (N_KV_HEADS, N_REP, KV_LEN, HEAD_DIM)).reshape(N_HEADS, KV_LEN, HEAD_DIM)
        v4 = jnp.broadcast_to(
            v3.astype(bf16)[:, None],
            (N_KV_HEADS, N_REP, KV_LEN, HEAD_DIM)).reshape(N_HEADS, KV_LEN, HEAD_DIM)

        # ---- scores + ONE stacked softmax over all heads (f32) ----
        s = jnp.einsum("hld,hkd->hlk", q3.astype(bf16), k4,
                       preferred_element_type=f32) * scale             # [Hh, L, KV]
        s = s + mask[None]                                             # 1 broadcast
        m = jnp.max(s, axis=-1, keepdims=True)
        e = jnp.exp(s - m)
        p = e * pl.reciprocal(jnp.sum(e, axis=-1, keepdims=True), approx=True)

        # ---- attention output + fused o_proj ----
        o3 = jnp.einsum("hlk,hkd->hld", p.astype(bf16), v4,
                        preferred_element_type=f32)                    # [Hh, L, D]
        attn = jnp.einsum("hld,hdo->hlo", o3.astype(bf16), wo3[...],
                          preferred_element_type=f32)                  # [Hh, L, H]
        attn = jnp.sum(attn, axis=0)                                   # [L, H]

        # ---- residual + post_attention_layernorm + gated SiLU MLP + residual ----
        lat1 = latents + attn
        lat1_n = _rms_norm(lat1, post_nw[...])
        x_bf = lat1_n.astype(bf16)
        gate = jnp.dot(x_bf, wg[...], preferred_element_type=f32)      # [L, I]
        up = jnp.dot(x_bf, wu[...], preferred_element_type=f32)        # [L, I]
        act = gate * jax.lax.logistic(gate)                            # SiLU (f32)
        mlp = jnp.dot((act * up).astype(bf16), wd[...],
                      preferred_element_type=f32)                      # [L, H]
        latents = lat1 + mlp

    # final RMSNorm fused into the same kernel
    out_ref[0] = _rms_norm(latents, fnorm_ref[...])


# ------------------------------ wrappers --------------------------------------
def build_additive_mask(attention_mask):
    """[B, SEQ] 0/1 mask -> additive f32 mask [B, 1, KV_LEN]
    (== _prepare_4d_attention_mask with the appended all-ones latent mask,
    broadcast over target length done once inside the kernel)."""
    B = attention_mask.shape[0]
    latent_mask = jnp.ones((B, N_LATENTS), attention_mask.dtype)
    full = jnp.concatenate([attention_mask, latent_mask], axis=-1)      # [B, KV]
    add = jnp.where(full == 0, NEG_INF, 0.0).astype(jnp.float32)
    return add[:, None, :]                                              # [B, 1, KV]


def _kernel_layer_weights(p):
    """Reshape torch-layout weights into the head-batched kernel layout."""
    return [
        p["lat_norm"], p["ctx_norm"],
        p["wq"].reshape(HIDDEN, N_HEADS, HEAD_DIM).transpose(1, 0, 2),     # [Hh,H,D]
        p["wk"].reshape(HIDDEN, N_KV_HEADS, HEAD_DIM).transpose(1, 0, 2),  # [G, H,D]
        p["wv"].reshape(HIDDEN, N_KV_HEADS, HEAD_DIM).transpose(1, 0, 2),  # [G, H,D]
        p["wo"].reshape(N_HEADS, HEAD_DIM, HIDDEN),                        # [Hh,D,H]
        p["post_norm"], p["wg"], p["wu"], p["wd"],
    ]


@jax.jit
def idefics2_perceiver_resampler(context, attention_mask, params):
    B = context.shape[0]
    mask_add = build_additive_mask(attention_mask)

    layer_ws = []
    for p in params["layers"]:
        layer_ws += _kernel_layer_weights(p)

    inputs = [context, mask_add, params["latents"]] + layer_ws + [params["final_norm"]]

    in_specs = (
        [pl.BlockSpec((1, SEQ, HIDDEN), lambda b: (b, 0, 0)),
         pl.BlockSpec((1, 1, KV_LEN), lambda b: (b, 0, 0)),
         pl.BlockSpec((N_LATENTS, HIDDEN), lambda b: (0, 0))]
        + [pl.BlockSpec(w.shape, (lambda b, n=w.ndim: (0,) * n)) for w in layer_ws]
        + [pl.BlockSpec((1, HIDDEN), lambda b: (0, 0))]
    )

    return pl.pallas_call(
        _resampler_kernel,
        out_shape=jax.ShapeDtypeStruct((B, N_LATENTS, HIDDEN), jnp.float32),
        grid=(B,),
        in_specs=in_specs,
        out_specs=pl.BlockSpec((1, N_LATENTS, HIDDEN), lambda b: (b, 0, 0)),
        scratch_shapes=[pltpu.VMEM((KV_LEN, HIDDEN), jnp.float32)],
        compiler_params=pltpu.CompilerParams(
            dimension_semantics=("parallel",)),
    )(*inputs)


# --------------------------- pure-JAX reference --------------------------------
def _ref_rms_norm(x, w):
    var = jnp.mean(x * x, axis=-1, keepdims=True)
    return (x * jax.lax.rsqrt(var + RMS_EPS)) * w


def ref_resampler(context, attention_mask, params):
    bf = jnp.bfloat16
    f32 = jnp.float32
    B = context.shape[0]
    latents = jnp.broadcast_to(params["latents"], (B, N_LATENTS, HIDDEN))
    mask = build_additive_mask(attention_mask)[:, :, None, :]          # [B,1,1,KV]
    for p in params["layers"]:
        lat_n = _ref_rms_norm(latents, p["lat_norm"])
        ctx_n = _ref_rms_norm(context, p["ctx_norm"])
        hidden = jnp.concatenate([ctx_n, lat_n], axis=1)               # [B,KV,H]
        q = jnp.einsum("blh,hd->bld", lat_n.astype(bf), p["wq"],
                       preferred_element_type=f32)
        k = jnp.einsum("bkh,hd->bkd", hidden.astype(bf), p["wk"],
                       preferred_element_type=f32)
        v = jnp.einsum("bkh,hd->bkd", hidden.astype(bf), p["wv"],
                       preferred_element_type=f32)
        q = q.reshape(B, N_LATENTS, N_HEADS, HEAD_DIM).transpose(0, 2, 1, 3)
        k = k.reshape(B, KV_LEN, N_KV_HEADS, HEAD_DIM).transpose(0, 2, 1, 3)
        v = v.reshape(B, KV_LEN, N_KV_HEADS, HEAD_DIM).transpose(0, 2, 1, 3)
        k = jnp.repeat(k, N_REP, axis=1)
        v = jnp.repeat(v, N_REP, axis=1)
        s = jnp.einsum("bnld,bnkd->bnlk", q.astype(bf), k.astype(bf),
                       preferred_element_type=f32) / math.sqrt(HEAD_DIM)
        s = s + mask
        pw = jax.nn.softmax(s, axis=-1)
        o = jnp.einsum("bnlk,bnkd->bnld", pw.astype(bf), v.astype(bf),
                       preferred_element_type=f32)
        o = o.transpose(0, 2, 1, 3).reshape(B, N_LATENTS, N_HEADS * HEAD_DIM)
        attn = jnp.einsum("bld,dh->blh", o.astype(bf), p["wo"],
                          preferred_element_type=f32)
        lat1 = latents + attn
        lat1_n = _ref_rms_norm(lat1, p["post_norm"])
        gate = jnp.einsum("blh,hi->bli", lat1_n.astype(bf), p["wg"],
                          preferred_element_type=f32)
        up = jnp.einsum("blh,hi->bli", lat1_n.astype(bf), p["wu"],
                        preferred_element_type=f32)
        mlp = jnp.einsum("bli,ih->blh", (jax.nn.silu(gate) * up).astype(bf),
                         p["wd"], preferred_element_type=f32)
        latents = lat1 + mlp
    return _ref_rms_norm(latents, params["final_norm"])


# ------------------------------- params init -----------------------------------
def init_params(key):
    def lin(k, fan_in, shape):
        return (jax.random.normal(k, shape, jnp.float32)
                / math.sqrt(fan_in)).astype(jnp.bfloat16)

    layers = []
    for i in range(DEPTH):
        ks = jax.random.split(jax.random.fold_in(key, i), 10)
        layers.append(dict(
            lat_norm=1.0 + 0.1 * jax.random.normal(ks[0], (1, HIDDEN), jnp.float32),
            ctx_norm=1.0 + 0.1 * jax.random.normal(ks[1], (1, HIDDEN), jnp.float32),
            wq=lin(ks[2], HIDDEN, (HIDDEN, N_HEADS * HEAD_DIM)),
            wk=lin(ks[3], HIDDEN, (HIDDEN, N_KV_HEADS * HEAD_DIM)),
            wv=lin(ks[4], HIDDEN, (HIDDEN, N_KV_HEADS * HEAD_DIM)),
            wo=lin(ks[5], N_HEADS * HEAD_DIM, (N_HEADS * HEAD_DIM, HIDDEN)),
            post_norm=1.0 + 0.1 * jax.random.normal(ks[6], (1, HIDDEN), jnp.float32),
            wg=lin(ks[7], HIDDEN, (HIDDEN, INTERMEDIATE)),
            wu=lin(ks[8], HIDDEN, (HIDDEN, INTERMEDIATE)),
            wd=lin(ks[9], INTERMEDIATE, (INTERMEDIATE, HIDDEN)),
        ))
    kf = jax.random.fold_in(key, 1000)
    return dict(
        latents=jnp.ones((N_LATENTS, HIDDEN), jnp.float32),   # matches torch.ones init
        layers=layers,
        final_norm=1.0 + 0.1 * jax.random.normal(kf, (1, HIDDEN), jnp.float32),
    )


# ----------------------------------- main ---------------------------------------
if __name__ == "__main__":
    key = jax.random.PRNGKey(0)
    kc, kp = jax.random.split(key)

    context = jax.random.normal(kc, (BATCH, SEQ, HIDDEN), jnp.float32)
    attention_mask = jnp.ones((BATCH, SEQ), jnp.int32)
    attention_mask = attention_mask.at[0, SEQ - 3:].set(0)   # some padded tokens

    params = init_params(kp)

    out = jax.block_until_ready(
        idefics2_perceiver_resampler(context, attention_mask, params))
    ref = jax.block_until_ready(ref_resampler(context, attention_mask, params))

    np.testing.assert_allclose(np.asarray(out), np.asarray(ref),
                               rtol=2e-2, atol=2e-2)
    assert out.shape == (BATCH, N_LATENTS, HIDDEN)
    print("KERNEL_OK")
</pallas_src>

<mosaic_0001>
module attributes {stable_mosaic.version = 11 : i64} {
  func.func @_resampler_kernel(%arg0: i32, %arg1: memref<1x16x64xf32, #tpu.memory_space<vmem>>, %arg2: memref<1x1x24xf32, #tpu.memory_space<vmem>>, %arg3: memref<8x64xf32, #tpu.memory_space<vmem>>, %arg4: memref<1x64xf32, #tpu.memory_space<vmem>>, %arg5: memref<1x64xf32, #tpu.memory_space<vmem>>, %arg6: memref<4x64x32xbf16, #tpu.memory_space<vmem>>, %arg7: memref<2x64x32xbf16, #tpu.memory_space<vmem>>, %arg8: memref<2x64x32xbf16, #tpu.memory_space<vmem>>, %arg9: memref<4x32x64xbf16, #tpu.memory_space<vmem>>, %arg10: memref<1x64xf32, #tpu.memory_space<vmem>>, %arg11: memref<64x256xbf16, #tpu.memory_space<vmem>>, %arg12: memref<64x256xbf16, #tpu.memory_space<vmem>>, %arg13: memref<256x64xbf16, #tpu.memory_space<vmem>>, %arg14: memref<1x64xf32, #tpu.memory_space<vmem>>, %arg15: memref<1x64xf32, #tpu.memory_space<vmem>>, %arg16: memref<4x64x32xbf16, #tpu.memory_space<vmem>>, %arg17: memref<2x64x32xbf16, #tpu.memory_space<vmem>>, %arg18: memref<2x64x32xbf16, #tpu.memory_space<vmem>>, %arg19: memref<4x32x64xbf16, #tpu.memory_space<vmem>>, %arg20: memref<1x64xf32, #tpu.memory_space<vmem>>, %arg21: memref<64x256xbf16, #tpu.memory_space<vmem>>, %arg22: memref<64x256xbf16, #tpu.memory_space<vmem>>, %arg23: memref<256x64xbf16, #tpu.memory_space<vmem>>, %arg24: memref<1x64xf32, #tpu.memory_space<vmem>>, %arg25: memref<1x8x64xf32, #tpu.memory_space<vmem>>, %arg26: memref<24x64xf32, #tpu.memory_space<vmem>>) attributes {dimension_semantics = [#tpu.dimension_semantics<parallel>], iteration_bounds = array<i64: 2>, scalar_prefetch = 0 : i64, scratch_operands = 1 : i64, tpu.core_type = #tpu.core_type<tc>, window_params = [{transform_indices = @transform_0, window_bounds = array<i64: 1, 16, 64>}, {transform_indices = @transform_1, window_bounds = array<i64: 1, 1, 24>}, {pipeline_mode = #tpu.pipeline_mode<synchronous>, transform_indices = @transform_2, window_bounds = array<i64: 8, 64>}, {pipeline_mode = #tpu.pipeline_mode<synchronous>, transform_indices = @transform_3, window_bounds = array<i64: 1, 64>}, {pipeline_mode = #tpu.pipeline_mode<synchronous>, transform_indices = @transform_4, window_bounds = array<i64: 1, 64>}, {pipeline_mode = #tpu.pipeline_mode<synchronous>, transform_indices = @transform_5, window_bounds = array<i64: 4, 64, 32>}, {pipeline_mode = #tpu.pipeline_mode<synchronous>, transform_indices = @transform_6, window_bounds = array<i64: 2, 64, 32>}, {pipeline_mode = #tpu.pipeline_mode<synchronous>, transform_indices = @transform_7, window_bounds = array<i64: 2, 64, 32>}, {pipeline_mode = #tpu.pipeline_mode<synchronous>, transform_indices = @transform_8, window_bounds = array<i64: 4, 32, 64>}, {pipeline_mode = #tpu.pipeline_mode<synchronous>, transform_indices = @transform_9, window_bounds = array<i64: 1, 64>}, {pipeline_mode = #tpu.pipeline_mode<synchronous>, transform_indices = @transform_10, window_bounds = array<i64: 64, 256>}, {pipeline_mode = #tpu.pipeline_mode<synchronous>, transform_indices = @transform_11, window_bounds = array<i64: 64, 256>}, {pipeline_mode = #tpu.pipeline_mode<synchronous>, transform_indices = @transform_12, window_bounds = array<i64: 256, 64>}, {pipeline_mode = #tpu.pipeline_mode<synchronous>, transform_indices = @transform_13, window_bounds = array<i64: 1, 64>}, {pipeline_mode = #tpu.pipeline_mode<synchronous>, transform_indices = @transform_14, window_bounds = array<i64: 1, 64>}, {pipeline_mode = #tpu.pipeline_mode<synchronous>, transform_indices = @transform_15, window_bounds = array<i64: 4, 64, 32>}, {pipeline_mode = #tpu.pipeline_mode<synchronous>, transform_indices = @transform_16, window_bounds = array<i64: 2, 64, 32>}, {pipeline_mode = #tpu.pipeline_mode<synchronous>, transform_indices = @transform_17, window_bounds = array<i64: 2, 64, 32>}, {pipeline_mode = #tpu.pipeline_mode<synchronous>, transform_indices = @transform_18, window_bounds = array<i64: 4, 32, 64>}, {pipeline_mode = #tpu.pipeline_mode<synchronous>, transform_indices = @transform_19, window_bounds = array<i64: 1, 64>}, {pipeline_mode = #tpu.pipeline_mode<synchronous>, transform_indices = @transform_20, window_bounds = array<i64: 64, 256>}, {pipeline_mode = #tpu.pipeline_mode<synchronous>, transform_indices = @transform_21, window_bounds = array<i64: 64, 256>}, {pipeline_mode = #tpu.pipeline_mode<synchronous>, transform_indices = @transform_22, window_bounds = array<i64: 256, 64>}, {pipeline_mode = #tpu.pipeline_mode<synchronous>, transform_indices = @transform_23, window_bounds = array<i64: 1, 64>}, {transform_indices = @transform_24, window_bounds = array<i64: 1, 8, 64>}]} {
    %c0 = arith.constant 0 : index
    %c0_0 = arith.constant 0 : index
    %c0_1 = arith.constant 0 : index
    %0 = vector.load %arg1[%c0, %c0_0, %c0_1] : memref<1x16x64xf32, #tpu.memory_space<vmem>>, vector<1x16x64xf32>
    %1 = vector.shape_cast %0 : vector<1x16x64xf32> to vector<16x64xf32>
    %c0_2 = arith.constant 0 : index
    %c0_3 = arith.constant 0 : index
    %c0_4 = arith.constant 0 : index
    %2 = vector.load %arg2[%c0_2, %c0_3, %c0_4] : memref<1x1x24xf32, #tpu.memory_space<vmem>>, vector<1x1x24xf32>
    %3 = vector.shape_cast %2 : vector<1x1x24xf32> to vector<1x24xf32>
    %c0_5 = arith.constant 0 : index
    %c0_6 = arith.constant 0 : index
    %4 = vector.load %arg3[%c0_5, %c0_6] : memref<8x64xf32, #tpu.memory_space<vmem>>, vector<8x64xf32>
    %c0_7 = arith.constant 0 : index
    %c0_8 = arith.constant 0 : index
    %5 = vector.load %arg4[%c0_7, %c0_8] : memref<1x64xf32, #tpu.memory_space<vmem>>, vector<1x64xf32>
    %6 = arith.mulf %4, %4 : vector<8x64xf32>
    %cst = arith.constant dense<0.000000e+00> : vector<8xf32>
    %7 = vector.multi_reduction <add>, %6, %cst [1] : vector<8x64xf32> to vector<8xf32>
    %8 = vector.shape_cast %7 : vector<8xf32> to vector<8x1xf32>
    %cst_9 = arith.constant 6.400000e+01 : f32
    %9 = vector.broadcast %cst_9 : f32 to vector<8x1xf32>
    %10 = arith.divf %8, %9 : vector<8x1xf32>
    %cst_10 = arith.constant 9.99999997E-7 : f32
    %11 = vector.broadcast %cst_10 : f32 to vector<8x1xf32>
    %12 = arith.addf %10, %11 : vector<8x1xf32>
    %13 = math.rsqrt %12 : vector<8x1xf32>
    %14 = vector.broadcast %13 : vector<8x1xf32> to vector<8x64xf32>
    %15 = arith.mulf %4, %14 : vector<8x64xf32>
    %16 = vector.broadcast %5 : vector<1x64xf32> to vector<8x64xf32>
    %17 = arith.mulf %15, %16 : vector<8x64xf32>
    %c0_11 = arith.constant 0 : index
    %c0_12 = arith.constant 0 : index
    %18 = vector.load %arg5[%c0_11, %c0_12] : memref<1x64xf32, #tpu.memory_space<vmem>>, vector<1x64xf32>
    %19 = arith.mulf %1, %1 : vector<16x64xf32>
    %cst_13 = arith.constant dense<0.000000e+00> : vector<16xf32>
    %20 = vector.multi_reduction <add>, %19, %cst_13 [1] : vector<16x64xf32> to vector<16xf32>
    %21 = vector.shape_cast %20 : vector<16xf32> to vector<16x1xf32>
    %cst_14 = arith.constant 6.400000e+01 : f32
    %22 = vector.broadcast %cst_14 : f32 to vector<16x1xf32>
    %23 = arith.divf %21, %22 : vector<16x1xf32>
    %cst_15 = arith.constant 9.99999997E-7 : f32
    %24 = vector.broadcast %cst_15 : f32 to vector<16x1xf32>
    %25 = arith.addf %23, %24 : vector<16x1xf32>
    %26 = math.rsqrt %25 : vector<16x1xf32>
    %27 = vector.broadcast %26 : vector<16x1xf32> to vector<16x64xf32>
    %28 = arith.mulf %1, %27 : vector<16x64xf32>
    %29 = vector.broadcast %18 : vector<1x64xf32> to vector<16x64xf32>
    %30 = arith.mulf %28, %29 : vector<16x64xf32>
    %c0_16 = arith.constant 0 : index
    %c0_17 = arith.constant 0 : index
    %31 = vector.load %arg26[%c0_16, %c0_17] : memref<24x64xf32, #tpu.memory_space<vmem>>, vector<16x64xf32>
    tpu.vector_store %arg26[%c0_16, %c0_17], %30 {strides = array<i32>} : memref<24x64xf32, #tpu.memory_space<vmem>>, vector<16x64xf32>,
    %c16 = arith.constant 16 : index
    %c0_18 = arith.constant 0 : index
    %32 = vector.load %arg26[%c16, %c0_18] : memref<24x64xf32, #tpu.memory_space<vmem>>, vector<8x64xf32>
    tpu.vector_store %arg26[%c16, %c0_18], %17 {strides = array<i32>} : memref<24x64xf32, #tpu.memory_space<vmem>>, vector<8x64xf32>,
    %33 = arith.truncf %17 : vector<8x64xf32> to vector<8x64xbf16>
    %c0_19 = arith.constant 0 : index
    %c0_20 = arith.constant 0 : index
    %34 = vector.load %arg26[%c0_19, %c0_20] : memref<24x64xf32, #tpu.memory_space<vmem>>, vector<24x64xf32>
    %35 = arith.truncf %34 : vector<24x64xf32> to vector<24x64xbf16>
    %36 = vector.shape_cast %33 : vector<8x64xbf16> to vector<1x8x64xbf16>
    %37 = vector.shape_cast %36 : vector<1x8x64xbf16> to vector<1x8x64xbf16>
    %38 = vector.broadcast %37 : vector<1x8x64xbf16> to vector<4x8x64xbf16>
    %c0_21 = arith.constant 0 : index
    %c0_22 = arith.constant 0 : index
    %c0_23 = arith.constant 0 : index
    %39 = vector.load %arg6[%c0_21, %c0_22, %c0_23] : memref<4x64x32xbf16, #tpu.memory_space<vmem>>, vector<4x64x32xbf16>
    "tpu.trace_start"() <{level = 10 : i32, message = "hlc,hcd->hld"}> : () -> ()
    %cst_24 = arith.constant dense<0.000000e+00> : vector<4x8x32xf32>
    %40 = tpu.matmul %38, %39, %cst_24 {dimension_numbers = #tpu.dot_dimension_numbers<[2], [1], [1], [2], [0, 0, 0, 1, 1, 2], [0], [0]>} : vector<4x8x64xbf16>, vector<4x64x32xbf16>, vector<4x8x32xf32> -> vector<4x8x32xf32>
    "tpu.trace_stop"() : () -> ()
    %41 = vector.shape_cast %35 : vector<24x64xbf16> to vector<1x24x64xbf16>
    %42 = vector.shape_cast %41 : vector<1x24x64xbf16> to vector<1x24x64xbf16>
    %43 = vector.broadcast %42 : vector<1x24x64xbf16> to vector<2x24x64xbf16>
    %c0_25 = arith.constant 0 : index
    %c0_26 = arith.constant 0 : index
    %c0_27 = arith.constant 0 : index
    %44 = vector.load %arg7[%c0_25, %c0_26, %c0_27] : memref<2x64x32xbf16, #tpu.memory_space<vmem>>, vector<2x64x32xbf16>
    "tpu.trace_start"() <{level = 10 : i32, message = "gkc,gcd->gkd"}> : () -> ()
    %cst_28 = arith.constant dense<0.000000e+00> : vector<2x24x32xf32>
    %45 = tpu.matmul %43, %44, %cst_28 {dimension_numbers = #tpu.dot_dimension_numbers<[2], [1], [1], [2], [0, 0, 0, 1, 1, 2], [0], [0]>} : vector<2x24x64xbf16>, vector<2x64x32xbf16>, vector<2x24x32xf32> -> vector<2x24x32xf32>
    "tpu.trace_stop"() : () -> ()
    %c0_29 = arith.constant 0 : index
    %c0_30 = arith.constant 0 : index
    %c0_31 = arith.constant 0 : index
    %46 = vector.load %arg8[%c0_29, %c0_30, %c0_31] : memref<2x64x32xbf16, #tpu.memory_space<vmem>>, vector<2x64x32xbf16>
    "tpu.trace_start"() <{level = 10 : i32, message = "gkc,gcd->gkd"}> : () -> ()
    %cst_32 = arith.constant dense<0.000000e+00> : vector<2x24x32xf32>
    %47 = tpu.matmul %43, %46, %cst_32 {dimension_numbers = #tpu.dot_dimension_numbers<[2], [1], [1], [2], [0, 0, 0, 1, 1, 2], [0], [0]>} : vector<2x24x64xbf16>, vector<2x64x32xbf16>, vector<2x24x32xf32> -> vector<2x24x32xf32>
    "tpu.trace_stop"() : () -> ()
    %48 = arith.truncf %45 : vector<2x24x32xf32> to vector<2x24x32xbf16>
    %49 = vector.shape_cast %48 : vector<2x24x32xbf16> to vector<2x1x24x32xbf16>
    %50 = vector.shape_cast %49 : vector<2x1x24x32xbf16> to vector<2x1x24x32xbf16>
    %51 = vector.broadcast %50 : vector<2x1x24x32xbf16> to vector<2x2x24x32xbf16>
    %52 = vector.shape_cast %51 : vector<2x2x24x32xbf16> to vector<4x24x32xbf16>
    %53 = arith.truncf %47 : vector<2x24x32xf32> to vector<2x24x32xbf16>
    %54 = vector.shape_cast %53 : vector<2x24x32xbf16> to vector<2x1x24x32xbf16>
    %55 = vector.shape_cast %54 : vector<2x1x24x32xbf16> to vector<2x1x24x32xbf16>
    %56 = vector.broadcast %55 : vector<2x1x24x32xbf16> to vector<2x2x24x32xbf16>
    %57 = vector.shape_cast %56 : vector<2x2x24x32xbf16> to vector<4x24x32xbf16>
    %58 = arith.truncf %40 : vector<4x8x32xf32> to vector<4x8x32xbf16>
    "tpu.trace_start"() <{level = 10 : i32, message = "hld,hkd->hlk"}> : () -> ()
    %cst_33 = arith.constant dense<0.000000e+00> : vector<4x8x24xf32>
    %59 = tpu.matmul %58, %52, %cst_33 {dimension_numbers = #tpu.dot_dimension_numbers<[2], [2], [1], [1], [0, 0, 0, 1, 1, 1], [0], [0]>} : vector<4x8x32xbf16>, vector<4x24x32xbf16>, vector<4x8x24xf32> -> vector<4x8x24xf32>
    "tpu.trace_stop"() : () -> ()
    %cst_34 = arith.constant 0.176776692 : f32
    %60 = vector.broadcast %cst_34 : f32 to vector<4x8x24xf32>
    %61 = arith.mulf %59, %60 : vector<4x8x24xf32>
    %62 = vector.shape_cast %3 : vector<1x24xf32> to vector<1x1x24xf32>
    %63 = vector.broadcast %62 : vector<1x1x24xf32> to vector<4x8x24xf32>
    %64 = arith.addf %61, %63 : vector<4x8x24xf32>
    %cst_35 = arith.constant dense<0xFF800000> : vector<4x8xf32>
    %65 = vector.multi_reduction <maximumf>, %64, %cst_35 [2] : vector<4x8x24xf32> to vector<4x8xf32>
    %66 = vector.shape_cast %65 : vector<4x8xf32> to vector<4x8x1xf32>
    %67 = vector.broadcast %66 : vector<4x8x1xf32> to vector<4x8x24xf32>
    %68 = arith.subf %64, %67 : vector<4x8x24xf32>
    %69 = math.exp %68 : vector<4x8x24xf32>
    %cst_36 = arith.constant dense<0.000000e+00> : vector<4x8xf32>
    %70 = vector.multi_reduction <add>, %69, %cst_36 [2] : vector<4x8x24xf32> to vector<4x8xf32>
    %71 = vector.shape_cast %70 : vector<4x8xf32> to vector<4x8x1xf32>
    %72 = tpu.reciprocal %71 {approx = true} : vector<4x8x1xf32> -> vector<4x8x1xf32>
    %73 = vector.broadcast %72 : vector<4x8x1xf32> to vector<4x8x24xf32>
    %74 = arith.mulf %69, %73 : vector<4x8x24xf32>
    %75 = arith.truncf %74 : vector<4x8x24xf32> to vector<4x8x24xbf16>
    "tpu.trace_start"() <{level = 10 : i32, message = "hlk,hkd->hld"}> : () -> ()
    %cst_37 = arith.constant dense<0.000000e+00> : vector<4x8x32xf32>
    %76 = tpu.matmul %75, %57, %cst_37 {dimension_numbers = #tpu.dot_dimension_numbers<[2], [1], [1], [2], [0, 0, 0, 1, 1, 2], [0], [0]>} : vector<4x8x24xbf16>, vector<4x24x32xbf16>, vector<4x8x32xf32> -> vector<4x8x32xf32>
    "tpu.trace_stop"() : () -> ()
    %77 = arith.truncf %76 : vector<4x8x32xf32> to vector<4x8x32xbf16>
    %c0_38 = arith.constant 0 : index
    %c0_39 = arith.constant 0 : index
    %c0_40 = arith.constant 0 : index
    %78 = vector.load %arg9[%c0_38, %c0_39, %c0_40] : memref<4x32x64xbf16, #tpu.memory_space<vmem>>, vector<4x32x64xbf16>
    "tpu.trace_start"() <{level = 10 : i32, message = "hld,hdo->hlo"}> : () -> ()
    %cst_41 = arith.constant dense<0.000000e+00> : vector<4x8x64xf32>
    %79 = tpu.matmul %77, %78, %cst_41 {dimension_numbers = #tpu.dot_dimension_numbers<[2], [1], [1], [2], [0, 0, 0, 1, 1, 2], [0], [0]>} : vector<4x8x32xbf16>, vector<4x32x64xbf16>, vector<4x8x64xf32> -> vector<4x8x64xf32>
    "tpu.trace_stop"() : () -> ()
    %cst_42 = arith.constant dense<0.000000e+00> : vector<8x64xf32>
    %80 = vector.multi_reduction <add>, %79, %cst_42 [0] : vector<4x8x64xf32> to vector<8x64xf32>
    %81 = arith.addf %4, %80 : vector<8x64xf32>
    %c0_43 = arith.constant 0 : index
    %c0_44 = arith.constant 0 : index
    %82 = vector.load %arg10[%c0_43, %c0_44] : memref<1x64xf32, #tpu.memory_space<vmem>>, vector<1x64xf32>
    %83 = arith.mulf %81, %81 : vector<8x64xf32>
    %cst_45 = arith.constant dense<0.000000e+00> : vector<8xf32>
    %84 = vector.multi_reduction <add>, %83, %cst_45 [1] : vector<8x64xf32> to vector<8xf32>
    %85 = vector.shape_cast %84 : vector<8xf32> to vector<8x1xf32>
    %cst_46 = arith.constant 6.400000e+01 : f32
    %86 = vector.broadcast %cst_46 : f32 to vector<8x1xf32>
    %87 = arith.divf %85, %86 : vector<8x1xf32>
    %cst_47 = arith.constant 9.99999997E-7 : f32
    %88 = vector.broadcast %cst_47 : f32 to vector<8x1xf32>
    %89 = arith.addf %87, %88 : vector<8x1xf32>
    %90 = math.rsqrt %89 : vector<8x1xf32>
    %91 = vector.broadcast %90 : vector<8x1xf32> to vector<8x64xf32>
    %92 = arith.mulf %81, %91 : vector<8x64xf32>
    %93 = vector.broadcast %82 : vector<1x64xf32> to vector<8x64xf32>
    %94 = arith.mulf %92, %93 : vector<8x64xf32>
    %95 = arith.truncf %94 : vector<8x64xf32> to vector<8x64xbf16>
    %c0_48 = arith.constant 0 : index
    %c0_49 = arith.constant 0 : index
    %96 = vector.load %arg11[%c0_48, %c0_49] : memref<64x256xbf16, #tpu.memory_space<vmem>>, vector<64x256xbf16>
    %cst_50 = arith.constant dense<0.000000e+00> : vector<8x256xf32>
    %97 = tpu.matmul %95, %96, %cst_50 {dimension_numbers = #tpu.dot_dimension_numbers<[1], [0], [0], [1], [0, 0, 1, 1], [], []>} : vector<8x64xbf16>, vector<64x256xbf16>, vector<8x256xf32> -> vector<8x256xf32>
    %c0_51 = arith.constant 0 : index
    %c0_52 = arith.constant 0 : index
    %98 = vector.load %arg12[%c0_51, %c0_52] : memref<64x256xbf16, #tpu.memory_space<vmem>>, vector<64x256xbf16>
    %cst_53 = arith.constant dense<0.000000e+00> : vector<8x256xf32>
    %99 = tpu.matmul %95, %98, %cst_53 {dimension_numbers = #tpu.dot_dimension_numbers<[1], [0], [0], [1], [0, 0, 1, 1], [], []>} : vector<8x64xbf16>, vector<64x256xbf16>, vector<8x256xf32> -> vector<8x256xf32>
    %100 = arith.negf %97 : vector<8x256xf32>
    %101 = math.exp %100 : vector<8x256xf32>
    %cst_54 = arith.constant 1.000000e+00 : f32
    %102 = vector.broadcast %cst_54 : f32 to vector<8x256xf32>
    %103 = arith.addf %102, %101 : vector<8x256xf32>
    %104 = arith.divf %102, %103 : vector<8x256xf32>
    %105 = arith.mulf %97, %104 : vector<8x256xf32>
    %106 = arith.mulf %105, %99 : vector<8x256xf32>
    %107 = arith.truncf %106 : vector<8x256xf32> to vector<8x256xbf16>
    %c0_55 = arith.constant 0 : index
    %c0_56 = arith.constant 0 : index
    %108 = vector.load %arg13[%c0_55, %c0_56] : memref<256x64xbf16, #tpu.memory_space<vmem>>, vector<256x64xbf16>
    %cst_57 = arith.constant dense<0.000000e+00> : vector<8x64xf32>
    %109 = tpu.matmul %107, %108, %cst_57 {dimension_numbers = #tpu.dot_dimension_numbers<[1], [0], [0], [1], [0, 0, 1, 1], [], []>} : vector<8x256xbf16>, vector<256x64xbf16>, vector<8x64xf32> -> vector<8x64xf32>
    %110 = arith.addf %81, %109 : vector<8x64xf32>
    %c0_58 = arith.constant 0 : index
    %c0_59 = arith.constant 0 : index
    %111 = vector.load %arg14[%c0_58, %c0_59] : memref<1x64xf32, #tpu.memory_space<vmem>>, vector<1x64xf32>
    %112 = arith.mulf %110, %110 : vector<8x64xf32>
    %cst_60 = arith.constant dense<0.000000e+00> : vector<8xf32>
    %113 = vector.multi_reduction <add>, %112, %cst_60 [1] : vector<8x64xf32> to vector<8xf32>
    %114 = vector.shape_cast %113 : vector<8xf32> to vector<8x1xf32>
    %cst_61 = arith.constant 6.400000e+01 : f32
    %115 = vector.broadcast %cst_61 : f32 to vector<8x1xf32>
    %116 = arith.divf %114, %115 : vector<8x1xf32>
    %cst_62 = arith.constant 9.99999997E-7 : f32
    %117 = vector.broadcast %cst_62 : f32 to vector<8x1xf32>
    %118 = arith.addf %116, %117 : vector<8x1xf32>
    %119 = math.rsqrt %118 : vector<8x1xf32>
    %120 = vector.broadcast %119 : vector<8x1xf32> to vector<8x64xf32>
    %121 = arith.mulf %110, %120 : vector<8x64xf32>
    %122 = vector.broadcast %111 : vector<1x64xf32> to vector<8x64xf32>
    %123 = arith.mulf %121, %122 : vector<8x64xf32>
    %c0_63 = arith.constant 0 : index
    %c0_64 = arith.constant 0 : index
    %124 = vector.load %arg15[%c0_63, %c0_64] : memref<1x64xf32, #tpu.memory_space<vmem>>, vector<1x64xf32>
    %125 = arith.mulf %1, %1 : vector<16x64xf32>
    %cst_65 = arith.constant dense<0.000000e+00> : vector<16xf32>
    %126 = vector.multi_reduction <add>, %125, %cst_65 [1] : vector<16x64xf32> to vector<16xf32>
    %127 = vector.shape_cast %126 : vector<16xf32> to vector<16x1xf32>
    %cst_66 = arith.constant 6.400000e+01 : f32
    %128 = vector.broadcast %cst_66 : f32 to vector<16x1xf32>
    %129 = arith.divf %127, %128 : vector<16x1xf32>
    %cst_67 = arith.constant 9.99999997E-7 : f32
    %130 = vector.broadcast %cst_67 : f32 to vector<16x1xf32>
    %131 = arith.addf %129, %130 : vector<16x1xf32>
    %132 = math.rsqrt %131 : vector<16x1xf32>
    %133 = vector.broadcast %132 : vector<16x1xf32> to vector<16x64xf32>
    %134 = arith.mulf %1, %133 : vector<16x64xf32>
    %135 = vector.broadcast %124 : vector<1x64xf32> to vector<16x64xf32>
    %136 = arith.mulf %134, %135 : vector<16x64xf32>
    %c0_68 = arith.constant 0 : index
    %c0_69 = arith.constant 0 : index
    %137 = vector.load %arg26[%c0_68, %c0_69] : memref<24x64xf32, #tpu.memory_space<vmem>>, vector<16x64xf32>
    tpu.vector_store %arg26[%c0_68, %c0_69], %136 {strides = array<i32>} : memref<24x64xf32, #tpu.memory_space<vmem>>, vector<16x64xf32>,
    %c16_70 = arith.constant 16 : index
    %c0_71 = arith.constant 0 : index
    %138 = vector.load %arg26[%c16_70, %c0_71] : memref<24x64xf32, #tpu.memory_space<vmem>>, vector<8x64xf32>
    tpu.vector_store %arg26[%c16_70, %c0_71], %123 {strides = array<i32>} : memref<24x64xf32, #tpu.memory_space<vmem>>, vector<8x64xf32>,
    %139 = arith.truncf %123 : vector<8x64xf32> to vector<8x64xbf16>
    %c0_72 = arith.constant 0 : index
    %c0_73 = arith.constant 0 : index
    %140 = vector.load %arg26[%c0_72, %c0_73] : memref<24x64xf32, #tpu.memory_space<vmem>>, vector<24x64xf32>
    %141 = arith.truncf %140 : vector<24x64xf32> to vector<24x64xbf16>
    %142 = vector.shape_cast %139 : vector<8x64xbf16> to vector<1x8x64xbf16>
    %143 = vector.shape_cast %142 : vector<1x8x64xbf16> to vector<1x8x64xbf16>
    %144 = vector.broadcast %143 : vector<1x8x64xbf16> to vector<4x8x64xbf16>
    %c0_74 = arith.constant 0 : index
    %c0_75 = arith.constant 0 : index
    %c0_76 = arith.constant 0 : index
    %145 = vector.load %arg16[%c0_74, %c0_75, %c0_76] : memref<4x64x32xbf16, #tpu.memory_space<vmem>>, vector<4x64x32xbf16>
    "tpu.trace_start"() <{level = 10 : i32, message = "hlc,hcd->hld"}> : () -> ()
    %cst_77 = arith.constant dense<0.000000e+00> : vector<4x8x32xf32>
    %146 = tpu.matmul %144, %145, %cst_77 {dimension_numbers = #tpu.dot_dimension_numbers<[2], [1], [1], [2], [0, 0, 0, 1, 1, 2], [0], [0]>} : vector<4x8x64xbf16>, vector<4x64x32xbf16>, vector<4x8x32xf32> -> vector<4x8x32xf32>
    "tpu.trace_stop"() : () -> ()
    %147 = vector.shape_cast %141 : vector<24x64xbf16> to vector<1x24x64xbf16>
    %148 = vector.shape_cast %147 : vector<1x24x64xbf16> to vector<1x24x64xbf16>
    %149 = vector.broadcast %148 : vector<1x24x64xbf16> to vector<2x24x64xbf16>
    %c0_78 = arith.constant 0 : index
    %c0_79 = arith.constant 0 : index
    %c0_80 = arith.constant 0 : index
    %150 = vector.load %arg17[%c0_78, %c0_79, %c0_80] : memref<2x64x32xbf16, #tpu.memory_space<vmem>>, vector<2x64x32xbf16>
    "tpu.trace_start"() <{level = 10 : i32, message = "gkc,gcd->gkd"}> : () -> ()
    %cst_81 = arith.constant dense<0.000000e+00> : vector<2x24x32xf32>
    %151 = tpu.matmul %149, %150, %cst_81 {dimension_numbers = #tpu.dot_dimension_numbers<[2], [1], [1], [2], [0, 0, 0, 1, 1, 2], [0], [0]>} : vector<2x24x64xbf16>, vector<2x64x32xbf16>, vector<2x24x32xf32> -> vector<2x24x32xf32>
    "tpu.trace_stop"() : () -> ()
    %c0_82 = arith.constant 0 : index
    %c0_83 = arith.constant 0 : index
    %c0_84 = arith.constant 0 : index
    %152 = vector.load %arg18[%c0_82, %c0_83, %c0_84] : memref<2x64x32xbf16, #tpu.memory_space<vmem>>, vector<2x64x32xbf16>
    "tpu.trace_start"() <{level = 10 : i32, message = "gkc,gcd->gkd"}> : () -> ()
    %cst_85 = arith.constant dense<0.000000e+00> : vector<2x24x32xf32>
    %153 = tpu.matmul %149, %152, %cst_85 {dimension_numbers = #tpu.dot_dimension_numbers<[2], [1], [1], [2], [0, 0, 0, 1, 1, 2], [0], [0]>} : vector<2x24x64xbf16>, vector<2x64x32xbf16>, vector<2x24x32xf32> -> vector<2x24x32xf32>
    "tpu.trace_stop"() : () -> ()
    %154 = arith.truncf %151 : vector<2x24x32xf32> to vector<2x24x32xbf16>
    %155 = vector.shape_cast %154 : vector<2x24x32xbf16> to vector<2x1x24x32xbf16>
    %156 = vector.shape_cast %155 : vector<2x1x24x32xbf16> to vector<2x1x24x32xbf16>
    %157 = vector.broadcast %156 : vector<2x1x24x32xbf16> to vector<2x2x24x32xbf16>
    %158 = vector.shape_cast %157 : vector<2x2x24x32xbf16> to vector<4x24x32xbf16>
    %159 = arith.truncf %153 : vector<2x24x32xf32> to vector<2x24x32xbf16>
    %160 = vector.shape_cast %159 : vector<2x24x32xbf16> to vector<2x1x24x32xbf16>
    %161 = vector.shape_cast %160 : vector<2x1x24x32xbf16> to vector<2x1x24x32xbf16>
    %162 = vector.broadcast %161 : vector<2x1x24x32xbf16> to vector<2x2x24x32xbf16>
    %163 = vector.shape_cast %162 : vector<2x2x24x32xbf16> to vector<4x24x32xbf16>
    %164 = arith.truncf %146 : vector<4x8x32xf32> to vector<4x8x32xbf16>
    "tpu.trace_start"() <{level = 10 : i32, message = "hld,hkd->hlk"}> : () -> ()
    %cst_86 = arith.constant dense<0.000000e+00> : vector<4x8x24xf32>
    %165 = tpu.matmul %164, %158, %cst_86 {dimension_numbers = #tpu.dot_dimension_numbers<[2], [2], [1], [1], [0, 0, 0, 1, 1, 1], [0], [0]>} : vector<4x8x32xbf16>, vector<4x24x32xbf16>, vector<4x8x24xf32> -> vector<4x8x24xf32>
    "tpu.trace_stop"() : () -> ()
    %cst_87 = arith.constant 0.176776692 : f32
    %166 = vector.broadcast %cst_87 : f32 to vector<4x8x24xf32>
    %167 = arith.mulf %165, %166 : vector<4x8x24xf32>
    %168 = vector.shape_cast %3 : vector<1x24xf32> to vector<1x1x24xf32>
    %169 = vector.broadcast %168 : vector<1x1x24xf32> to vector<4x8x24xf32>
    %170 = arith.addf %167, %169 : vector<4x8x24xf32>
    %cst_88 = arith.constant dense<0xFF800000> : vector<4x8xf32>
    %171 = vector.multi_reduction <maximumf>, %170, %cst_88 [2] : vector<4x8x24xf32> to vector<4x8xf32>
    %172 = vector.shape_cast %171 : vector<4x8xf32> to vector<4x8x1xf32>
    %173 = vector.broadcast %172 : vector<4x8x1xf32> to vector<4x8x24xf32>
    %174 = arith.subf %170, %173 : vector<4x8x24xf32>
    %175 = math.exp %174 : vector<4x8x24xf32>
    %cst_89 = arith.constant dense<0.000000e+00> : vector<4x8xf32>
    %176 = vector.multi_reduction <add>, %175, %cst_89 [2] : vector<4x8x24xf32> to vector<4x8xf32>
    %177 = vector.shape_cast %176 : vector<4x8xf32> to vector<4x8x1xf32>
    %178 = tpu.reciprocal %177 {approx = true} : vector<4x8x1xf32> -> vector<4x8x1xf32>
    %179 = vector.broadcast %178 : vector<4x8x1xf32> to vector<4x8x24xf32>
    %180 = arith.mulf %175, %179 : vector<4x8x24xf32>
    %181 = arith.truncf %180 : vector<4x8x24xf32> to vector<4x8x24xbf16>
    "tpu.trace_start"() <{level = 10 : i32, message = "hlk,hkd->hld"}> : () -> ()
    %cst_90 = arith.constant dense<0.000000e+00> : vector<4x8x32xf32>
    %182 = tpu.matmul %181, %163, %cst_90 {dimension_numbers = #tpu.dot_dimension_numbers<[2], [1], [1], [2], [0, 0, 0, 1, 1, 2], [0], [0]>} : vector<4x8x24xbf16>, vector<4x24x32xbf16>, vector<4x8x32xf32> -> vector<4x8x32xf32>
    "tpu.trace_stop"() : () -> ()
    %183 = arith.truncf %182 : vector<4x8x32xf32> to vector<4x8x32xbf16>
    %c0_91 = arith.constant 0 : index
    %c0_92 = arith.constant 0 : index
    %c0_93 = arith.constant 0 : index
    %184 = vector.load %arg19[%c0_91, %c0_92, %c0_93] : memref<4x32x64xbf16, #tpu.memory_space<vmem>>, vector<4x32x64xbf16>
    "tpu.trace_start"() <{level = 10 : i32, message = "hld,hdo->hlo"}> : () -> ()
    %cst_94 = arith.constant dense<0.000000e+00> : vector<4x8x64xf32>
    %185 = tpu.matmul %183, %184, %cst_94 {dimension_numbers = #tpu.dot_dimension_numbers<[2], [1], [1], [2], [0, 0, 0, 1, 1, 2], [0], [0]>} : vector<4x8x32xbf16>, vector<4x32x64xbf16>, vector<4x8x64xf32> -> vector<4x8x64xf32>
    "tpu.trace_stop"() : () -> ()
    %cst_95 = arith.constant dense<0.000000e+00> : vector<8x64xf32>
    %186 = vector.multi_reduction <add>, %185, %cst_95 [0] : vector<4x8x64xf32> to vector<8x64xf32>
    %187 = arith.addf %110, %186 : vector<8x64xf32>
    %c0_96 = arith.constant 0 : index
    %c0_97 = arith.constant 0 : index
    %188 = vector.load %arg20[%c0_96, %c0_97] : memref<1x64xf32, #tpu.memory_space<vmem>>, vector<1x64xf32>
    %189 = arith.mulf %187, %187 : vector<8x64xf32>
    %cst_98 = arith.constant dense<0.000000e+00> : vector<8xf32>
    %190 = vector.multi_reduction <add>, %189, %cst_98 [1] : vector<8x64xf32> to vector<8xf32>
    %191 = vector.shape_cast %190 : vector<8xf32> to vector<8x1xf32>
    %cst_99 = arith.constant 6.400000e+01 : f32
    %192 = vector.broadcast %cst_99 : f32 to vector<8x1xf32>
    %193 = arith.divf %191, %192 : vector<8x1xf32>
    %cst_100 = arith.constant 9.99999997E-7 : f32
    %194 = vector.broadcast %cst_100 : f32 to vector<8x1xf32>
    %195 = arith.addf %193, %194 : vector<8x1xf32>
    %196 = math.rsqrt %195 : vector<8x1xf32>
    %197 = vector.broadcast %196 : vector<8x1xf32> to vector<8x64xf32>
    %198 = arith.mulf %187, %197 : vector<8x64xf32>
    %199 = vector.broadcast %188 : vector<1x64xf32> to vector<8x64xf32>
    %200 = arith.mulf %198, %199 : vector<8x64xf32>
    %201 = arith.truncf %200 : vector<8x64xf32> to vector<8x64xbf16>
    %c0_101 = arith.constant 0 : index
    %c0_102 = arith.constant 0 : index
    %202 = vector.load %arg21[%c0_101, %c0_102] : memref<64x256xbf16, #tpu.memory_space<vmem>>, vector<64x256xbf16>
    %cst_103 = arith.constant dense<0.000000e+00> : vector<8x256xf32>
    %203 = tpu.matmul %201, %202, %cst_103 {dimension_numbers = #tpu.dot_dimension_numbers<[1], [0], [0], [1], [0, 0, 1, 1], [], []>} : vector<8x64xbf16>, vector<64x256xbf16>, vector<8x256xf32> -> vector<8x256xf32>
    %c0_104 = arith.constant 0 : index
    %c0_105 = arith.constant 0 : index
    %204 = vector.load %arg22[%c0_104, %c0_105] : memref<64x256xbf16, #tpu.memory_space<vmem>>, vector<64x256xbf16>
    %cst_106 = arith.constant dense<0.000000e+00> : vector<8x256xf32>
    %205 = tpu.matmul %201, %204, %cst_106 {dimension_numbers = #tpu.dot_dimension_numbers<[1], [0], [0], [1], [0, 0, 1, 1], [], []>} : vector<8x64xbf16>, vector<64x256xbf16>, vector<8x256xf32> -> vector<8x256xf32>
    %206 = arith.negf %203 : vector<8x256xf32>
    %207 = math.exp %206 : vector<8x256xf32>
    %cst_107 = arith.constant 1.000000e+00 : f32
    %208 = vector.broadcast %cst_107 : f32 to vector<8x256xf32>
    %209 = arith.addf %208, %207 : vector<8x256xf32>
    %210 = arith.divf %208, %209 : vector<8x256xf32>
    %211 = arith.mulf %203, %210 : vector<8x256xf32>
    %212 = arith.mulf %211, %205 : vector<8x256xf32>
    %213 = arith.truncf %212 : vector<8x256xf32> to vector<8x256xbf16>
    %c0_108 = arith.constant 0 : index
    %c0_109 = arith.constant 0 : index
    %214 = vector.load %arg23[%c0_108, %c0_109] : memref<256x64xbf16, #tpu.memory_space<vmem>>, vector<256x64xbf16>
    %cst_110 = arith.constant dense<0.000000e+00> : vector<8x64xf32>
    %215 = tpu.matmul %213, %214, %cst_110 {dimension_numbers = #tpu.dot_dimension_numbers<[1], [0], [0], [1], [0, 0, 1, 1], [], []>} : vector<8x256xbf16>, vector<256x64xbf16>, vector<8x64xf32> -> vector<8x64xf32>
    %216 = arith.addf %187, %215 : vector<8x64xf32>
    %c0_111 = arith.constant 0 : index
    %c0_112 = arith.constant 0 : index
    %217 = vector.load %arg24[%c0_111, %c0_112] : memref<1x64xf32, #tpu.memory_space<vmem>>, vector<1x64xf32>
    %218 = arith.mulf %216, %216 : vector<8x64xf32>
    %cst_113 = arith.constant dense<0.000000e+00> : vector<8xf32>
    %219 = vector.multi_reduction <add>, %218, %cst_113 [1] : vector<8x64xf32> to vector<8xf32>
    %220 = vector.shape_cast %219 : vector<8xf32> to vector<8x1xf32>
    %cst_114 = arith.constant 6.400000e+01 : f32
    %221 = vector.broadcast %cst_114 : f32 to vector<8x1xf32>
    %222 = arith.divf %220, %221 : vector<8x1xf32>
    %cst_115 = arith.constant 9.99999997E-7 : f32
    %223 = vector.broadcast %cst_115 : f32 to vector<8x1xf32>
    %224 = arith.addf %222, %223 : vector<8x1xf32>
    %225 = math.rsqrt %224 : vector<8x1xf32>
    %226 = vector.broadcast %225 : vector<8x1xf32> to vector<8x64xf32>
    %227 = arith.mulf %216, %226 : vector<8x64xf32>
    %228 = vector.broadcast %217 : vector<1x64xf32> to vector<8x64xf32>
    %229 = arith.mulf %227, %228 : vector<8x64xf32>
    %c0_116 = arith.constant 0 : index
    %c0_117 = arith.constant 0 : index
    %c0_118 = arith.constant 0 : index
    %230 = vector.load %arg25[%c0_116, %c0_117, %c0_118] : memref<1x8x64xf32, #tpu.memory_space<vmem>>, vector<1x8x64xf32>
    %231 = vector.shape_cast %230 : vector<1x8x64xf32> to vector<8x64xf32>
    %232 = vector.shape_cast %229 : vector<8x64xf32> to vector<1x8x64xf32>
    tpu.vector_store %arg25[%c0_116, %c0_117, %c0_118], %232 {strides = array<i32>} : memref<1x8x64xf32, #tpu.memory_space<vmem>>, vector<1x8x64xf32>,
    return
  }
  func.func @transform_0(%arg0: i32) -> (i32, i32, i32) {
    %c0_i32 = arith.constant 0 : i32
    %c0_i32_0 = arith.constant 0 : i32
    %c0_i32_1 = arith.constant 0 : i32
    return %arg0, %c0_i32, %c0_i32_0 : i32, i32, i32
  }
  func.func @transform_1(%arg0: i32) -> (i32, i32, i32) {
    %c0_i32 = arith.constant 0 : i32
    %c0_i32_0 = arith.constant 0 : i32
    %c0_i32_1 = arith.constant 0 : i32
    return %arg0, %c0_i32, %c0_i32_0 : i32, i32, i32
  }
  func.func @transform_2(%arg0: i32) -> (i32, i32) {
    %c0_i32 = arith.constant 0 : i32
    %c0_i32_0 = arith.constant 0 : i32
    %c0_i32_1 = arith.constant 0 : i32
    return %c0_i32, %c0_i32_0 : i32, i32
  }
  func.func @transform_3(%arg0: i32) -> (i32, i32) {
    %c0_i32 = arith.constant 0 : i32
    %c0_i32_0 = arith.constant 0 : i32
    %c0_i32_1 = arith.constant 0 : i32
    return %c0_i32, %c0_i32_0 : i32, i32
  }
  func.func @transform_4(%arg0: i32) -> (i32, i32) {
    %c0_i32 = arith.constant 0 : i32
    %c0_i32_0 = arith.constant 0 : i32
    %c0_i32_1 = arith.constant 0 : i32
    return %c0_i32, %c0_i32_0 : i32, i32
  }
  func.func @transform_5(%arg0: i32) -> (i32, i32, i32) {
    %c0_i32 = arith.constant 0 : i32
    %c0_i32_0 = arith.constant 0 : i32
    %c0_i32_1 = arith.constant 0 : i32
    %c0_i32_2 = arith.constant 0 : i32
    return %c0_i32, %c0_i32_0, %c0_i32_1 : i32, i32, i32
  }
  func.func @transform_6(%arg0: i32) -> (i32, i32, i32) {
    %c0_i32 = arith.constant 0 : i32
    %c0_i32_0 = arith.constant 0 : i32
    %c0_i32_1 = arith.constant 0 : i32
    %c0_i32_2 = arith.constant 0 : i32
    return %c0_i32, %c0_i32_0, %c0_i32_1 : i32, i32, i32
  }
  func.func @transform_7(%arg0: i32) -> (i32, i32, i32) {
    %c0_i32 = arith.constant 0 : i32
    %c0_i32_0 = arith.constant 0 : i32
    %c0_i32_1 = arith.constant 0 : i32
    %c0_i32_2 = arith.constant 0 : i32
    return %c0_i32, %c0_i32_0, %c0_i32_1 : i32, i32, i32
  }
  func.func @transform_8(%arg0: i32) -> (i32, i32, i32) {
    %c0_i32 = arith.constant 0 : i32
    %c0_i32_0 = arith.constant 0 : i32
    %c0_i32_1 = arith.constant 0 : i32
    %c0_i32_2 = arith.constant 0 : i32
    return %c0_i32, %c0_i32_0, %c0_i32_1 : i32, i32, i32
  }
  func.func @transform_9(%arg0: i32) -> (i32, i32) {
    %c0_i32 = arith.constant 0 : i32
    %c0_i32_0 = arith.constant 0 : i32
    %c0_i32_1 = arith.constant 0 : i32
    return %c0_i32, %c0_i32_0 : i32, i32
  }
  func.func @transform_10(%arg0: i32) -> (i32, i32) {
    %c0_i32 = arith.constant 0 : i32
    %c0_i32_0 = arith.constant 0 : i32
    %c0_i32_1 = arith.constant 0 : i32
    return %c0_i32, %c0_i32_0 : i32, i32
  }
  func.func @transform_11(%arg0: i32) -> (i32, i32) {
    %c0_i32 = arith.constant 0 : i32
    %c0_i32_0 = arith.constant 0 : i32
    %c0_i32_1 = arith.constant 0 : i32
    return %c0_i32, %c0_i32_0 : i32, i32
  }
  func.func @transform_12(%arg0: i32) -> (i32, i32) {
    %c0_i32 = arith.constant 0 : i32
    %c0_i32_0 = arith.constant 0 : i32
    %c0_i32_1 = arith.constant 0 : i32
    return %c0_i32, %c0_i32_0 : i32, i32
  }
  func.func @transform_13(%arg0: i32) -> (i32, i32) {
    %c0_i32 = arith.constant 0 : i32
    %c0_i32_0 = arith.constant 0 : i32
    %c0_i32_1 = arith.constant 0 : i32
    return %c0_i32, %c0_i32_0 : i32, i32
  }
  func.func @transform_14(%arg0: i32) -> (i32, i32) {
    %c0_i32 = arith.constant 0 : i32
    %c0_i32_0 = arith.constant 0 : i32
    %c0_i32_1 = arith.constant 0 : i32
    return %c0_i32, %c0_i32_0 : i32, i32
  }
  func.func @transform_15(%arg0: i32) -> (i32, i32, i32) {
    %c0_i32 = arith.constant 0 : i32
    %c0_i32_0 = arith.constant 0 : i32
    %c0_i32_1 = arith.constant 0 : i32
    %c0_i32_2 = arith.constant 0 : i32
    return %c0_i32, %c0_i32_0, %c0_i32_1 : i32, i32, i32
  }
  func.func @transform_16(%arg0: i32) -> (i32, i32, i32) {
    %c0_i32 = arith.constant 0 : i32
    %c0_i32_0 = arith.constant 0 : i32
    %c0_i32_1 = arith.constant 0 : i32
    %c0_i32_2 = arith.constant 0 : i32
    return %c0_i32, %c0_i32_0, %c0_i32_1 : i32, i32, i32
  }
  func.func @transform_17(%arg0: i32) -> (i32, i32, i32) {
    %c0_i32 = arith.constant 0 : i32
    %c0_i32_0 = arith.constant 0 : i32
    %c0_i32_1 = arith.constant 0 : i32
    %c0_i32_2 = arith.constant 0 : i32
    return %c0_i32, %c0_i32_0, %c0_i32_1 : i32, i32, i32
  }
  func.func @transform_18(%arg0: i32) -> (i32, i32, i32) {
    %c0_i32 = arith.constant 0 : i32
    %c0_i32_0 = arith.constant 0 : i32
    %c0_i32_1 = arith.constant 0 : i32
    %c0_i32_2 = arith.constant 0 : i32
    return %c0_i32, %c0_i32_0, %c0_i32_1 : i32, i32, i32
  }
  func.func @transform_19(%arg0: i32) -> (i32, i32) {
    %c0_i32 = arith.constant 0 : i32
    %c0_i32_0 = arith.constant 0 : i32
    %c0_i32_1 = arith.constant 0 : i32
    return %c0_i32, %c0_i32_0 : i32, i32
  }
  func.func @transform_20(%arg0: i32) -> (i32, i32) {
    %c0_i32 = arith.constant 0 : i32
    %c0_i32_0 = arith.constant 0 : i32
    %c0_i32_1 = arith.constant 0 : i32
    return %c0_i32, %c0_i32_0 : i32, i32
  }
  func.func @transform_21(%arg0: i32) -> (i32, i32) {
    %c0_i32 = arith.constant 0 : i32
    %c0_i32_0 = arith.constant 0 : i32
    %c0_i32_1 = arith.constant 0 : i32
    return %c0_i32, %c0_i32_0 : i32, i32
  }
  func.func @transform_22(%arg0: i32) -> (i32, i32) {
    %c0_i32 = arith.constant 0 : i32
    %c0_i32_0 = arith.constant 0 : i32
    %c0_i32_1 = arith.constant 0 : i32
    return %c0_i32, %c0_i32_0 : i32, i32
  }
  func.func @transform_23(%arg0: i32) -> (i32, i32) {
    %c0_i32 = arith.constant 0 : i32
    %c0_i32_0 = arith.constant 0 : i32
    %c0_i32_1 = arith.constant 0 : i32
    return %c0_i32, %c0_i32_0 : i32, i32
  }
  func.func @transform_24(%arg0: i32) -> (i32, i32, i32) {
    %c0_i32 = arith.constant 0 : i32
    %c0_i32_0 = arith.constant 0 : i32
    %c0_i32_1 = arith.constant 0 : i32
    return %arg0, %c0_i32, %c0_i32_0 : i32, i32, i32
  }
}

</mosaic_0001>

<llo_original>
// kernel: idefics2_perceiver_resampler.1
$region0: #{idefics2_perceiver_resampler.1}
  #allocation0 [shape = 'u32[]', space=smem, size = 0x4, offset = 0x4, fixed_abs, tag = 'smem constant byte address 0x4 - core index']
  #allocation1 [shape = 'u32[144,128]{1,0:T(1,128)}', space=vmem, size = 0x12000, scoped, tag = 'internal scratch']
  #allocation2 [shape = 'f32[24,64]{1,0:T(8,128)}', space=vmem, size = 0x3000, scoped, tag = 'scratch operand']
  %s0 = inlined_call_operand.vmem [shape: f32[2,16,64], index: 0, kind: input, shape index: {}]
  %s1 = inlined_call_operand.vmem [shape: f32[2,1,24], index: 1, kind: input, shape index: {}]
  %s2 = inlined_call_operand.vmem [shape: f32[8,64], index: 2, kind: input, shape index: {}]
  %s3 = inlined_call_operand.vmem [shape: f32[1,64], index: 3, kind: input, shape index: {}]
  %s4 = inlined_call_operand.vmem [shape: f32[1,64], index: 4, kind: input, shape index: {}]
  %s5 = inlined_call_operand.vmem [shape: bf16[4,64,32], index: 5, kind: input, shape index: {}]
  %s6 = inlined_call_operand.vmem [shape: bf16[2,64,32], index: 6, kind: input, shape index: {}]
  %s7 = inlined_call_operand.vmem [shape: bf16[2,64,32], index: 7, kind: input, shape index: {}]
  %s8 = inlined_call_operand.vmem [shape: bf16[4,32,64], index: 8, kind: input, shape index: {}]
  %s9 = inlined_call_operand.vmem [shape: f32[1,64], index: 9, kind: input, shape index: {}]
  %s10 = inlined_call_operand.vmem [shape: bf16[64,256], index: 10, kind: input, shape index: {}]
  %s11 = inlined_call_operand.vmem [shape: bf16[64,256], index: 11, kind: input, shape index: {}]
  %s12 = inlined_call_operand.vmem [shape: bf16[256,64], index: 12, kind: input, shape index: {}]
  %s13 = inlined_call_operand.vmem [shape: f32[1,64], index: 13, kind: input, shape index: {}]
  %s14 = inlined_call_operand.vmem [shape: f32[1,64], index: 14, kind: input, shape index: {}]
  %s15 = inlined_call_operand.vmem [shape: bf16[4,64,32], index: 15, kind: input, shape index: {}]
  %s16 = inlined_call_operand.vmem [shape: bf16[2,64,32], index: 16, kind: input, shape index: {}]
  %s17 = inlined_call_operand.vmem [shape: bf16[2,64,32], index: 17, kind: input, shape index: {}]
  %s18 = inlined_call_operand.vmem [shape: bf16[4,32,64], index: 18, kind: input, shape index: {}]
  %s19 = inlined_call_operand.vmem [shape: f32[1,64], index: 19, kind: input, shape index: {}]
  %s20 = inlined_call_operand.vmem [shape: bf16[64,256], index: 20, kind: input, shape index: {}]
  %s21 = inlined_call_operand.vmem [shape: bf16[64,256], index: 21, kind: input, shape index: {}]
  %s22 = inlined_call_operand.vmem [shape: bf16[256,64], index: 22, kind: input, shape index: {}]
  %s23 = inlined_call_operand.vmem [shape: f32[1,64], index: 23, kind: input, shape index: {}]
  %s24 = inlined_call_operand.hbm [shape: f32[2,8,64], index: 24, kind: output, shape index: {}]
  %s25 = sld [smem:[#allocation0]]
  $region129: #{idefics2_perceiver_resampler.1} parent=0
    _
  %s27 = ssub.s32 1, %s25
  %s28 = scalar_select 0, %s27, %s25
  $region1: #{idefics2_perceiver_resampler.1} parent=0
    #allocation3 [shape = 'u8[8192]{0}', space=vmem, size = 0x2000, scoped, tag = 'output window, operand 0']
    #allocation4 [shape = 's32[2]{0}', space=sflag, size = 0x8, scoped, tag = 'scoped memory for idefics2_perceiver_resampler.1']
    %29 = vsyncpa [#allocation4], 0
    %s30 = scalar_lea.sflag [#allocation4], 1
    %31 = vsyncpa %s30, 0
    loop: start=0, step=1, limit=4
    $region2: #{idefics2_perceiver_resampler.1} parent=1 // loop_pre_header
      _
    $region3: #{idefics2_perceiver_resampler.1} parent=1 // loop_header
      %s33 = sphi 0, %s37
      %p34 = scmp.ge.s32.totalorder %s33, 4
      %s43 = sphi 0, %s45
      %s46 = sphi 0, %s43
      %s47 = sphi 0, %s46
      %s63 = sphi 0, %s47
      %s69 = sphi 0, %s71
      %s72 = sphi 0, %s69
      %s73 = sphi 0, %s72
      %s89 = sphi 0, %s73
      %s93 = sphi 0, %s93
      %s95 = sphi 0, %s93
      %s96 = sphi 0, %s95
      %s110 = sphi 0, %s96
      %s114 = sphi 0, %s114
      %s116 = sphi 0, %s114
      %s117 = sphi 0, %s116
      %s131 = sphi 0, %s117
      %s135 = sphi 0, %s135
      %s137 = sphi 0, %s135
      %s138 = sphi 0, %s137
      %s152 = sphi 0, %s138
      %s156 = sphi 0, %s156
      %s158 = sphi 0, %s156
      %s159 = sphi 0, %s158
      %s173 = sphi 0, %s159
      %s177 = sphi 0, %s177
      %s179 = sphi 0, %s177
      %s180 = sphi 0, %s179
      %s194 = sphi 0, %s180
      %s198 = sphi 0, %s198
      %s200 = sphi 0, %s198
      %s201 = sphi 0, %s200
      %s215 = sphi 0, %s201
      %s219 = sphi 0, %s219
      %s221 = sphi 0, %s219
      %s222 = sphi 0, %s221
      %s236 = sphi 0, %s222
      %s240 = sphi 0, %s240
      %s242 = sphi 0, %s240
      %s243 = sphi 0, %s242
      %s257 = sphi 0, %s243
      %s261 = sphi 0, %s261
      %s263 = sphi 0, %s261
      %s264 = sphi 0, %s263
      %s278 = sphi 0, %s264
      %s282 = sphi 0, %s282
      %s284 = sphi 0, %s282
      %s285 = sphi 0, %s284
      %s299 = sphi 0, %s285
      %s303 = sphi 0, %s303
      %s305 = sphi 0, %s303
      %s306 = sphi 0, %s305
      %s320 = sphi 0, %s306
      %s324 = sphi 0, %s324
      %s326 = sphi 0, %s324
      %s327 = sphi 0, %s326
      %s341 = sphi 0, %s327
      %s345 = sphi 0, %s345
      %s347 = sphi 0, %s345
      %s348 = sphi 0, %s347
      %s362 = sphi 0, %s348
      %s366 = sphi 0, %s366
      %s368 = sphi 0, %s366
      %s369 = sphi 0, %s368
      %s383 = sphi 0, %s369
      %s387 = sphi 0, %s387
      %s389 = sphi 0, %s387
      %s390 = sphi 0, %s389
      %s404 = sphi 0, %s390
      %s408 = sphi 0, %s408
      %s410 = sphi 0, %s408
      %s411 = sphi 0, %s410
      %s425 = sphi 0, %s411
      %s429 = sphi 0, %s429
      %s431 = sphi 0, %s429
      %s432 = sphi 0, %s431
      %s446 = sphi 0, %s432
      %s450 = sphi 0, %s450
      %s452 = sphi 0, %s450
      %s453 = sphi 0, %s452
      %s467 = sphi 0, %s453
      %s471 = sphi 0, %s471
      %s473 = sphi 0, %s471
      %s474 = sphi 0, %s473
      %s488 = sphi 0, %s474
      %s492 = sphi 0, %s492
      %s494 = sphi 0, %s492
      %s495 = sphi 0, %s494
      %s509 = sphi 0, %s495
      %s513 = sphi 0, %s513
      %s515 = sphi 0, %s513
      %s516 = sphi 0, %s515
      %s530 = sphi 0, %s516
      %s534 = sphi 0, %s534
      %s536 = sphi 0, %s534
      %s537 = sphi 0, %s536
      %s551 = sphi 0, %s537
      %s557 = sphi 0, %s559
      %s560 = sphi 0, %s557
      %s561 = sphi 0, %s560
      %s577 = sphi 0, %s561
    $region4: #{idefics2_perceiver_resampler.1} parent=1 // loop_header_branch
      %36 = sbr.rel (%p34) target = $region8
    $region5: #{idefics2_perceiver_resampler.1} parent=1 // loop_body
      %s38 = ssub.s32 %s33, 1
      %s39 = ssub.s32 %s33, 2
      %s40 = sadd.s32 %s33, 1
      %s41 = ssub.s32 %s33, %s40
      %p42 = scmp.eq.s32.totalorder %s41, 0
      %s44 = sadd.s32 %s43, 1
      %s45 = scalar_select %p42, %s43, %s44
      %p48 = pneg %p42
      %p49 = scmp.eq.s32.totalorder %s33, 1
      %p50 = por %p48, %p49
      %p51 = scmp.ne.s32.totalorder %s43, %s46
      %p52 = scmp.eq.s32.totalorder %s33, 0
      %p53 = por %p51, %p52
      %p54 = scmp.ne.s32.totalorder %s43, %s46
      %p55 = scmp.eq.s32.totalorder %s38, 1
      %p56 = por %p54, %p55
      %p57 = scmp.ne.s32.totalorder %s46, %s47
      %p58 = scmp.eq.s32.totalorder %s38, 0
      %p59 = por %p57, %p58
      %p60 = scmp.ne.s32.totalorder %s46, %s47
      %p61 = scmp.eq.s32.totalorder %s39, 1
      %p62 = por %p60, %p61
      %p64 = scmp.ne.s32.totalorder %s47, %s63
      %p65 = scmp.eq.s32.totalorder %s39, 0
      %p66 = por %p64, %p65
      %s67 = ssub.s32 %s33, %s40
      %p68 = scmp.eq.s32.totalorder %s67, 0
      %s70 = sadd.s32 %s69, 1
      %s71 = scalar_select %p68, %s69, %s70
      %p74 = pneg %p68
      %p75 = scmp.eq.s32.totalorder %s33, 1
      %p76 = por %p74, %p75
      %p77 = scmp.ne.s32.totalorder %s69, %s72
      %p78 = scmp.eq.s32.totalorder %s33, 0
      %p79 = por %p77, %p78
      %p80 = scmp.ne.s32.totalorder %s69, %s72
      %p81 = scmp.eq.s32.totalorder %s38, 1
      %p82 = por %p80, %p81
      %p83 = scmp.ne.s32.totalorder %s72, %s73
      %p84 = scmp.eq.s32.totalorder %s38, 0
      %p85 = por %p83, %p84
      %p86 = scmp.ne.s32.totalorder %s72, %s73
      %p87 = scmp.eq.s32.totalorder %s39, 1
      %p88 = por %p86, %p87
      %p90 = scmp.ne.s32.totalorder %s73, %s89
      %p91 = scmp.eq.s32.totalorder %s39, 0
      %p92 = por %p90, %p91
      %s94 = sadd.s32 %s93, 1
      %p97 = scmp.eq.s32.totalorder %s33, 1
      %p98 = scmp.ne.s32.totalorder %s93, %s95
      %p99 = scmp.eq.s32.totalorder %s33, 0
      %p100 = por %p98, %p99
      %p101 = scmp.ne.s32.totalorder %s93, %s95
      %p102 = scmp.eq.s32.totalorder %s38, 1
      %p103 = por %p101, %p102
      %p104 = scmp.ne.s32.totalorder %s95, %s96
      %p105 = scmp.eq.s32.totalorder %s38, 0
      %p106 = por %p104, %p105
      %p107 = scmp.ne.s32.totalorder %s95, %s96
      %p108 = scmp.eq.s32.totalorder %s39, 1
      %p109 = por %p107, %p108
      %p111 = scmp.ne.s32.totalorder %s96, %s110
      %p112 = scmp.eq.s32.totalorder %s39, 0
      %p113 = por %p111, %p112
      %s115 = sadd.s32 %s114, 1
      %p118 = scmp.eq.s32.totalorder %s33, 1
      %p119 = scmp.ne.s32.totalorder %s114, %s116
      %p120 = scmp.eq.s32.totalorder %s33, 0
      %p121 = por %p119, %p120
      %p122 = scmp.ne.s32.totalorder %s114, %s116
      %p123 = scmp.eq.s32.totalorder %s38, 1
      %p124 = por %p122, %p123
      %p125 = scmp.ne.s32.totalorder %s116, %s117
      %p126 = scmp.eq.s32.totalorder %s38, 0
      %p127 = por %p125, %p126
      %p128 = scmp.ne.s32.totalorder %s116, %s117
      %p129 = scmp.eq.s32.totalorder %s39, 1
      %p130 = por %p128, %p129
      %p132 = scmp.ne.s32.totalorder %s117, %s131
      %p133 = scmp.eq.s32.totalorder %s39, 0
      %p134 = por %p132, %p133
      %s136 = sadd.s32 %s135, 1
      %p139 = scmp.eq.s32.totalorder %s33, 1
      %p140 = scmp.ne.s32.totalorder %s135, %s137
      %p141 = scmp.eq.s32.totalorder %s33, 0
      %p142 = por %p140, %p141
      %p143 = scmp.ne.s32.totalorder %s135, %s137
      %p144 = scmp.eq.s32.totalorder %s38, 1
      %p145 = por %p143, %p144
      %p146 = scmp.ne.s32.totalorder %s137, %s138
      %p147 = scmp.eq.s32.totalorder %s38, 0
      %p148 = por %p146, %p147
      %p149 = scmp.ne.s32.totalorder %s137, %s138
      %p150 = scmp.eq.s32.totalorder %s39, 1
      %p151 = por %p149, %p150
      %p153 = scmp.ne.s32.totalorder %s138, %s152
      %p154 = scmp.eq.s32.totalorder %s39, 0
      %p155 = por %p153, %p154
      %s157 = sadd.s32 %s156, 1
      %p160 = scmp.eq.s32.totalorder %s33, 1
      %p161 = scmp.ne.s32.totalorder %s156, %s158
      %p162 = scmp.eq.s32.totalorder %s33, 0
      %p163 = por %p161, %p162
      %p164 = scmp.ne.s32.totalorder %s156, %s158
      %p165 = scmp.eq.s32.totalorder %s38, 1
      %p166 = por %p164, %p165
      %p167 = scmp.ne.s32.totalorder %s158, %s159
      %p168 = scmp.eq.s32.totalorder %s38, 0
      %p169 = por %p167, %p168
      %p170 = scmp.ne.s32.totalorder %s158, %s159
      %p171 = scmp.eq.s32.totalorder %s39, 1
      %p172 = por %p170, %p171
      %p174 = scmp.ne.s32.totalorder %s159, %s173
      %p175 = scmp.eq.s32.totalorder %s39, 0
      %p176 = por %p174, %p175
      %s178 = sadd.s32 %s177, 1
      %p181 = scmp.eq.s32.totalorder %s33, 1
      %p182 = scmp.ne.s32.totalorder %s177, %s179
      %p183 = scmp.eq.s32.totalorder %s33, 0
      %p184 = por %p182, %p183
      %p185 = scmp.ne.s32.totalorder %s177, %s179
      %p186 = scmp.eq.s32.totalorder %s38, 1
      %p187 = por %p185, %p186
      %p188 = scmp.ne.s32.totalorder %s179, %s180
      %p189 = scmp.eq.s32.totalorder %s38, 0
      %p190 = por %p188, %p189
      %p191 = scmp.ne.s32.totalorder %s179, %s180
      %p192 = scmp.eq.s32.totalorder %s39, 1
      %p193 = por %p191, %p192
      %p195 = scmp.ne.s32.totalorder %s180, %s194
      %p196 = scmp.eq.s32.totalorder %s39, 0
      %p197 = por %p195, %p196
      %s199 = sadd.s32 %s198, 1
      %p202 = scmp.eq.s32.totalorder %s33, 1
      %p203 = scmp.ne.s32.totalorder %s198, %s200
      %p204 = scmp.eq.s32.totalorder %s33, 0
      %p205 = por %p203, %p204
      %p206 = scmp.ne.s32.totalorder %s198, %s200
      %p207 = scmp.eq.s32.totalorder %s38, 1
      %p208 = por %p206, %p207
      %p209 = scmp.ne.s32.totalorder %s200, %s201
      %p210 = scmp.eq.s32.totalorder %s38, 0
      %p211 = por %p209, %p210
      %p212 = scmp.ne.s32.totalorder %s200, %s201
      %p213 = scmp.eq.s32.totalorder %s39, 1
      %p214 = por %p212, %p213
      %p216 = scmp.ne.s32.totalorder %s201, %s215
      %p217 = scmp.eq.s32.totalorder %s39, 0
      %p218 = por %p216, %p217
      %s220 = sadd.s32 %s219, 1
      %p223 = scmp.eq.s32.totalorder %s33, 1
      %p224 = scmp.ne.s32.totalorder %s219, %s221
      %p225 = scmp.eq.s32.totalorder %s33, 0
      %p226 = por %p224, %p225
      %p227 = scmp.ne.s32.totalorder %s219, %s221
      %p228 = scmp.eq.s32.totalorder %s38, 1
      %p229 = por %p227, %p228
      %p230 = scmp.ne.s32.totalorder %s221, %s222
      %p231 = scmp.eq.s32.totalorder %s38, 0
      %p232 = por %p230, %p231
      %p233 = scmp.ne.s32.totalorder %s221, %s222
      %p234 = scmp.eq.s32.totalorder %s39, 1
      %p235 = por %p233, %p234
      %p237 = scmp.ne.s32.totalorder %s222, %s236
      %p238 = scmp.eq.s32.totalorder %s39, 0
      %p239 = por %p237, %p238
      %s241 = sadd.s32 %s240, 1
      %p244 = scmp.eq.s32.totalorder %s33, 1
      %p245 = scmp.ne.s32.totalorder %s240, %s242
      %p246 = scmp.eq.s32.totalorder %s33, 0
      %p247 = por %p245, %p246
      %p248 = scmp.ne.s32.totalorder %s240, %s242
      %p249 = scmp.eq.s32.totalorder %s38, 1
      %p250 = por %p248, %p249
      %p251 = scmp.ne.s32.totalorder %s242, %s243
      %p252 = scmp.eq.s32.totalorder %s38, 0
      %p253 = por %p251, %p252
      %p254 = scmp.ne.s32.totalorder %s242, %s243
      %p255 = scmp.eq.s32.totalorder %s39, 1
      %p256 = por %p254, %p255
      %p258 = scmp.ne.s32.totalorder %s243, %s257
      %p259 = scmp.eq.s32.totalorder %s39, 0
      %p260 = por %p258, %p259
      %s262 = sadd.s32 %s261, 1
      %p265 = scmp.eq.s32.totalorder %s33, 1
      %p266 = scmp.ne.s32.totalorder %s261, %s263
      %p267 = scmp.eq.s32.totalorder %s33, 0
      %p268 = por %p266, %p267
      %p269 = scmp.ne.s32.totalorder %s261, %s263
      %p270 = scmp.eq.s32.totalorder %s38, 1
      %p271 = por %p269, %p270
      %p272 = scmp.ne.s32.totalorder %s263, %s264
      %p273 = scmp.eq.s32.totalorder %s38, 0
      %p274 = por %p272, %p273
      %p275 = scmp.ne.s32.totalorder %s263, %s264
      %p276 = scmp.eq.s32.totalorder %s39, 1
      %p277 = por %p275, %p276
      %p279 = scmp.ne.s32.totalorder %s264, %s278
      %p280 = scmp.eq.s32.totalorder %s39, 0
      %p281 = por %p279, %p280
      %s283 = sadd.s32 %s282, 1
      %p286 = scmp.eq.s32.totalorder %s33, 1
      %p287 = scmp.ne.s32.totalorder %s282, %s284
      %p288 = scmp.eq.s32.totalorder %s33, 0
      %p289 = por %p287, %p288
      %p290 = scmp.ne.s32.totalorder %s282, %s284
      %p291 = scmp.eq.s32.totalorder %s38, 1
      %p292 = por %p290, %p291
      %p293 = scmp.ne.s32.totalorder %s284, %s285
      %p294 = scmp.eq.s32.totalorder %s38, 0
      %p295 = por %p293, %p294
      %p296 = scmp.ne.s32.totalorder %s284, %s285
      %p297 = scmp.eq.s32.totalorder %s39, 1
      %p298 = por %p296, %p297
      %p300 = scmp.ne.s32.totalorder %s285, %s299
      %p301 = scmp.eq.s32.totalorder %s39, 0
      %p302 = por %p300, %p301
      %s304 = sadd.s32 %s303, 1
      %p307 = scmp.eq.s32.totalorder %s33, 1
      %p308 = scmp.ne.s32.totalorder %s303, %s305
      %p309 = scmp.eq.s32.totalorder %s33, 0
      %p310 = por %p308, %p309
      %p311 = scmp.ne.s32.totalorder %s303, %s305
      %p312 = scmp.eq.s32.totalorder %s38, 1
      %p313 = por %p311, %p312
      %p314 = scmp.ne.s32.totalorder %s305, %s306
      %p315 = scmp.eq.s32.totalorder %s38, 0
      %p316 = por %p314, %p315
      %p317 = scmp.ne.s32.totalorder %s305, %s306
      %p318 = scmp.eq.s32.totalorder %s39, 1
      %p319 = por %p317, %p318
      %p321 = scmp.ne.s32.totalorder %s306, %s320
      %p322 = scmp.eq.s32.totalorder %s39, 0
      %p323 = por %p321, %p322
      %s325 = sadd.s32 %s324, 1
      %p328 = scmp.eq.s32.totalorder %s33, 1
      %p329 = scmp.ne.s32.totalorder %s324, %s326
      %p330 = scmp.eq.s32.totalorder %s33, 0
      %p331 = por %p329, %p330
      %p332 = scmp.ne.s32.totalorder %s324, %s326
      %p333 = scmp.eq.s32.totalorder %s38, 1
      %p334 = por %p332, %p333
      %p335 = scmp.ne.s32.totalorder %s326, %s327
      %p336 = scmp.eq.s32.totalorder %s38, 0
      %p337 = por %p335, %p336
      %p338 = scmp.ne.s32.totalorder %s326, %s327
      %p339 = scmp.eq.s32.totalorder %s39, 1
      %p340 = por %p338, %p339
      %p342 = scmp.ne.s32.totalorder %s327, %s341
      %p343 = scmp.eq.s32.totalorder %s39, 0
      %p344 = por %p342, %p343
      %s346 = sadd.s32 %s345, 1
      %p349 = scmp.eq.s32.totalorder %s33, 1
      %p350 = scmp.ne.s32.totalorder %s345, %s347
      %p351 = scmp.eq.s32.totalorder %s33, 0
      %p352 = por %p350, %p351
      %p353 = scmp.ne.s32.totalorder %s345, %s347
      %p354 = scmp.eq.s32.totalorder %s38, 1
      %p355 = por %p353, %p354
      %p356 = scmp.ne.s32.totalorder %s347, %s348
      %p357 = scmp.eq.s32.totalorder %s38, 0
      %p358 = por %p356, %p357
      %p359 = scmp.ne.s32.totalorder %s347, %s348
      %p360 = scmp.eq.s32.totalorder %s39, 1
      %p361 = por %p359, %p360
      %p363 = scmp.ne.s32.totalorder %s348, %s362
      %p364 = scmp.eq.s32.totalorder %s39, 0
      %p365 = por %p363, %p364
      %s367 = sadd.s32 %s366, 1
      %p370 = scmp.eq.s32.totalorder %s33, 1
      %p371 = scmp.ne.s32.totalorder %s366, %s368
      %p372 = scmp.eq.s32.totalorder %s33, 0
      %p373 = por %p371, %p372
      %p374 = scmp.ne.s32.totalorder %s366, %s368
      %p375 = scmp.eq.s32.totalorder %s38, 1
      %p376 = por %p374, %p375
      %p377 = scmp.ne.s32.totalorder %s368, %s369
      %p378 = scmp.eq.s32.totalorder %s38, 0
      %p379 = por %p377, %p378
      %p380 = scmp.ne.s32.totalorder %s368, %s369
      %p381 = scmp.eq.s32.totalorder %s39, 1
      %p382 = por %p380, %p381
      %p384 = scmp.ne.s32.totalorder %s369, %s383
      %p385 = scmp.eq.s32.totalorder %s39, 0
      %p386 = por %p384, %p385
      %s388 = sadd.s32 %s387, 1
      %p391 = scmp.eq.s32.totalorder %s33, 1
      %p392 = scmp.ne.s32.totalorder %s387, %s389
      %p393 = scmp.eq.s32.totalorder %s33, 0
      %p394 = por %p392, %p393
      %p395 = scmp.ne.s32.totalorder %s387, %s389
      %p396 = scmp.eq.s32.totalorder %s38, 1
      %p397 = por %p395, %p396
      %p398 = scmp.ne.s32.totalorder %s389, %s390
      %p399 = scmp.eq.s32.totalorder %s38, 0
      %p400 = por %p398, %p399
      %p401 = scmp.ne.s32.totalorder %s389, %s390
      %p402 = scmp.eq.s32.totalorder %s39, 1
      %p403 = por %p401, %p402
      %p405 = scmp.ne.s32.totalorder %s390, %s404
      %p406 = scmp.eq.s32.totalorder %s39, 0
      %p407 = por %p405, %p406
      %s409 = sadd.s32 %s408, 1
      %p412 = scmp.eq.s32.totalorder %s33, 1
      %p413 = scmp.ne.s32.totalorder %s408, %s410
      %p414 = scmp.eq.s32.totalorder %s33, 0
      %p415 = por %p413, %p414
      %p416 = scmp.ne.s32.totalorder %s408, %s410
      %p417 = scmp.eq.s32.totalorder %s38, 1
      %p418 = por %p416, %p417
      %p419 = scmp.ne.s32.totalorder %s410, %s411
      %p420 = scmp.eq.s32.totalorder %s38, 0
      %p421 = por %p419, %p420
      %p422 = scmp.ne.s32.totalorder %s410, %s411
      %p423 = scmp.eq.s32.totalorder %s39, 1
      %p424 = por %p422, %p423
      %p426 = scmp.ne.s32.totalorder %s411, %s425
      %p427 = scmp.eq.s32.totalorder %s39, 0
      %p428 = por %p426, %p427
      %s430 = sadd.s32 %s429, 1
      %p433 = scmp.eq.s32.totalorder %s33, 1
      %p434 = scmp.ne.s32.totalorder %s429, %s431
      %p435 = scmp.eq.s32.totalorder %s33, 0
      %p436 = por %p434, %p435
      %p437 = scmp.ne.s32.totalorder %s429, %s431
      %p438 = scmp.eq.s32.totalorder %s38, 1
      %p439 = por %p437, %p438
      %p440 = scmp.ne.s32.totalorder %s431, %s432
      %p441 = scmp.eq.s32.totalorder %s38, 0
      %p442 = por %p440, %p441
      %p443 = scmp.ne.s32.totalorder %s431, %s432
      %p444 = scmp.eq.s32.totalorder %s39, 1
      %p445 = por %p443, %p444
      %p447 = scmp.ne.s32.totalorder %s432, %s446
      %p448 = scmp.eq.s32.totalorder %s39, 0
      %p449 = por %p447, %p448
      %s451 = sadd.s32 %s450, 1
      %p454 = scmp.eq.s32.totalorder %s33, 1
      %p455 = scmp.ne.s32.totalorder %s450, %s452
      %p456 = scmp.eq.s32.totalorder %s33, 0
      %p457 = por %p455, %p456
      %p458 = scmp.ne.s32.totalorder %s450, %s452
      %p459 = scmp.eq.s32.totalorder %s38, 1
      %p460 = por %p458, %p459
      %p461 = scmp.ne.s32.totalorder %s452, %s453
      %p462 = scmp.eq.s32.totalorder %s38, 0
      %p463 = por %p461, %p462
      %p464 = scmp.ne.s32.totalorder %s452, %s453
      %p465 = scmp.eq.s32.totalorder %s39, 1
      %p466 = por %p464, %p465
      %p468 = scmp.ne.s32.totalorder %s453, %s467
      %p469 = scmp.eq.s32.totalorder %s39, 0
      %p470 = por %p468, %p469
      %s472 = sadd.s32 %s471, 1
      %p475 = scmp.eq.s32.totalorder %s33, 1
      %p476 = scmp.ne.s32.totalorder %s471, %s473
      %p477 = scmp.eq.s32.totalorder %s33, 0
      %p478 = por %p476, %p477
      %p479 = scmp.ne.s32.totalorder %s471, %s473
      %p480 = scmp.eq.s32.totalorder %s38, 1
      %p481 = por %p479, %p480
      %p482 = scmp.ne.s32.totalorder %s473, %s474
      %p483 = scmp.eq.s32.totalorder %s38, 0
      %p484 = por %p482, %p483
      %p485 = scmp.ne.s32.totalorder %s473, %s474
      %p486 = scmp.eq.s32.totalorder %s39, 1
      %p487 = por %p485, %p486
      %p489 = scmp.ne.s32.totalorder %s474, %s488
      %p490 = scmp.eq.s32.totalorder %s39, 0
      %p491 = por %p489, %p490
      %s493 = sadd.s32 %s492, 1
      %p496 = scmp.eq.s32.totalorder %s33, 1
      %p497 = scmp.ne.s32.totalorder %s492, %s494
      %p498 = scmp.eq.s32.totalorder %s33, 0
      %p499 = por %p497, %p498
      %p500 = scmp.ne.s32.totalorder %s492, %s494
      %p501 = scmp.eq.s32.totalorder %s38, 1
      %p502 = por %p500, %p501
      %p503 = scmp.ne.s32.totalorder %s494, %s495
      %p504 = scmp.eq.s32.totalorder %s38, 0
      %p505 = por %p503, %p504
      %p506 = scmp.ne.s32.totalorder %s494, %s495
      %p507 = scmp.eq.s32.totalorder %s39, 1
      %p508 = por %p506, %p507
      %p510 = scmp.ne.s32.totalorder %s495, %s509
      %p511 = scmp.eq.s32.totalorder %s39, 0
      %p512 = por %p510, %p511
      %s514 = sadd.s32 %s513, 1
      %p517 = scmp.eq.s32.totalorder %s33, 1
      %p518 = scmp.ne.s32.totalorder %s513, %s515
      %p519 = scmp.eq.s32.totalorder %s33, 0
      %p520 = por %p518, %p519
      %p521 = scmp.ne.s32.totalorder %s513, %s515
      %p522 = scmp.eq.s32.totalorder %s38, 1
      %p523 = por %p521, %p522
      %p524 = scmp.ne.s32.totalorder %s515, %s516
      %p525 = scmp.eq.s32.totalorder %s38, 0
      %p526 = por %p524, %p525
      %p527 = scmp.ne.s32.totalorder %s515, %s516
      %p528 = scmp.eq.s32.totalorder %s39, 1
      %p529 = por %p527, %p528
      %p531 = scmp.ne.s32.totalorder %s516, %s530
      %p532 = scmp.eq.s32.totalorder %s39, 0
      %p533 = por %p531, %p532
      %s535 = sadd.s32 %s534, 1
      %p538 = scmp.eq.s32.totalorder %s33, 1
      %p539 = scmp.ne.s32.totalorder %s534, %s536
      %p540 = scmp.eq.s32.totalorder %s33, 0
      %p541 = por %p539, %p540
      %p542 = scmp.ne.s32.totalorder %s534, %s536
      %p543 = scmp.eq.s32.totalorder %s38, 1
      %p544 = por %p542, %p543
      %p545 = scmp.ne.s32.totalorder %s536, %s537
      %p546 = scmp.eq.s32.totalorder %s38, 0
      %p547 = por %p545, %p546
      %p548 = scmp.ne.s32.totalorder %s536, %s537
      %p549 = scmp.eq.s32.totalorder %s39, 1
      %p550 = por %p548, %p549
      %p552 = scmp.ne.s32.totalorder %s537, %s551
      %p553 = scmp.eq.s32.totalorder %s39, 0
      %p554 = por %p552, %p553
      %s555 = ssub.s32 %s33, %s40
      %p556 = scmp.eq.s32.totalorder %s555, 0
      %s558 = sadd.s32 %s557, 1
      %s559 = scalar_select %p556, %s557, %s558
      %p562 = pneg %p556
      %p563 = scmp.eq.s32.totalorder %s33, 1
      %p564 = por %p562, %p563
      %p565 = scmp.ne.s32.totalorder %s557, %s560
      %p566 = scmp.eq.s32.totalorder %s33, 0
      %p567 = por %p565, %p566
      %p568 = scmp.ne.s32.totalorder %s557, %s560
      %p569 = scmp.eq.s32.totalorder %s38, 1
      %p570 = por %p568, %p569
      %p571 = scmp.ne.s32.totalorder %s560, %s561
      %p572 = scmp.eq.s32.totalorder %s38, 0
      %p573 = por %p571, %p572
      %p574 = scmp.ne.s32.totalorder %s560, %s561
      %p575 = scmp.eq.s32.totalorder %s39, 1
      %p576 = por %p574, %p575
      %p578 = scmp.ne.s32.totalorder %s561, %s577
      %p579 = scmp.eq.s32.totalorder %s39, 0
      %p580 = por %p578, %p579
      %p581 = scmp.le.s32.totalorder 1, %s33
      %p582 = scmp.lt.s32.totalorder %s33, 3
      %p583 = pnand %p581, %p582
      %p584 = pneg %p583
      // Predicated region
      $region9: #{idefics2_perceiver_resampler.1} parent=5 // pred_check
        _
      $region10: #{idefics2_perceiver_resampler.1} parent=5 // pred_check_branch
        %586 = sbr.rel (%p583) target = $region12
      $region11: #{idefics2_perceiver_resampler.1} parent=5 // pred_region
        %s587 = ssub.s32 %s33, 1
        // Predicated region
        $region13: #{idefics2_perceiver_resampler.1} parent=11 // pred_check
          %p588 = pneg %p106
        $region14: #{idefics2_perceiver_resampler.1} parent=11 // pred_check_branch
          %590 = sbr.rel (%p588) target = $region16
        $region15: #{idefics2_perceiver_resampler.1} parent=11 // pred_region
          _
        $region16: #{idefics2_perceiver_resampler.1} parent=11 // pred_fallthru
          _
        // Predicated region
        $region17: #{idefics2_perceiver_resampler.1} parent=11 // pred_check
          %p591 = pneg %p127
        $region18: #{idefics2_perceiver_resampler.1} parent=11 // pred_check_branch
          %593 = sbr.rel (%p591) target = $region20
        $region19: #{idefics2_perceiver_resampler.1} parent=11 // pred_region
          _
        $region20: #{idefics2_perceiver_resampler.1} parent=11 // pred_fallthru
          _
        // Predicated region
        $region21: #{idefics2_perceiver_resampler.1} parent=11 // pred_check
          %p594 = pneg %p148
        $region22: #{idefics2_perceiver_resampler.1} parent=11 // pred_check_branch
          %596 = sbr.rel (%p594) target = $region24
        $region23: #{idefics2_perceiver_resampler.1} parent=11 // pred_region
          _
        $region24: #{idefics2_perceiver_resampler.1} parent=11 // pred_fallthru
          _
        // Predicated region
        $region25: #{idefics2_perceiver_resampler.1} parent=11 // pred_check
          %p597 = pneg %p169
        $region26: #{idefics2_perceiver_resampler.1} parent=11 // pred_check_branch
          %599 = sbr.rel (%p597) target = $region28
        $region27: #{idefics2_perceiver_resampler.1} parent=11 // pred_region
          _
        $region28: #{idefics2_perceiver_resampler.1} parent=11 // pred_fallthru
          _
        // Predicated region
        $region29: #{idefics2_perceiver_resampler.1} parent=11 // pred_check
          %p600 = pneg %p190
        $region30: #{idefics2_perceiver_resampler.1} parent=11 // pred_check_branch
          %602 = sbr.rel (%p600) target = $region32
        $region31: #{idefics2_perceiver_resampler.1} parent=11 // pred_region
          _
        $region32: #{idefics2_perceiver_resampler.1} parent=11 // pred_fallthru
          _
        // Predicated region
        $region33: #{idefics2_perceiver_resampler.1} parent=11 // pred_check
          %p603 = pneg %p211
        $region34: #{idefics2_perceiver_resampler.1} parent=11 // pred_check_branch
          %605 = sbr.rel (%p603) target = $region36
        $region35: #{idefics2_perceiver_resampler.1} parent=11 // pred_region
          _
        $region36: #{idefics2_perceiver_resampler.1} parent=11 // pred_fallthru
          _
        // Predicated region
        $region37: #{idefics2_perceiver_resampler.1} parent=11 // pred_check
          %p606 = pneg %p232
        $region38: #{idefics2_perceiver_resampler.1} parent=11 // pred_check_branch
          %608 = sbr.rel (%p606) target = $region40
        $region39: #{idefics2_perceiver_resampler.1} parent=11 // pred_region
          _
        $region40: #{idefics2_perceiver_resampler.1} parent=11 // pred_fallthru
          _
        // Predicated region
        $region41: #{idefics2_perceiver_resampler.1} parent=11 // pred_check
          %p609 = pneg %p253
        $region42: #{idefics2_perceiver_resampler.1} parent=11 // pred_check_branch
          %611 = sbr.rel (%p609) target = $region44
        $region43: #{idefics2_perceiver_resampler.1} parent=11 // pred_region
          _
        $region44: #{idefics2_perceiver_resampler.1} parent=11 // pred_fallthru
          _
        // Predicated region
        $region45: #{idefics2_perceiver_resampler.1} parent=11 // pred_check
          %p612 = pneg %p274
        $region46: #{idefics2_perceiver_resampler.1} parent=11 // pred_check_branch
          %614 = sbr.rel (%p612) target = $region48
        $region47: #{idefics2_perceiver_resampler.1} parent=11 // pred_region
          _
        $region48: #{idefics2_perceiver_resampler.1} parent=11 // pred_fallthru
          _
        // Predicated region
        $region49: #{idefics2_perceiver_resampler.1} parent=11 // pred_check
          %p615 = pneg %p295
        $region50: #{idefics2_perceiver_resampler.1} parent=11 // pred_check_branch
          %617 = sbr.rel (%p615) target = $region52
        $region51: #{idefics2_perceiver_resampler.1} parent=11 // pred_region
          _
        $region52: #{idefics2_perceiver_resampler.1} parent=11 // pred_fallthru
          _
        // Predicated region
        $region53: #{idefics2_perceiver_resampler.1} parent=11 // pred_check
          %p618 = pneg %p316
        $region54: #{idefics2_perceiver_resampler.1} parent=11 // pred_check_branch
          %620 = sbr.rel (%p618) target = $region56
        $region55: #{idefics2_perceiver_resampler.1} parent=11 // pred_region
          _
        $region56: #{idefics2_perceiver_resampler.1} parent=11 // pred_fallthru
          _
        // Predicated region
        $region57: #{idefics2_perceiver_resampler.1} parent=11 // pred_check
          %p621 = pneg %p337
        $region58: #{idefics2_perceiver_resampler.1} parent=11 // pred_check_branch
          %623 = sbr.rel (%p621) target = $region60
        $region59: #{idefics2_perceiver_resampler.1} parent=11 // pred_region
          _
        $region60: #{idefics2_perceiver_resampler.1} parent=11 // pred_fallthru
          _
        // Predicated region
        $region61: #{idefics2_perceiver_resampler.1} parent=11 // pred_check
          %p624 = pneg %p358
        $region62: #{idefics2_perceiver_resampler.1} parent=11 // pred_check_branch
          %626 = sbr.rel (%p624) target = $region64
        $region63: #{idefics2_perceiver_resampler.1} parent=11 // pred_region
          _
        $region64: #{idefics2_perceiver_resampler.1} parent=11 // pred_fallthru
          _
        // Predicated region
        $region65: #{idefics2_perceiver_resampler.1} parent=11 // pred_check
          %p627 = pneg %p379
        $region66: #{idefics2_perceiver_resampler.1} parent=11 // pred_check_branch
          %629 = sbr.rel (%p627) target = $region68
        $region67: #{idefics2_perceiver_resampler.1} parent=11 // pred_region
          _
        $region68: #{idefics2_perceiver_resampler.1} parent=11 // pred_fallthru
          _
        // Predicated region
        $region69: #{idefics2_perceiver_resampler.1} parent=11 // pred_check
          %p630 = pneg %p400
        $region70: #{idefics2_perceiver_resampler.1} parent=11 // pred_check_branch
          %632 = sbr.rel (%p630) target = $region72
        $region71: #{idefics2_perceiver_resampler.1} parent=11 // pred_region
          _
        $region72: #{idefics2_perceiver_resampler.1} parent=11 // pred_fallthru
          _
        // Predicated region
        $region73: #{idefics2_perceiver_resampler.1} parent=11 // pred_check
          %p633 = pneg %p421
        $region74: #{idefics2_perceiver_resampler.1} parent=11 // pred_check_branch
          %635 = sbr.rel (%p633) target = $region76
        $region75: #{idefics2_perceiver_resampler.1} parent=11 // pred_region
          _
        $region76: #{idefics2_perceiver_resampler.1} parent=11 // pred_fallthru
          _
        // Predicated region
        $region77: #{idefics2_perceiver_resampler.1} parent=11 // pred_check
          %p636 = pneg %p442
        $region78: #{idefics2_perceiver_resampler.1} parent=11 // pred_check_branch
          %638 = sbr.rel (%p636) target = $region80
        $region79: #{idefics2_perceiver_resampler.1} parent=11 // pred_region
          _
        $region80: #{idefics2_perceiver_resampler.1} parent=11 // pred_fallthru
          _
        // Predicated region
        $region81: #{idefics2_perceiver_resampler.1} parent=11 // pred_check
          %p639 = pneg %p463
        $region82: #{idefics2_perceiver_resampler.1} parent=11 // pred_check_branch
          %641 = sbr.rel (%p639) target = $region84
        $region83: #{idefics2_perceiver_resampler.1} parent=11 // pred_region
          _
        $region84: #{idefics2_perceiver_resampler.1} parent=11 // pred_fallthru
          _
        // Predicated region
        $region85: #{idefics2_perceiver_resampler.1} parent=11 // pred_check
          %p642 = pneg %p484
        $region86: #{idefics2_perceiver_resampler.1} parent=11 // pred_check_branch
          %644 = sbr.rel (%p642) target = $region88
        $region87: #{idefics2_perceiver_resampler.1} parent=11 // pred_region
          _
        $region88: #{idefics2_perceiver_resampler.1} parent=11 // pred_fallthru
          _
        // Predicated region
        $region89: #{idefics2_perceiver_resampler.1} parent=11 // pred_check
          %p645 = pneg %p505
        $region90: #{idefics2_perceiver_resampler.1} parent=11 // pred_check_branch
          %647 = sbr.rel (%p645) target = $region92
        $region91: #{idefics2_perceiver_resampler.1} parent=11 // pred_region
          _
        $region92: #{idefics2_perceiver_resampler.1} parent=11 // pred_fallthru
          _
        // Predicated region
        $region93: #{idefics2_perceiver_resampler.1} parent=11 // pred_check
          %p648 = pneg %p526
        $region94: #{idefics2_perceiver_resampler.1} parent=11 // pred_check_branch
          %650 = sbr.rel (%p648) target = $region96
        $region95: #{idefics2_perceiver_resampler.1} parent=11 // pred_region
          _
        $region96: #{idefics2_perceiver_resampler.1} parent=11 // pred_fallthru
          _
        // Predicated region
        $region97: #{idefics2_perceiver_resampler.1} parent=11 // pred_check
          %p651 = pneg %p547
        $region98: #{idefics2_perceiver_resampler.1} parent=11 // pred_check_branch
          %653 = sbr.rel (%p651) target = $region100
        $region99: #{idefics2_perceiver_resampler.1} parent=11 // pred_region
          _
        $region100: #{idefics2_perceiver_resampler.1} parent=11 // pred_fallthru
          _
      $region12: #{idefics2_perceiver_resampler.1} parent=5 // pred_fallthru
        _
      %p654 = scmp.lt.s32.totalorder %s33, 2
      // Predicated region
      $region101: #{idefics2_perceiver_resampler.1} parent=5 // pred_check
        %p655 = pneg %p654
      $region102: #{idefics2_perceiver_resampler.1} parent=5 // pred_check_branch
        %657 = sbr.rel (%p655) target = $region104
      $region103: #{idefics2_perceiver_resampler.1} parent=5 // pred_region
        // Predicated region
        $region105: #{idefics2_perceiver_resampler.1} parent=103 // pred_check
          %p658 = pneg %p53
        $region106: #{idefics2_perceiver_resampler.1} parent=103 // pred_check_branch
          %660 = sbr.rel (%p658) target = $region108
        $region107: #{idefics2_perceiver_resampler.1} parent=103 // pred_region
          %p661 = scmp.lt.s32.totalorder %s33, 1
          %s662 = scalar_select %p661, %s33, 1
          %s663 = smul.addr %s662, 2
          %s664 = smul.addr %s663, 8
          %s665 = scalar_lea.vmem %s0, %s664
        $region108: #{idefics2_perceiver_resampler.1} parent=103 // pred_fallthru
          _
        // Predicated region
        $region109: #{idefics2_perceiver_resampler.1} parent=103 // pred_check
          %p666 = pneg %p79
        $region110: #{idefics2_perceiver_resampler.1} parent=103 // pred_check_branch
          %668 = sbr.rel (%p666) target = $region112
        $region111: #{idefics2_perceiver_resampler.1} parent=103 // pred_region
          %p669 = scmp.lt.s32.totalorder %s33, 1
          %s670 = scalar_select %p669, %s33, 1
          %s671 = scalar_lea.vmem %s1, %s670
        $region112: #{idefics2_perceiver_resampler.1} parent=103 // pred_fallthru
          _
      $region104: #{idefics2_perceiver_resampler.1} parent=5 // pred_fallthru
        _
      %p672 = scmp.le.s32.totalorder 1, %s33
      %p673 = scmp.lt.s32.totalorder %s33, 3
      %p674 = pnand %p672, %p673
      %p675 = pneg %p674
      // Predicated region
      $region113: #{idefics2_perceiver_resampler.1} parent=5 // pred_check
        _
      $region114: #{idefics2_perceiver_resampler.1} parent=5 // pred_check_branch
        %677 = sbr.rel (%p674) target = $region116
      $region115: #{idefics2_perceiver_resampler.1} parent=5 // pred_region
        %s678 = ssub.s32 %s33, 1
        %p679 = scmp.lt.s32.totalorder %s38, 1
        %s680 = scalar_select %p679, %s38, 1
        %s681 = smul.addr %s680, 2
        %s682 = smul.addr %s681, 8
        %s683 = scalar_lea.vmem %s0, %s682
        %p684 = pneg %p59
        %p685 = pneg %p56
        %p686 = scmp.lt.s32.totalorder %s38, 1
        %s687 = scalar_select %p686, %s38, 1
        %s688 = scalar_lea.vmem %s1, %s687
        %p689 = pneg %p85
        %p690 = pneg %p82
        %p691 = pneg %p106
        %p692 = pneg %p103
        %p693 = pneg %p127
        %p694 = pneg %p124
        %p695 = pneg %p148
        %p696 = pneg %p145
        %p697 = pneg %p169
        %p698 = pneg %p166
        %p699 = pneg %p190
        %p700 = pneg %p187
        %p701 = pneg %p211
        %p702 = pneg %p208
        %p703 = pneg %p232
        %p704 = pneg %p229
        %p705 = pneg %p253
        %p706 = pneg %p250
        %p707 = pneg %p274
        %p708 = pneg %p271
        %p709 = pneg %p295
        %p710 = pneg %p292
        %p711 = pneg %p316
        %p712 = pneg %p313
        %p713 = pneg %p337
        %p714 = pneg %p334
        %p715 = pneg %p358
        %p716 = pneg %p355
        %p717 = pneg %p379
        %p718 = pneg %p376
        %p719 = pneg %p400
        %p720 = pneg %p397
        %p721 = pneg %p421
        %p722 = pneg %p418
        %p723 = pneg %p442
        %p724 = pneg %p439
        %p725 = pneg %p463
        %p726 = pneg %p460
        %p727 = pneg %p484
        %p728 = pneg %p481
        %p729 = pneg %p505
        %p730 = pneg %p502
        %p731 = pneg %p526
        %p732 = pneg %p523
        %p733 = pneg %p547
        %p734 = pneg %p544
        %p735 = pneg %p573
        %p736 = pneg %p570
        %s737 = sand.u32 %s560, 1
        %s738 = scalar_lea.sflag [#allocation4], %s737
        %s739 = sand.u32 %s560, 1
        %s740 = smul.addr %s739, 8
        %s741 = scalar_lea.vmem [#allocation3], %s740
        %p742 = scmp.lt.s32.totalorder %s38, 1
        %s743 = scalar_select %p742, %s38, 1
        %s744 = smul.addr %s743, 2
        %s745 = smul.addr %s744, 8
        %s746 = scalar_lea.vmem %s0, %s745
        %p747 = scmp.lt.s32.totalorder %s38, 1
        %s748 = scalar_select %p747, %s38, 1
        %s749 = scalar_lea.vmem %s1, %s748
        %v751 = vld [vmem:[%s746] sm:$0xff]
        %v752 = vld [vmem:[%s746 + $0x8] sm:$0xff]
        %v753 = vld [vmem:[%s749] sm:$0x1]
        %v754 = vld [vmem:[%s2] sm:$0xff]
        %v755 = vld [vmem:[%s3] sm:$0x1]
        %v756 = vmul.f32 %v754, %v754
        %vm757 = vcmask 523264
        %v758 = vsel %vm757, %v756, 0.0
        %759 = vadd.xlane.f32.xlu0 %v758
        %v760 = vpop.xlane.xlu0 %759
        %v761 = vrcp.pop 64.0
        %v762 = vmul.f32 %v760, %v761
        %v763 = vadd.f32 %v762, 1e-06
        %v764 = vrsqrt.pop %v763
        %v765 = vmul.f32 %v754, %v764
        %v767 = vlaneseq
        %v768 = vshrl.u32 %v767, 7
        %v769 = vsub.s32 0, %v768
        %v770 = vrot.slane %v755, %v769
        %v772 = vmul.f32 %v765, %v770
        %v773 = vld [vmem:[%s4] sm:$0x1]
        %v774 = vmul.f32 %v751, %v751
        %v775 = vmul.f32 %v752, %v752
        %v776 = vsel %vm757, %v774, 0.0
        %777 = vadd.xlane.f32.xlu0 %v776
        %v778 = vpop.xlane.xlu0 %777
        %v779 = vsel %vm757, %v775, 0.0
        %780 = vadd.xlane.f32.xlu0 %v779
        %v781 = vpop.xlane.xlu0 %780
        %v782 = vmul.f32 %v778, %v761
        %v783 = vmul.f32 %v781, %v761
        %v784 = vadd.f32 %v782, 1e-06
        %v785 = vadd.f32 %v783, 1e-06
        %v786 = vrsqrt.pop %v784
        %v787 = vrsqrt.pop %v785
        %v788 = vmul.f32 %v751, %v786
        %v789 = vmul.f32 %v752, %v787
        %v791 = vlaneseq
        %v792 = vshrl.u32 %v791, 7
        %v793 = vsub.s32 0, %v792
        %v794 = vrot.slane %v773, %v793
        %v796 = vmul.f32 %v788, %v794
        %v797 = vmul.f32 %v789, %v794
        %798 = vst.msk [vmem:[#allocation2] sm:$0xff] %vm757, %v796
        %799 = vst.msk [vmem:[#allocation2 + $0x8] sm:$0xff] %vm757, %v797
        %800 = vst.msk [vmem:[#allocation2 + $0x10] sm:$0xff] %vm757, %v772
        %v801 = vpack.c.bf16 %v772, %v772
        %v802 = vld [vmem:[#allocation2] sm:$0xff]
        %v803 = vld [vmem:[#allocation2 + $0x8] sm:$0xff]
        %v804 = vld [vmem:[#allocation2 + $0x10] sm:$0xff]
        %v805 = vpack.c.bf16 %v803, %v802
        %v806 = vpack.c.bf16 %v804, %v804
        %v807 = vld [vmem:[%s5] sm:$0xf]
        %v808 = vld [vmem:[%s5 + $0x4] sm:$0xf]
        %v809 = vld [vmem:[%s5 + $0x8] sm:$0xf]
        %v810 = vld [vmem:[%s5 + $0xc] sm:$0xf]
        %v811 = vld [vmem:[%s5 + $0x10] sm:$0xf]
        %v812 = vld [vmem:[%s5 + $0x14] sm:$0xf]
        %v813 = vld [vmem:[%s5 + $0x18] sm:$0xf]
        %v814 = vld [vmem:[%s5 + $0x1c] sm:$0xf]
        %v815 = vld [vmem:[%s5 + $0x20] sm:$0xf]
        %v816 = vld [vmem:[%s5 + $0x24] sm:$0xf]
        %v817 = vld [vmem:[%s5 + $0x28] sm:$0xf]
        %v818 = vld [vmem:[%s5 + $0x2c] sm:$0xf]
        %v819 = vld [vmem:[%s5 + $0x30] sm:$0xf]
        %v820 = vld [vmem:[%s5 + $0x34] sm:$0xf]
        %v821 = vld [vmem:[%s5 + $0x38] sm:$0xf]
        %v822 = vld [vmem:[%s5 + $0x3c] sm:$0xf]
        %v823 = vld [vmem:[%s5 + $0x40] sm:$0xf]
        %v824 = vld [vmem:[%s5 + $0x44] sm:$0xf]
        %v825 = vld [vmem:[%s5 + $0x48] sm:$0xf]
        %v826 = vld [vmem:[%s5 + $0x4c] sm:$0xf]
        %v827 = vld [vmem:[%s5 + $0x50] sm:$0xf]
        %v828 = vld [vmem:[%s5 + $0x54] sm:$0xf]
        %v829 = vld [vmem:[%s5 + $0x58] sm:$0xf]
        %v830 = vld [vmem:[%s5 + $0x5c] sm:$0xf]
        %v831 = vld [vmem:[%s5 + $0x60] sm:$0xf]
        %v832 = vld [vmem:[%s5 + $0x64] sm:$0xf]
        %v833 = vld [vmem:[%s5 + $0x68] sm:$0xf]
        %v834 = vld [vmem:[%s5 + $0x6c] sm:$0xf]
        %v835 = vld [vmem:[%s5 + $0x70] sm:$0xf]
        %v836 = vld [vmem:[%s5 + $0x74] sm:$0xf]
        %v837 = vld [vmem:[%s5 + $0x78] sm:$0xf]
        %v838 = vld [vmem:[%s5 + $0x7c] sm:$0xf]
        %v847 = vunpack.c.l.b16 %v807
        %v848 = vunpack.c.l.b16 %v808
        %v849 = vunpack.c.l.b16 %v809
        %v850 = vunpack.c.l.b16 %v810
        %v851 = vunpack.c.l.b16 %v811
        %v852 = vunpack.c.l.b16 %v812
        %v853 = vunpack.c.l.b16 %v813
        %v854 = vunpack.c.l.b16 %v814
        %v855 = vpack.c.b16 %v848, %v847
        %v856 = vpack.c.b16 %v850, %v849
        %v857 = vpack.c.b16 %v852, %v851
        %v858 = vpack.c.b16 %v854, %v853
        %v864 = vsel %vm757, %v801, 0
        %866 = vmatprep.subr.bf16.mxu0 0
        %867 = vmatpush1.bf16.msra.mxu0 %v855
        %868 = vmatprep.subr.bf16.mxu0 0
        %869 = vmatpush1.bf16.msra.mxu0 %v856
        %870 = vmatprep.subr.bf16.mxu0 0
        %871 = vmatpush1.bf16.msra.mxu0 %v857
        %872 = vmatprep.subr.bf16.mxu0 0
        %873 = vmatpush1.bf16.msra.mxu0 %v858
        %874 = vmatprep.subr.bf16.mxu0 0
        %875 = vmatpush1.bf16.msra.mxu0 0
        %876 = vmatprep.subr.bf16.mxu0 0
        %877 = vmatpush1.bf16.msra.mxu0 0
        %878 = vmatprep.subr.bf16.mxu0 0
        %879 = vmatpush1.bf16.msra.mxu0 0
        %880 = vmatprep.subr.bf16.mxu0 0
        %881 = vmatpush1.bf16.msra.mxu0 0
        %882 = vmatprep.subr.bf16.mxu0 0
        %883 = vmatpush1.bf16.msra.mxu0 0
        %884 = vmatprep.subr.bf16.mxu0 0
        %885 = vmatpush1.bf16.msra.mxu0 0
        %886 = vmatprep.subr.bf16.mxu0 0
        %887 = vmatpush1.bf16.msra.mxu0 0
        %888 = vmatprep.subr.bf16.mxu0 0
        %889 = vmatpush1.bf16.msra.mxu0 0
        %890 = vmatprep.subr.bf16.mxu0 0
        %891 = vmatpush1.bf16.msra.mxu0 0
        %892 = vmatprep.subr.bf16.mxu0 0
        %893 = vmatpush1.bf16.msra.mxu0 0
        %894 = vmatprep.subr.bf16.mxu0 0
        %895 = vmatpush1.bf16.msra.mxu0 0
        %896 = vmatprep.subr.bf16.mxu0 0
        %897 = vmatpush1.bf16.msra.mxu0 0
        %898 = vmatprep.mubr.bf16.mxu0 0
        %899 = vmatmul.mubr.bf16.gmra.mrb[0].mxu0 %v864
        %v900 = vpop.f32.mrb[0].mxu0
        %v901 = vadd.f32 0.0, %v900
        %v902 = vpop.f32.mrb[0].mxu0
        %v903 = vpop.f32.mrb[0].mxu0
        %v904 = vpop.f32.mrb[0].mxu0
        %905 = vdwg.mxu0
        %v914 = vunpack.c.l.b16 %v815
        %v915 = vunpack.c.l.b16 %v816
        %v916 = vunpack.c.l.b16 %v817
        %v917 = vunpack.c.l.b16 %v818
        %v918 = vunpack.c.l.b16 %v819
        %v919 = vunpack.c.l.b16 %v820
        %v920 = vunpack.c.l.b16 %v821
        %v921 = vunpack.c.l.b16 %v822
        %v922 = vpack.c.b16 %v915, %v914
        %v923 = vpack.c.b16 %v917, %v916
        %v924 = vpack.c.b16 %v919, %v918
        %v925 = vpack.c.b16 %v921, %v920
        %930 = vmatprep.subr.bf16.mxu0 0
        %931 = vmatpush1.bf16.msra.mxu0 %v922
        %932 = vmatprep.subr.bf16.mxu0 0
        %933 = vmatpush1.bf16.msra.mxu0 %v923
        %934 = vmatprep.subr.bf16.mxu0 0
        %935 = vmatpush1.bf16.msra.mxu0 %v924
        %936 = vmatprep.subr.bf16.mxu0 0
        %937 = vmatpush1.bf16.msra.mxu0 %v925
        %938 = vmatprep.subr.bf16.mxu0 0
        %939 = vmatpush1.bf16.msra.mxu0 0
        %940 = vmatprep.subr.bf16.mxu0 0
        %941 = vmatpush1.bf16.msra.mxu0 0
        %942 = vmatprep.subr.bf16.mxu0 0
        %943 = vmatpush1.bf16.msra.mxu0 0
        %944 = vmatprep.subr.bf16.mxu0 0
        %945 = vmatpush1.bf16.msra.mxu0 0
        %946 = vmatprep.subr.bf16.mxu0 0
        %947 = vmatpush1.bf16.msra.mxu0 0
        %948 = vmatprep.subr.bf16.mxu0 0
        %949 = vmatpush1.bf16.msra.mxu0 0
        %950 = vmatprep.subr.bf16.mxu0 0
        %951 = vmatpush1.bf16.msra.mxu0 0
        %952 = vmatprep.subr.bf16.mxu0 0
        %953 = vmatpush1.bf16.msra.mxu0 0
        %954 = vmatprep.subr.bf16.mxu0 0
        %955 = vmatpush1.bf16.msra.mxu0 0
        %956 = vmatprep.subr.bf16.mxu0 0
        %957 = vmatpush1.bf16.msra.mxu0 0
        %958 = vmatprep.subr.bf16.mxu0 0
        %959 = vmatpush1.bf16.msra.mxu0 0
        %960 = vmatprep.subr.bf16.mxu0 0
        %961 = vmatpush1.bf16.msra.mxu0 0
        %962 = vmatprep.mubr.bf16.mxu0 0
        %963 = vmatmul.mubr.bf16.gmra.mrb[0].mxu0 %v864
        %v964 = vpop.f32.mrb[0].mxu0
        %v965 = vadd.f32 0.0, %v964
        %v966 = vpop.f32.mrb[0].mxu0
        %v967 = vpop.f32.mrb[0].mxu0
        %v968 = vpop.f32.mrb[0].mxu0
        %969 = vdwg.mxu0
        %v978 = vunpack.c.l.b16 %v823
        %v979 = vunpack.c.l.b16 %v824
        %v980 = vunpack.c.l.b16 %v825
        %v981 = vunpack.c.l.b16 %v826
        %v982 = vunpack.c.l.b16 %v827
        %v983 = vunpack.c.l.b16 %v828
        %v984 = vunpack.c.l.b16 %v829
        %v985 = vunpack.c.l.b16 %v830
        %v986 = vpack.c.b16 %v979, %v978
        %v987 = vpack.c.b16 %v981, %v980
        %v988 = vpack.c.b16 %v983, %v982
        %v989 = vpack.c.b16 %v985, %v984
        %994 = vmatprep.subr.bf16.mxu0 0
        %995 = vmatpush1.bf16.msra.mxu0 %v986
        %996 = vmatprep.subr.bf16.mxu0 0
        %997 = vmatpush1.bf16.msra.mxu0 %v987
        %998 = vmatprep.subr.bf16.mxu0 0
        %999 = vmatpush1.bf16.msra.mxu0 %v988
        %1000 = vmatprep.subr.bf16.mxu0 0
        %1001 = vmatpush1.bf16.msra.mxu0 %v989
        %1002 = vmatprep.subr.bf16.mxu0 0
        %1003 = vmatpush1.bf16.msra.mxu0 0
        %1004 = vmatprep.subr.bf16.mxu0 0
        %1005 = vmatpush1.bf16.msra.mxu0 0
        %1006 = vmatprep.subr.bf16.mxu0 0
        %1007 = vmatpush1.bf16.msra.mxu0 0
        %1008 = vmatprep.subr.bf16.mxu0 0
        %1009 = vmatpush1.bf16.msra.mxu0 0
        %1010 = vmatprep.subr.bf16.mxu0 0
        %1011 = vmatpush1.bf16.msra.mxu0 0
        %1012 = vmatprep.subr.bf16.mxu0 0
        %1013 = vmatpush1.bf16.msra.mxu0 0
        %1014 = vmatprep.subr.bf16.mxu0 0
        %1015 = vmatpush1.bf16.msra.mxu0 0
        %1016 = vmatprep.subr.bf16.mxu0 0
        %1017 = vmatpush1.bf16.msra.mxu0 0
        %1018 = vmatprep.subr.bf16.mxu0 0
        %1019 = vmatpush1.bf16.msra.mxu0 0
        %1020 = vmatprep.subr.bf16.mxu0 0
        %1021 = vmatpush1.bf16.msra.mxu0 0
        %1022 = vmatprep.subr.bf16.mxu0 0
        %1023 = vmatpush1.bf16.msra.mxu0 0
        %1024 = vmatprep.subr.bf16.mxu0 0
        %1025 = vmatpush1.bf16.msra.mxu0 0
        %1026 = vmatprep.mubr.bf16.mxu0 0
        %1027 = vmatmul.mubr.bf16.gmra.mrb[0].mxu0 %v864
        %v1028 = vpop.f32.mrb[0].mxu0
        %v1029 = vadd.f32 0.0, %v1028
        %v1030 = vpop.f32.mrb[0].mxu0
        %v1031 = vpop.f32.mrb[0].mxu0
        %v1032 = vpop.f32.mrb[0].mxu0
        %1033 = vdwg.mxu0
        %v1042 = vunpack.c.l.b16 %v831
        %v1043 = vunpack.c.l.b16 %v832
        %v1044 = vunpack.c.l.b16 %v833
        %v1045 = vunpack.c.l.b16 %v834
        %v1046 = vunpack.c.l.b16 %v835
        %v1047 = vunpack.c.l.b16 %v836
        %v1048 = vunpack.c.l.b16 %v837
        %v1049 = vunpack.c.l.b16 %v838
        %v1050 = vpack.c.b16 %v1043, %v1042
        %v1051 = vpack.c.b16 %v1045, %v1044
        %v1052 = vpack.c.b16 %v1047, %v1046
        %v1053 = vpack.c.b16 %v1049, %v1048
        %1058 = vmatprep.subr.bf16.mxu0 0
        %1059 = vmatpush1.bf16.msra.mxu0 %v1050
        %1060 = vmatprep.subr.bf16.mxu0 0
        %1061 = vmatpush1.bf16.msra.mxu0 %v1051
        %1062 = vmatprep.subr.bf16.mxu0 0
        %1063 = vmatpush1.bf16.msra.mxu0 %v1052
        %1064 = vmatprep.subr.bf16.mxu0 0
        %1065 = vmatpush1.bf16.msra.mxu0 %v1053
        %1066 = vmatprep.subr.bf16.mxu0 0
        %1067 = vmatpush1.bf16.msra.mxu0 0
        %1068 = vmatprep.subr.bf16.mxu0 0
        %1069 = vmatpush1.bf16.msra.mxu0 0
        %1070 = vmatprep.subr.bf16.mxu0 0
        %1071 = vmatpush1.bf16.msra.mxu0 0
        %1072 = vmatprep.subr.bf16.mxu0 0
        %1073 = vmatpush1.bf16.msra.mxu0 0
        %1074 = vmatprep.subr.bf16.mxu0 0
        %1075 = vmatpush1.bf16.msra.mxu0 0
        %1076 = vmatprep.subr.bf16.mxu0 0
        %1077 = vmatpush1.bf16.msra.mxu0 0
        %1078 = vmatprep.subr.bf16.mxu0 0
        %1079 = vmatpush1.bf16.msra.mxu0 0
        %1080 = vmatprep.subr.bf16.mxu0 0
        %1081 = vmatpush1.bf16.msra.mxu0 0
        %1082 = vmatprep.subr.bf16.mxu0 0
        %1083 = vmatpush1.bf16.msra.mxu0 0
        %1084 = vmatprep.subr.bf16.mxu0 0
        %1085 = vmatpush1.bf16.msra.mxu0 0
        %1086 = vmatprep.subr.bf16.mxu0 0
        %1087 = vmatpush1.bf16.msra.mxu0 0
        %1088 = vmatprep.subr.bf16.mxu0 0
        %1089 = vmatpush1.bf16.msra.mxu0 0
        %1090 = vmatprep.mubr.bf16.mxu0 0
        %1091 = vmatmul.mubr.bf16.gmra.mrb[0].mxu0 %v864
        %v1092 = vpop.f32.mrb[0].mxu0
        %v1093 = vadd.f32 0.0, %v1092
        %v1094 = vpop.f32.mrb[0].mxu0
        %v1095 = vpop.f32.mrb[0].mxu0
        %v1096 = vpop.f32.mrb[0].mxu0
        %1097 = vdwg.mxu0
        %v1098 = vld [vmem:[%s6] sm:$0xf]
        %v1099 = vld [vmem:[%s6 + $0x4] sm:$0xf]
        %v1100 = vld [vmem:[%s6 + $0x8] sm:$0xf]
        %v1101 = vld [vmem:[%s6 + $0xc] sm:$0xf]
        %v1102 = vld [vmem:[%s6 + $0x10] sm:$0xf]
        %v1103 = vld [vmem:[%s6 + $0x14] sm:$0xf]
        %v1104 = vld [vmem:[%s6 + $0x18] sm:$0xf]
        %v1105 = vld [vmem:[%s6 + $0x1c] sm:$0xf]
        %v1106 = vld [vmem:[%s6 + $0x20] sm:$0xf]
        %v1107 = vld [vmem:[%s6 + $0x24] sm:$0xf]
        %v1108 = vld [vmem:[%s6 + $0x28] sm:$0xf]
        %v1109 = vld [vmem:[%s6 + $0x2c] sm:$0xf]
        %v1110 = vld [vmem:[%s6 + $0x30] sm:$0xf]
        %v1111 = vld [vmem:[%s6 + $0x34] sm:$0xf]
        %v1112 = vld [vmem:[%s6 + $0x38] sm:$0xf]
        %v1113 = vld [vmem:[%s6 + $0x3c] sm:$0xf]
        %v1122 = vunpack.c.l.b16 %v1098
        %v1123 = vunpack.c.l.b16 %v1099
        %v1124 = vunpack.c.l.b16 %v1100
        %v1125 = vunpack.c.l.b16 %v1101
        %v1126 = vunpack.c.l.b16 %v1102
        %v1127 = vunpack.c.l.b16 %v1103
        %v1128 = vunpack.c.l.b16 %v1104
        %v1129 = vunpack.c.l.b16 %v1105
        %v1130 = vpack.c.b16 %v1123, %v1122
        %v1131 = vpack.c.b16 %v1125, %v1124
        %v1132 = vpack.c.b16 %v1127, %v1126
        %v1133 = vpack.c.b16 %v1129, %v1128
        %v1139 = vsel %vm757, %v805, 0
        %v1142 = vsel %vm757, %v806, 0
        %1144 = vmatprep.subr.bf16.mxu0 0
        %1145 = vmatpush1.bf16.msra.mxu0 %v1130
        %1146 = vmatprep.subr.bf16.mxu0 0
        %1147 = vmatpush1.bf16.msra.mxu0 %v1131
        %1148 = vmatprep.subr.bf16.mxu0 0
        %1149 = vmatpush1.bf16.msra.mxu0 %v1132
        %1150 = vmatprep.subr.bf16.mxu0 0
        %1151 = vmatpush1.bf16.msra.mxu0 %v1133
        %1152 = vmatprep.subr.bf16.mxu0 0
        %1153 = vmatpush1.bf16.msra.mxu0 0
        %1154 = vmatprep.subr.bf16.mxu0 0
        %1155 = vmatpush1.bf16.msra.mxu0 0
        %1156 = vmatprep.subr.bf16.mxu0 0
        %1157 = vmatpush1.bf16.msra.mxu0 0
        %1158 = vmatprep.subr.bf16.mxu0 0
        %1159 = vmatpush1.bf16.msra.mxu0 0
        %1160 = vmatprep.subr.bf16.mxu0 0
        %1161 = vmatpush1.bf16.msra.mxu0 0
        %1162 = vmatprep.subr.bf16.mxu0 0
        %1163 = vmatpush1.bf16.msra.mxu0 0
        %1164 = vmatprep.subr.bf16.mxu0 0
        %1165 = vmatpush1.bf16.msra.mxu0 0
        %1166 = vmatprep.subr.bf16.mxu0 0
        %1167 = vmatpush1.bf16.msra.mxu0 0
        %1168 = vmatprep.subr.bf16.mxu0 0
        %1169 = vmatpush1.bf16.msra.mxu0 0
        %1170 = vmatprep.subr.bf16.mxu0 0
        %1171 = vmatpush1.bf16.msra.mxu0 0
        %1172 = vmatprep.subr.bf16.mxu0 0
        %1173 = vmatpush1.bf16.msra.mxu0 0
        %1174 = vmatprep.subr.bf16.mxu0 0
        %1175 = vmatpush1.bf16.msra.mxu0 0
        %1176 = vmatprep.mubr.bf16.mxu0 0
        %1177 = vmatmul.mubr.bf16.gmra.mrb[0].mxu0 %v1139
        %v1178 = vpop.f32.mrb[0].mxu0
        %v1179 = vadd.f32 0.0, %v1178
        %v1180 = vpop.f32.mrb[0].mxu0
        %v1181 = vpop.f32.mrb[0].mxu0
        %v1182 = vadd.f32 0.0, %v1181
        %v1183 = vpop.f32.mrb[0].mxu0
        %1184 = vmatprep.mubr.bf16.mxu0 0
        %1185 = vmatmul.mubr.bf16.gmra.mrb[0].mxu0 %v1142
        %v1186 = vpop.f32.mrb[0].mxu0
        %v1187 = vadd.f32 0.0, %v1186
        %v1188 = vpop.f32.mrb[0].mxu0
        %v1189 = vpop.f32.mrb[0].mxu0
        %v1190 = vpop.f32.mrb[0].mxu0
        %1191 = vdwg.mxu0
        %v1200 = vunpack.c.l.b16 %v1106
        %v1201 = vunpack.c.l.b16 %v1107
        %v1202 = vunpack.c.l.b16 %v1108
        %v1203 = vunpack.c.l.b16 %v1109
        %v1204 = vunpack.c.l.b16 %v1110
        %v1205 = vunpack.c.l.b16 %v1111
        %v1206 = vunpack.c.l.b16 %v1112
        %v1207 = vunpack.c.l.b16 %v1113
        %v1208 = vpack.c.b16 %v1201, %v1200
        %v1209 = vpack.c.b16 %v1203, %v1202
        %v1210 = vpack.c.b16 %v1205, %v1204
        %v1211 = vpack.c.b16 %v1207, %v1206
        %1216 = vmatprep.subr.bf16.mxu0 0
        %1217 = vmatpush1.bf16.msra.mxu0 %v1208
        %1218 = vmatprep.subr.bf16.mxu0 0
        %1219 = vmatpush1.bf16.msra.mxu0 %v1209
        %1220 = vmatprep.subr.bf16.mxu0 0
        %1221 = vmatpush1.bf16.msra.mxu0 %v1210
        %1222 = vmatprep.subr.bf16.mxu0 0
        %1223 = vmatpush1.bf16.msra.mxu0 %v1211
        %1224 = vmatprep.subr.bf16.mxu0 0
        %1225 = vmatpush1.bf16.msra.mxu0 0
        %1226 = vmatprep.subr.bf16.mxu0 0
        %1227 = vmatpush1.bf16.msra.mxu0 0
        %1228 = vmatprep.subr.bf16.mxu0 0
        %1229 = vmatpush1.bf16.msra.mxu0 0
        %1230 = vmatprep.subr.bf16.mxu0 0
        %1231 = vmatpush1.bf16.msra.mxu0 0
        %1232 = vmatprep.subr.bf16.mxu0 0
        %1233 = vmatpush1.bf16.msra.mxu0 0
        %1234 = vmatprep.subr.bf16.mxu0 0
        %1235 = vmatpush1.bf16.msra.mxu0 0
        %1236 = vmatprep.subr.bf16.mxu0 0
        %1237 = vmatpush1.bf16.msra.mxu0 0
        %1238 = vmatprep.subr.bf16.mxu0 0
        %1239 = vmatpush1.bf16.msra.mxu0 0
        %1240 = vmatprep.subr.bf16.mxu0 0
        %1241 = vmatpush1.bf16.msra.mxu0 0
        %1242 = vmatprep.subr.bf16.mxu0 0
        %1243 = vmatpush1.bf16.msra.mxu0 0
        %1244 = vmatprep.subr.bf16.mxu0 0
        %1245 = vmatpush1.bf16.msra.mxu0 0
        %1246 = vmatprep.subr.bf16.mxu0 0
        %1247 = vmatpush1.bf16.msra.mxu0 0
        %1248 = vmatprep.mubr.bf16.mxu0 0
        %1249 = vmatmul.mubr.bf16.gmra.mrb[0].mxu0 %v1139
        %v1250 = vpop.f32.mrb[0].mxu0
        %v1251 = vadd.f32 0.0, %v1250
        %v1252 = vpop.f32.mrb[0].mxu0
        %v1253 = vpop.f32.mrb[0].mxu0
        %v1254 = vadd.f32 0.0, %v1253
        %v1255 = vpop.f32.mrb[0].mxu0
        %1256 = vmatprep.mubr.bf16.mxu0 0
        %1257 = vmatmul.mubr.bf16.gmra.mrb[0].mxu0 %v1142
        %v1258 = vpop.f32.mrb[0].mxu0
        %v1259 = vadd.f32 0.0, %v1258
        %v1260 = vpop.f32.mrb[0].mxu0
        %v1261 = vpop.f32.mrb[0].mxu0
        %v1262 = vpop.f32.mrb[0].mxu0
        %1263 = vdwg.mxu0
        %v1264 = vld [vmem:[%s7] sm:$0xf]
        %v1265 = vld [vmem:[%s7 + $0x4] sm:$0xf]
        %v1266 = vld [vmem:[%s7 + $0x8] sm:$0xf]
        %v1267 = vld [vmem:[%s7 + $0xc] sm:$0xf]
        %v1268 = vld [vmem:[%s7 + $0x10] sm:$0xf]
        %v1269 = vld [vmem:[%s7 + $0x14] sm:$0xf]
        %v1270 = vld [vmem:[%s7 + $0x18] sm:$0xf]
        %v1271 = vld [vmem:[%s7 + $0x1c] sm:$0xf]
        %v1272 = vld [vmem:[%s7 + $0x20] sm:$0xf]
        %v1273 = vld [vmem:[%s7 + $0x24] sm:$0xf]
        %v1274 = vld [vmem:[%s7 + $0x28] sm:$0xf]
        %v1275 = vld [vmem:[%s7 + $0x2c] sm:$0xf]
        %v1276 = vld [vmem:[%s7 + $0x30] sm:$0xf]
        %v1277 = vld [vmem:[%s7 + $0x34] sm:$0xf]
        %v1278 = vld [vmem:[%s7 + $0x38] sm:$0xf]
        %v1279 = vld [vmem:[%s7 + $0x3c] sm:$0xf]
        %v1288 = vunpack.c.l.b16 %v1264
        %v1289 = vunpack.c.l.b16 %v1265
        %v1290 = vunpack.c.l.b16 %v1266
        %v1291 = vunpack.c.l.b16 %v1267
        %v1292 = vunpack.c.l.b16 %v1268
        %v1293 = vunpack.c.l.b16 %v1269
        %v1294 = vunpack.c.l.b16 %v1270
        %v1295 = vunpack.c.l.b16 %v1271
        %v1296 = vpack.c.b16 %v1289, %v1288
        %v1297 = vpack.c.b16 %v1291, %v1290
        %v1298 = vpack.c.b16 %v1293, %v1292
        %v1299 = vpack.c.b16 %v1295, %v1294
        %1304 = vmatprep.subr.bf16.mxu0 0
        %1305 = vmatpush1.bf16.msra.mxu0 %v1296
        %1306 = vmatprep.subr.bf16.mxu0 0
        %1307 = vmatpush1.bf16.msra.mxu0 %v1297
        %1308 = vmatprep.subr.bf16.mxu0 0
        %1309 = vmatpush1.bf16.msra.mxu0 %v1298
        %1310 = vmatprep.subr.bf16.mxu0 0
        %1311 = vmatpush1.bf16.msra.mxu0 %v1299
        %1312 = vmatprep.subr.bf16.mxu0 0
        %1313 = vmatpush1.bf16.msra.mxu0 0
        %1314 = vmatprep.subr.bf16.mxu0 0
        %1315 = vmatpush1.bf16.msra.mxu0 0
        %1316 = vmatprep.subr.bf16.mxu0 0
        %1317 = vmatpush1.bf16.msra.mxu0 0
        %1318 = vmatprep.subr.bf16.mxu0 0
        %1319 = vmatpush1.bf16.msra.mxu0 0
        %1320 = vmatprep.subr.bf16.mxu0 0
        %1321 = vmatpush1.bf16.msra.mxu0 0
        %1322 = vmatprep.subr.bf16.mxu0 0
        %1323 = vmatpush1.bf16.msra.mxu0 0
        %1324 = vmatprep.subr.bf16.mxu0 0
        %1325 = vmatpush1.bf16.msra.mxu0 0
        %1326 = vmatprep.subr.bf16.mxu0 0
        %1327 = vmatpush1.bf16.msra.mxu0 0
        %1328 = vmatprep.subr.bf16.mxu0 0
        %1329 = vmatpush1.bf16.msra.mxu0 0
        %1330 = vmatprep.subr.bf16.mxu0 0
        %1331 = vmatpush1.bf16.msra.mxu0 0
        %1332 = vmatprep.subr.bf16.mxu0 0
        %1333 = vmatpush1.bf16.msra.mxu0 0
        %1334 = vmatprep.subr.bf16.mxu0 0
        %1335 = vmatpush1.bf16.msra.mxu0 0
        %1336 = vmatprep.mubr.bf16.mxu0 0
        %1337 = vmatmul.mubr.bf16.gmra.mrb[0].mxu0 %v1139
        %v1338 = vpop.f32.mrb[0].mxu0
        %v1339 = vadd.f32 0.0, %v1338
        %v1340 = vpop.f32.mrb[0].mxu0
        %v1341 = vpop.f32.mrb[0].mxu0
        %v1342 = vadd.f32 0.0, %v1341
        %v1343 = vpop.f32.mrb[0].mxu0
        %1344 = vmatprep.mubr.bf16.mxu0 0
        %1345 = vmatmul.mubr.bf16.gmra.mrb[0].mxu0 %v1142
        %v1346 = vpop.f32.mrb[0].mxu0
        %v1347 = vadd.f32 0.0, %v1346
        %v1348 = vpop.f32.mrb[0].mxu0
        %v1349 = vpop.f32.mrb[0].mxu0
        %v1350 = vpop.f32.mrb[0].mxu0
        %1351 = vdwg.mxu0
        %v1360 = vunpack.c.l.b16 %v1272
        %v1361 = vunpack.c.l.b16 %v1273
        %v1362 = vunpack.c.l.b16 %v1274
        %v1363 = vunpack.c.l.b16 %v1275
        %v1364 = vunpack.c.l.b16 %v1276
        %v1365 = vunpack.c.l.b16 %v1277
        %v1366 = vunpack.c.l.b16 %v1278
        %v1367 = vunpack.c.l.b16 %v1279
        %v1368 = vpack.c.b16 %v1361, %v1360
        %v1369 = vpack.c.b16 %v1363, %v1362
        %v1370 = vpack.c.b16 %v1365, %v1364
        %v1371 = vpack.c.b16 %v1367, %v1366
        %1376 = vmatprep.subr.bf16.mxu0 0
        %1377 = vmatpush1.bf16.msra.mxu0 %v1368
        %1378 = vmatprep.subr.bf16.mxu0 0
        %1379 = vmatpush1.bf16.msra.mxu0 %v1369
        %1380 = vmatprep.subr.bf16.mxu0 0
        %1381 = vmatpush1.bf16.msra.mxu0 %v1370
        %1382 = vmatprep.subr.bf16.mxu0 0
        %1383 = vmatpush1.bf16.msra.mxu0 %v1371
        %1384 = vmatprep.subr.bf16.mxu0 0
        %1385 = vmatpush1.bf16.msra.mxu0 0
        %1386 = vmatprep.subr.bf16.mxu0 0
        %1387 = vmatpush1.bf16.msra.mxu0 0
        %1388 = vmatprep.subr.bf16.mxu0 0
        %1389 = vmatpush1.bf16.msra.mxu0 0
        %1390 = vmatprep.subr.bf16.mxu0 0
        %1391 = vmatpush1.bf16.msra.mxu0 0
        %1392 = vmatprep.subr.bf16.mxu0 0
        %1393 = vmatpush1.bf16.msra.mxu0 0
        %1394 = vmatprep.subr.bf16.mxu0 0
        %1395 = vmatpush1.bf16.msra.mxu0 0
        %1396 = vmatprep.subr.bf16.mxu0 0
        %1397 = vmatpush1.bf16.msra.mxu0 0
        %1398 = vmatprep.subr.bf16.mxu0 0
        %1399 = vmatpush1.bf16.msra.mxu0 0
        %1400 = vmatprep.subr.bf16.mxu0 0
        %1401 = vmatpush1.bf16.msra.mxu0 0
        %1402 = vmatprep.subr.bf16.mxu0 0
        %1403 = vmatpush1.bf16.msra.mxu0 0
        %1404 = vmatprep.subr.bf16.mxu0 0
        %1405 = vmatpush1.bf16.msra.mxu0 0
        %1406 = vmatprep.subr.bf16.mxu0 0
        %1407 = vmatpush1.bf16.msra.mxu0 0
        %1408 = vmatprep.mubr.bf16.mxu0 0
        %1409 = vmatmul.mubr.bf16.gmra.mrb[0].mxu0 %v1139
        %v1410 = vpop.f32.mrb[0].mxu0
        %v1411 = vadd.f32 0.0, %v1410
        %v1412 = vpop.f32.mrb[0].mxu0
        %v1413 = vpop.f32.mrb[0].mxu0
        %v1414 = vadd.f32 0.0, %v1413
        %v1415 = vpop.f32.mrb[0].mxu0
        %1416 = vmatprep.mubr.bf16.mxu0 0
        %1417 = vmatmul.mubr.bf16.gmra.mrb[0].mxu0 %v1142
        %v1418 = vpop.f32.mrb[0].mxu0
        %v1419 = vadd.f32 0.0, %v1418
        %v1420 = vpop.f32.mrb[0].mxu0
        %v1421 = vpop.f32.mrb[0].mxu0
        %v1422 = vpop.f32.mrb[0].mxu0
        %1423 = vdwg.mxu0
        %v1424 = vpack.c.bf16 %v1182, %v1179
        %v1425 = vpack.c.bf16 %v1187, %v1187
        %v1426 = vpack.c.bf16 %v1254, %v1251
        %v1427 = vpack.c.bf16 %v1259, %v1259
        %v1428 = vpack.c.bf16 %v1342, %v1339
        %v1429 = vpack.c.bf16 %v1347, %v1347
        %v1430 = vpack.c.bf16 %v1414, %v1411
        %v1431 = vpack.c.bf16 %v1419, %v1419
        %v1432 = vpack.c.bf16 %v901, %v901
        %v1433 = vpack.c.bf16 %v965, %v965
        %v1434 = vpack.c.bf16 %v1029, %v1029
        %v1435 = vpack.c.bf16 %v1093, %v1093
        %vm1436 = vcmask 261120
        %v1438 = vsel %vm1436, %v1432, 0
        %v1441 = vsel %vm1436, %v1424, 0
        %v1444 = vsel %vm1436, %v1425, 0
        %1446 = vmatprep.subr.bf16.mxu0 0
        %1447 = vmatpush1.bf16.xpose.msra.mxu0 %v1441
        %1448 = vmatprep.subr.bf16.mxu0 0
        %1449 = vmatpush1.bf16.xpose.msra.mxu0 %v1444
        %1450 = vmatprep.subr.bf16.mxu0 0
        %1451 = vmatpush1.bf16.xpose.msra.mxu0 0
        %1452 = vmatprep.subr.bf16.mxu0 0
        %1453 = vmatpush1.bf16.xpose.msra.mxu0 0
        %1454 = vmatprep.subr.bf16.mxu0 0
        %1455 = vmatpush1.bf16.xpose.msra.mxu0 0
        %1456 = vmatprep.subr.bf16.mxu0 0
        %1457 = vmatpush1.bf16.xpose.msra.mxu0 0
        %1458 = vmatprep.subr.bf16.mxu0 0
        %1459 = vmatpush1.bf16.xpose.msra.mxu0 0
        %1460 = vmatprep.subr.bf16.mxu0 0
        %1461 = vmatpush1.bf16.xpose.msra.mxu0 0
        %1462 = vmatprep.subr.bf16.mxu0 0
        %1463 = vmatpush1.bf16.xpose.msra.mxu0 0
        %1464 = vmatprep.subr.bf16.mxu0 0
        %1465 = vmatpush1.bf16.xpose.msra.mxu0 0
        %1466 = vmatprep.subr.bf16.mxu0 0
        %1467 = vmatpush1.bf16.xpose.msra.mxu0 0
        %1468 = vmatprep.subr.bf16.mxu0 0
        %1469 = vmatpush1.bf16.xpose.msra.mxu0 0
        %1470 = vmatprep.subr.bf16.mxu0 0
        %1471 = vmatpush1.bf16.xpose.msra.mxu0 0
        %1472 = vmatprep.subr.bf16.mxu0 0
        %1473 = vmatpush1.bf16.xpose.msra.mxu0 0
        %1474 = vmatprep.subr.bf16.mxu0 0
        %1475 = vmatpush1.bf16.xpose.msra.mxu0 0
        %1476 = vmatprep.subr.bf16.mxu0 0
        %1477 = vmatpush1.bf16.xpose.msra.mxu0 0
        %1478 = vmatprep.mubr.bf16.mxu0 0
        %1479 = vmatmul.mubr.bf16.gmra.mrb[0].mxu0 %v1438
        %v1480 = vpop.f32.mrb[0].mxu0
        %v1481 = vadd.f32 0.0, %v1480
        %v1482 = vpop.f32.mrb[0].mxu0
        %v1483 = vpop.f32.mrb[0].mxu0
        %v1484 = vpop.f32.mrb[0].mxu0
        %1485 = vdwg.mxu0
        %v1487 = vsel %vm1436, %v1433, 0
        %1489 = vmatprep.subr.bf16.mxu0 0
        %1490 = vmatpush1.bf16.xpose.msra.mxu0 %v1441
        %1491 = vmatprep.subr.bf16.mxu0 0
        %1492 = vmatpush1.bf16.xpose.msra.mxu0 %v1444
        %1493 = vmatprep.subr.bf16.mxu0 0
        %1494 = vmatpush1.bf16.xpose.msra.mxu0 0
        %1495 = vmatprep.subr.bf16.mxu0 0
        %1496 = vmatpush1.bf16.xpose.msra.mxu0 0
        %1497 = vmatprep.subr.bf16.mxu0 0
        %1498 = vmatpush1.bf16.xpose.msra.mxu0 0
        %1499 = vmatprep.subr.bf16.mxu0 0
        %1500 = vmatpush1.bf16.xpose.msra.mxu0 0
        %1501 = vmatprep.subr.bf16.mxu0 0
        %1502 = vmatpush1.bf16.xpose.msra.mxu0 0
        %1503 = vmatprep.subr.bf16.mxu0 0
        %1504 = vmatpush1.bf16.xpose.msra.mxu0 0
        %1505 = vmatprep.subr.bf16.mxu0 0
        %1506 = vmatpush1.bf16.xpose.msra.mxu0 0
        %1507 = vmatprep.subr.bf16.mxu0 0
        %1508 = vmatpush1.bf16.xpose.msra.mxu0 0
        %1509 = vmatprep.subr.bf16.mxu0 0
        %1510 = vmatpush1.bf16.xpose.msra.mxu0 0
        %1511 = vmatprep.subr.bf16.mxu0 0
        %1512 = vmatpush1.bf16.xpose.msra.mxu0 0
        %1513 = vmatprep.subr.bf16.mxu0 0
        %1514 = vmatpush1.bf16.xpose.msra.mxu0 0
        %1515 = vmatprep.subr.bf16.mxu0 0
        %1516 = vmatpush1.bf16.xpose.msra.mxu0 0
        %1517 = vmatprep.subr.bf16.mxu0 0
        %1518 = vmatpush1.bf16.xpose.msra.mxu0 0
        %1519 = vmatprep.subr.bf16.mxu0 0
        %1520 = vmatpush1.bf16.xpose.msra.mxu0 0
        %1521 = vmatprep.mubr.bf16.mxu0 0
        %1522 = vmatmul.mubr.bf16.gmra.mrb[0].mxu0 %v1487
        %v1523 = vpop.f32.mrb[0].mxu0
        %v1524 = vadd.f32 0.0, %v1523
        %v1525 = vpop.f32.mrb[0].mxu0
        %v1526 = vpop.f32.mrb[0].mxu0
        %v1527 = vpop.f32.mrb[0].mxu0
        %1528 = vdwg.mxu0
        %v1530 = vsel %vm1436, %v1434, 0
        %v1533 = vsel %vm1436, %v1426, 0
        %v1536 = vsel %vm1436, %v1427, 0
        %1538 = vmatprep.subr.bf16.mxu0 0
        %1539 = vmatpush1.bf16.xpose.msra.mxu0 %v1533
        %1540 = vmatprep.subr.bf16.mxu0 0
        %1541 = vmatpush1.bf16.xpose.msra.mxu0 %v1536
        %1542 = vmatprep.subr.bf16.mxu0 0
        %1543 = vmatpush1.bf16.xpose.msra.mxu0 0
        %1544 = vmatprep.subr.bf16.mxu0 0
        %1545 = vmatpush1.bf16.xpose.msra.mxu0 0
        %1546 = vmatprep.subr.bf16.mxu0 0
        %1547 = vmatpush1.bf16.xpose.msra.mxu0 0
        %1548 = vmatprep.subr.bf16.mxu0 0
        %1549 = vmatpush1.bf16.xpose.msra.mxu0 0
        %1550 = vmatprep.subr.bf16.mxu0 0
        %1551 = vmatpush1.bf16.xpose.msra.mxu0 0
        %1552 = vmatprep.subr.bf16.mxu0 0
        %1553 = vmatpush1.bf16.xpose.msra.mxu0 0
        %1554 = vmatprep.subr.bf16.mxu0 0
        %1555 = vmatpush1.bf16.xpose.msra.mxu0 0
        %1556 = vmatprep.subr.bf16.mxu0 0
        %1557 = vmatpush1.bf16.xpose.msra.mxu0 0
        %1558 = vmatprep.subr.bf16.mxu0 0
        %1559 = vmatpush1.bf16.xpose.msra.mxu0 0
        %1560 = vmatprep.subr.bf16.mxu0 0
        %1561 = vmatpush1.bf16.xpose.msra.mxu0 0
        %1562 = vmatprep.subr.bf16.mxu0 0
        %1563 = vmatpush1.bf16.xpose.msra.mxu0 0
        %1564 = vmatprep.subr.bf16.mxu0 0
        %1565 = vmatpush1.bf16.xpose.msra.mxu0 0
        %1566 = vmatprep.subr.bf16.mxu0 0
        %1567 = vmatpush1.bf16.xpose.msra.mxu0 0
        %1568 = vmatprep.subr.bf16.mxu0 0
        %1569 = vmatpush1.bf16.xpose.msra.mxu0 0
        %1570 = vmatprep.mubr.bf16.mxu0 0
        %1571 = vmatmul.mubr.bf16.gmra.mrb[0].mxu0 %v1530
        %v1572 = vpop.f32.mrb[0].mxu0
        %v1573 = vadd.f32 0.0, %v1572
        %v1574 = vpop.f32.mrb[0].mxu0
        %v1575 = vpop.f32.mrb[0].mxu0
        %v1576 = vpop.f32.mrb[0].mxu0
        %1577 = vdwg.mxu0
        %v1579 = vsel %vm1436, %v1435, 0
        %1581 = vmatprep.subr.bf16.mxu0 0
        %1582 = vmatpush1.bf16.xpose.msra.mxu0 %v1533
        %1583 = vmatprep.subr.bf16.mxu0 0
        %1584 = vmatpush1.bf16.xpose.msra.mxu0 %v1536
        %1585 = vmatprep.subr.bf16.mxu0 0
        %1586 = vmatpush1.bf16.xpose.msra.mxu0 0
        %1587 = vmatprep.subr.bf16.mxu0 0
        %1588 = vmatpush1.bf16.xpose.msra.mxu0 0
        %1589 = vmatprep.subr.bf16.mxu0 0
        %1590 = vmatpush1.bf16.xpose.msra.mxu0 0
        %1591 = vmatprep.subr.bf16.mxu0 0
        %1592 = vmatpush1.bf16.xpose.msra.mxu0 0
        %1593 = vmatprep.subr.bf16.mxu0 0
        %1594 = vmatpush1.bf16.xpose.msra.mxu0 0
        %1595 = vmatprep.subr.bf16.mxu0 0
        %1596 = vmatpush1.bf16.xpose.msra.mxu0 0
        %1597 = vmatprep.subr.bf16.mxu0 0
        %1598 = vmatpush1.bf16.xpose.msra.mxu0 0
        %1599 = vmatprep.subr.bf16.mxu0 0
        %1600 = vmatpush1.bf16.xpose.msra.mxu0 0
        %1601 = vmatprep.subr.bf16.mxu0 0
        %1602 = vmatpush1.bf16.xpose.msra.mxu0 0
        %1603 = vmatprep.subr.bf16.mxu0 0
        %1604 = vmatpush1.bf16.xpose.msra.mxu0 0
        %1605 = vmatprep.subr.bf16.mxu0 0
        %1606 = vmatpush1.bf16.xpose.msra.mxu0 0
        %1607 = vmatprep.subr.bf16.mxu0 0
        %1608 = vmatpush1.bf16.xpose.msra.mxu0 0
        %1609 = vmatprep.subr.bf16.mxu0 0
        %1610 = vmatpush1.bf16.xpose.msra.mxu0 0
        %1611 = vmatprep.subr.bf16.mxu0 0
        %1612 = vmatpush1.bf16.xpose.msra.mxu0 0
        %1613 = vmatprep.mubr.bf16.mxu0 0
        %1614 = vmatmul.mubr.bf16.gmra.mrb[0].mxu0 %v1579
        %v1615 = vpop.f32.mrb[0].mxu0
        %v1616 = vadd.f32 0.0, %v1615
        %v1617 = vpop.f32.mrb[0].mxu0
        %v1618 = vpop.f32.mrb[0].mxu0
        %v1619 = vpop.f32.mrb[0].mxu0
        %1620 = vdwg.mxu0
        %v1621 = vmul.f32 %v1481, 0.17677669
        %v1622 = vmul.f32 %v1524, 0.17677669
        %v1623 = vmul.f32 %v1573, 0.17677669
        %v1624 = vmul.f32 %v1616, 0.17677669
        %v1626 = vlaneseq
        %v1627 = vshrl.u32 %v1626, 7
        %v1628 = vsub.s32 0, %v1627
        %v1629 = vrot.slane %v753, %v1628
        %v1631 = vadd.f32 %v1621, %v1629
        %v1632 = vadd.f32 %v1622, %v1629
        %v1633 = vadd.f32 %v1623, %v1629
        %v1634 = vadd.f32 %v1624, %v1629
        %vm1635 = vcmask 195584
        %v1636 = vsel %vm1635, %v1631, -inf
        %1637 = vmax.xlane.f32.xlu0 %v1636
        %v1638 = vpop.xlane.xlu0 %1637
        %v1639 = vsel %vm1635, %v1632, -inf
        %1640 = vmax.xlane.f32.xlu0 %v1639
        %v1641 = vpop.xlane.xlu0 %1640
        %v1642 = vsel %vm1635, %v1633, -inf
        %1643 = vmax.xlane.f32.xlu0 %v1642
        %v1644 = vpop.xlane.xlu0 %1643
        %v1645 = vsel %vm1635, %v1634, -inf
        %1646 = vmax.xlane.f32.xlu0 %v1645
        %v1647 = vpop.xlane.xlu0 %1646
        %v1648 = vsub.f32 %v1631, %v1638
        %v1649 = vsub.f32 %v1632, %v1641
        %v1650 = vsub.f32 %v1633, %v1644
        %v1651 = vsub.f32 %v1634, %v1647
        %v1652 = vmul.f32 %v1648, 1.442695
        %v1653 = vpow.pop %v1652
        %v1654 = vmul.f32 %v1649, 1.442695
        %v1655 = vpow.pop %v1654
        %v1656 = vmul.f32 %v1650, 1.442695
        %v1657 = vpow.pop %v1656
        %v1658 = vmul.f32 %v1651, 1.442695
        %v1659 = vpow.pop %v1658
        %v1660 = vsel %vm1635, %v1653, 0.0
        %1661 = vadd.xlane.f32.xlu0 %v1660
        %v1662 = vpop.xlane.xlu0 %1661
        %v1663 = vsel %vm1635, %v1655, 0.0
        %1664 = vadd.xlane.f32.xlu0 %v1663
        %v1665 = vpop.xlane.xlu0 %1664
        %v1666 = vsel %vm1635, %v1657, 0.0
        %1667 = vadd.xlane.f32.xlu0 %v1666
        %v1668 = vpop.xlane.xlu0 %1667
        %v1669 = vsel %vm1635, %v1659, 0.0
        %1670 = vadd.xlane.f32.xlu0 %v1669
        %v1671 = vpop.xlane.xlu0 %1670
        %v1672 = vrcp.pop %v1662
        %v1673 = vrcp.pop %v1665
        %v1674 = vrcp.pop %v1668
        %v1675 = vrcp.pop %v1671
        %v1676 = vmul.f32 %v1653, %v1672
        %v1677 = vmul.f32 %v1655, %v1673
        %v1678 = vmul.f32 %v1657, %v1674
        %v1679 = vmul.f32 %v1659, %v1675
        %v1680 = vpack.c.bf16 %v1676, %v1676
        %v1681 = vpack.c.bf16 %v1677, %v1677
        %v1682 = vpack.c.bf16 %v1678, %v1678
        %v1683 = vpack.c.bf16 %v1679, %v1679
        %v1685 = vsel %vm1635, %v1680, 0
        %vm1687 = vcmask 1043456
        %v1689 = vsel %vm1687, %v1429, 0
        %1691 = vmatprep.subr.bf16.mxu0 0
        %1692 = vmatpush1.bf16.msra.mxu0 %v1428
        %1693 = vmatprep.subr.bf16.mxu0 0
        %1694 = vmatpush1.bf16.msra.mxu0 %v1689
        %1695 = vmatprep.subr.bf16.mxu0 0
        %1696 = vmatpush1.bf16.msra.mxu0 0
        %1697 = vmatprep.subr.bf16.mxu0 0
        %1698 = vmatpush1.bf16.msra.mxu0 0
        %1699 = vmatprep.subr.bf16.mxu0 0
        %1700 = vmatpush1.bf16.msra.mxu0 0
        %1701 = vmatprep.subr.bf16.mxu0 0
        %1702 = vmatpush1.bf16.msra.mxu0 0
        %1703 = vmatprep.subr.bf16.mxu0 0
        %1704 = vmatpush1.bf16.msra.mxu0 0
        %1705 = vmatprep.subr.bf16.mxu0 0
        %1706 = vmatpush1.bf16.msra.mxu0 0
        %1707 = vmatprep.subr.bf16.mxu0 0
        %1708 = vmatpush1.bf16.msra.mxu0 0
        %1709 = vmatprep.subr.bf16.mxu0 0
        %1710 = vmatpush1.bf16.msra.mxu0 0
        %1711 = vmatprep.subr.bf16.mxu0 0
        %1712 = vmatpush1.bf16.msra.mxu0 0
        %1713 = vmatprep.subr.bf16.mxu0 0
        %1714 = vmatpush1.bf16.msra.mxu0 0
        %1715 = vmatprep.subr.bf16.mxu0 0
        %1716 = vmatpush1.bf16.msra.mxu0 0
        %1717 = vmatprep.subr.bf16.mxu0 0
        %1718 = vmatpush1.bf16.msra.mxu0 0
        %1719 = vmatprep.subr.bf16.mxu0 0
        %1720 = vmatpush1.bf16.msra.mxu0 0
        %1721 = vmatprep.subr.bf16.mxu0 0
        %1722 = vmatpush1.bf16.msra.mxu0 0
        %1723 = vmatprep.mubr.bf16.mxu0 0
        %1724 = vmatmul.mubr.bf16.gmra.mrb[0].mxu0 %v1685
        %v1725 = vpop.f32.mrb[0].mxu0
        %v1726 = vadd.f32 0.0, %v1725
        %v1727 = vpop.f32.mrb[0].mxu0
        %v1728 = vpop.f32.mrb[0].mxu0
        %v1729 = vpop.f32.mrb[0].mxu0
        %1730 = vdwg.mxu0
        %v1732 = vsel %vm1635, %v1681, 0
        %1734 = vmatprep.subr.bf16.mxu0 0
        %1735 = vmatpush1.bf16.msra.mxu0 %v1428
        %1736 = vmatprep.subr.bf16.mxu0 0
        %1737 = vmatpush1.bf16.msra.mxu0 %v1689
        %1738 = vmatprep.subr.bf16.mxu0 0
        %1739 = vmatpush1.bf16.msra.mxu0 0
        %1740 = vmatprep.subr.bf16.mxu0 0
        %1741 = vmatpush1.bf16.msra.mxu0 0
        %1742 = vmatprep.subr.bf16.mxu0 0
        %1743 = vmatpush1.bf16.msra.mxu0 0
        %1744 = vmatprep.subr.bf16.mxu0 0
        %1745 = vmatpush1.bf16.msra.mxu0 0
        %1746 = vmatprep.subr.bf16.mxu0 0
        %1747 = vmatpush1.bf16.msra.mxu0 0
        %1748 = vmatprep.subr.bf16.mxu0 0
        %1749 = vmatpush1.bf16.msra.mxu0 0
        %1750 = vmatprep.subr.bf16.mxu0 0
        %1751 = vmatpush1.bf16.msra.mxu0 0
        %1752 = vmatprep.subr.bf16.mxu0 0
        %1753 = vmatpush1.bf16.msra.mxu0 0
        %1754 = vmatprep.subr.bf16.mxu0 0
        %1755 = vmatpush1.bf16.msra.mxu0 0
        %1756 = vmatprep.subr.bf16.mxu0 0
        %1757 = vmatpush1.bf16.msra.mxu0 0
        %1758 = vmatprep.subr.bf16.mxu0 0
        %1759 = vmatpush1.bf16.msra.mxu0 0
        %1760 = vmatprep.subr.bf16.mxu0 0
        %1761 = vmatpush1.bf16.msra.mxu0 0
        %1762 = vmatprep.subr.bf16.mxu0 0
        %1763 = vmatpush1.bf16.msra.mxu0 0
        %1764 = vmatprep.subr.bf16.mxu0 0
        %1765 = vmatpush1.bf16.msra.mxu0 0
        %1766 = vmatprep.mubr.bf16.mxu0 0
        %1767 = vmatmul.mubr.bf16.gmra.mrb[0].mxu0 %v1732
        %v1768 = vpop.f32.mrb[0].mxu0
        %v1769 = vadd.f32 0.0, %v1768
        %v1770 = vpop.f32.mrb[0].mxu0
        %v1771 = vpop.f32.mrb[0].mxu0
        %v1772 = vpop.f32.mrb[0].mxu0
        %1773 = vdwg.mxu0
        %v1775 = vsel %vm1635, %v1682, 0
        %v1778 = vsel %vm1687, %v1431, 0
        %1780 = vmatprep.subr.bf16.mxu0 0
        %1781 = vmatpush1.bf16.msra.mxu0 %v1430
        %1782 = vmatprep.subr.bf16.mxu0 0
        %1783 = vmatpush1.bf16.msra.mxu0 %v1778
        %1784 = vmatprep.subr.bf16.mxu0 0
        %1785 = vmatpush1.bf16.msra.mxu0 0
        %1786 = vmatprep.subr.bf16.mxu0 0
        %1787 = vmatpush1.bf16.msra.mxu0 0
        %1788 = vmatprep.subr.bf16.mxu0 0
        %1789 = vmatpush1.bf16.msra.mxu0 0
        %1790 = vmatprep.subr.bf16.mxu0 0
        %1791 = vmatpush1.bf16.msra.mxu0 0
        %1792 = vmatprep.subr.bf16.mxu0 0
        %1793 = vmatpush1.bf16.msra.mxu0 0
        %1794 = vmatprep.subr.bf16.mxu0 0
        %1795 = vmatpush1.bf16.msra.mxu0 0
        %1796 = vmatprep.subr.bf16.mxu0 0
        %1797 = vmatpush1.bf16.msra.mxu0 0
        %1798 = vmatprep.subr.bf16.mxu0 0
        %1799 = vmatpush1.bf16.msra.mxu0 0
        %1800 = vmatprep.subr.bf16.mxu0 0
        %1801 = vmatpush1.bf16.msra.mxu0 0
        %1802 = vmatprep.subr.bf16.mxu0 0
        %1803 = vmatpush1.bf16.msra.mxu0 0
        %1804 = vmatprep.subr.bf16.mxu0 0
        %1805 = vmatpush1.bf16.msra.mxu0 0
        %1806 = vmatprep.subr.bf16.mxu0 0
        %1807 = vmatpush1.bf16.msra.mxu0 0
        %1808 = vmatprep.subr.bf16.mxu0 0
        %1809 = vmatpush1.bf16.msra.mxu0 0
        %1810 = vmatprep.subr.bf16.mxu0 0
        %1811 = vmatpush1.bf16.msra.mxu0 0
        %1812 = vmatprep.mubr.bf16.mxu0 0
        %1813 = vmatmul.mubr.bf16.gmra.mrb[0].mxu0 %v1775
        %v1814 = vpop.f32.mrb[0].mxu0
        %v1815 = vadd.f32 0.0, %v1814
        %v1816 = vpop.f32.mrb[0].mxu0
        %v1817 = vpop.f32.mrb[0].mxu0
        %v1818 = vpop.f32.mrb[0].mxu0
        %1819 = vdwg.mxu0
        %v1821 = vsel %vm1635, %v1683, 0
        %1823 = vmatprep.subr.bf16.mxu0 0
        %1824 = vmatpush1.bf16.msra.mxu0 %v1430
        %1825 = vmatprep.subr.bf16.mxu0 0
        %1826 = vmatpush1.bf16.msra.mxu0 %v1778
        %1827 = vmatprep.subr.bf16.mxu0 0
        %1828 = vmatpush1.bf16.msra.mxu0 0
        %1829 = vmatprep.subr.bf16.mxu0 0
        %1830 = vmatpush1.bf16.msra.mxu0 0
        %1831 = vmatprep.subr.bf16.mxu0 0
        %1832 = vmatpush1.bf16.msra.mxu0 0
        %1833 = vmatprep.subr.bf16.mxu0 0
        %1834 = vmatpush1.bf16.msra.mxu0 0
        %1835 = vmatprep.subr.bf16.mxu0 0
        %1836 = vmatpush1.bf16.msra.mxu0 0
        %1837 = vmatprep.subr.bf16.mxu0 0
        %1838 = vmatpush1.bf16.msra.mxu0 0
        %1839 = vmatprep.subr.bf16.mxu0 0
        %1840 = vmatpush1.bf16.msra.mxu0 0
        %1841 = vmatprep.subr.bf16.mxu0 0
        %1842 = vmatpush1.bf16.msra.mxu0 0
        %1843 = vmatprep.subr.bf16.mxu0 0
        %1844 = vmatpush1.bf16.msra.mxu0 0
        %1845 = vmatprep.subr.bf16.mxu0 0
        %1846 = vmatpush1.bf16.msra.mxu0 0
        %1847 = vmatprep.subr.bf16.mxu0 0
        %1848 = vmatpush1.bf16.msra.mxu0 0
        %1849 = vmatprep.subr.bf16.mxu0 0
        %1850 = vmatpush1.bf16.msra.mxu0 0
        %1851 = vmatprep.subr.bf16.mxu0 0
        %1852 = vmatpush1.bf16.msra.mxu0 0
        %1853 = vmatprep.subr.bf16.mxu0 0
        %1854 = vmatpush1.bf16.msra.mxu0 0
        %1855 = vmatprep.mubr.bf16.mxu0 0
        %1856 = vmatmul.mubr.bf16.gmra.mrb[0].mxu0 %v1821
        %v1857 = vpop.f32.mrb[0].mxu0
        %v1858 = vadd.f32 0.0, %v1857
        %v1859 = vpop.f32.mrb[0].mxu0
        %v1860 = vpop.f32.mrb[0].mxu0
        %v1861 = vpop.f32.mrb[0].mxu0
        %1862 = vdwg.mxu0
        %v1863 = vpack.c.bf16 %v1726, %v1726
        %v1864 = vpack.c.bf16 %v1769, %v1769
        %v1865 = vpack.c.bf16 %v1815, %v1815
        %v1866 = vpack.c.bf16 %v1858, %v1858
        %v1867 = vld [vmem:[%s8] sm:$0xf]
        %v1868 = vld [vmem:[%s8 + $0x4] sm:$0xf]
        %v1869 = vld [vmem:[%s8 + $0x8] sm:$0xf]
        %v1870 = vld [vmem:[%s8 + $0xc] sm:$0xf]
        %v1871 = vld [vmem:[%s8 + $0x10] sm:$0xf]
        %v1872 = vld [vmem:[%s8 + $0x14] sm:$0xf]
        %v1873 = vld [vmem:[%s8 + $0x18] sm:$0xf]
        %v1874 = vld [vmem:[%s8 + $0x1c] sm:$0xf]
        %v1875 = vld [vmem:[%s8 + $0x20] sm:$0xf]
        %v1876 = vld [vmem:[%s8 + $0x24] sm:$0xf]
        %v1877 = vld [vmem:[%s8 + $0x28] sm:$0xf]
        %v1878 = vld [vmem:[%s8 + $0x2c] sm:$0xf]
        %v1879 = vld [vmem:[%s8 + $0x30] sm:$0xf]
        %v1880 = vld [vmem:[%s8 + $0x34] sm:$0xf]
        %v1881 = vld [vmem:[%s8 + $0x38] sm:$0xf]
        %v1882 = vld [vmem:[%s8 + $0x3c] sm:$0xf]
        %v1887 = vunpack.c.l.b16 %v1867
        %v1888 = vunpack.c.l.b16 %v1868
        %v1889 = vunpack.c.l.b16 %v1869
        %v1890 = vunpack.c.l.b16 %v1870
        %v1891 = vpack.c.b16 %v1888, %v1887
        %v1892 = vpack.c.b16 %v1890, %v1889
        %v1896 = vsel %vm1436, %v1863, 0
        %1898 = vmatprep.subr.bf16.mxu0 0
        %1899 = vmatpush1.bf16.msra.mxu0 %v1891
        %1900 = vmatprep.subr.bf16.mxu0 0
        %1901 = vmatpush1.bf16.msra.mxu0 %v1892
        %1902 = vmatprep.subr.bf16.mxu0 0
        %1903 = vmatpush1.bf16.msra.mxu0 0
        %1904 = vmatprep.subr.bf16.mxu0 0
        %1905 = vmatpush1.bf16.msra.mxu0 0
        %1906 = vmatprep.subr.bf16.mxu0 0
        %1907 = vmatpush1.bf16.msra.mxu0 0
        %1908 = vmatprep.subr.bf16.mxu0 0
        %1909 = vmatpush1.bf16.msra.mxu0 0
        %1910 = vmatprep.subr.bf16.mxu0 0
        %1911 = vmatpush1.bf16.msra.mxu0 0
        %1912 = vmatprep.subr.bf16.mxu0 0
        %1913 = vmatpush1.bf16.msra.mxu0 0
        %1914 = vmatprep.subr.bf16.mxu0 0
        %1915 = vmatpush1.bf16.msra.mxu0 0
        %1916 = vmatprep.subr.bf16.mxu0 0
        %1917 = vmatpush1.bf16.msra.mxu0 0
        %1918 = vmatprep.subr.bf16.mxu0 0
        %1919 = vmatpush1.bf16.msra.mxu0 0
        %1920 = vmatprep.subr.bf16.mxu0 0
        %1921 = vmatpush1.bf16.msra.mxu0 0
        %1922 = vmatprep.subr.bf16.mxu0 0
        %1923 = vmatpush1.bf16.msra.mxu0 0
        %1924 = vmatprep.subr.bf16.mxu0 0
        %1925 = vmatpush1.bf16.msra.mxu0 0
        %1926 = vmatprep.subr.bf16.mxu0 0
        %1927 = vmatpush1.bf16.msra.mxu0 0
        %1928 = vmatprep.subr.bf16.mxu0 0
        %1929 = vmatpush1.bf16.msra.mxu0 0
        %1930 = vmatprep.mubr.bf16.mxu0 0
        %1931 = vmatmul.mubr.bf16.gmra.mrb[0].mxu0 %v1896
        %v1932 = vpop.f32.mrb[0].mxu0
        %v1933 = vadd.f32 0.0, %v1932
        %v1934 = vpop.f32.mrb[0].mxu0
        %v1935 = vpop.f32.mrb[0].mxu0
        %v1936 = vpop.f32.mrb[0].mxu0
        %1937 = vdwg.mxu0
        %v1942 = vunpack.c.l.b16 %v1871
        %v1943 = vunpack.c.l.b16 %v1872
        %v1944 = vunpack.c.l.b16 %v1873
        %v1945 = vunpack.c.l.b16 %v1874
        %v1946 = vpack.c.b16 %v1943, %v1942
        %v1947 = vpack.c.b16 %v1945, %v1944
        %v1951 = vsel %vm1436, %v1864, 0
        %1953 = vmatprep.subr.bf16.mxu0 0
        %1954 = vmatpush1.bf16.msra.mxu0 %v1946
        %1955 = vmatprep.subr.bf16.mxu0 0
        %1956 = vmatpush1.bf16.msra.mxu0 %v1947
        %1957 = vmatprep.subr.bf16.mxu0 0
        %1958 = vmatpush1.bf16.msra.mxu0 0
        %1959 = vmatprep.subr.bf16.mxu0 0
        %1960 = vmatpush1.bf16.msra.mxu0 0
        %1961 = vmatprep.subr.bf16.mxu0 0
        %1962 = vmatpush1.bf16.msra.mxu0 0
        %1963 = vmatprep.subr.bf16.mxu0 0
        %1964 = vmatpush1.bf16.msra.mxu0 0
        %1965 = vmatprep.subr.bf16.mxu0 0
        %1966 = vmatpush1.bf16.msra.mxu0 0
        %1967 = vmatprep.subr.bf16.mxu0 0
        %1968 = vmatpush1.bf16.msra.mxu0 0
        %1969 = vmatprep.subr.bf16.mxu0 0
        %1970 = vmatpush1.bf16.msra.mxu0 0
        %1971 = vmatprep.subr.bf16.mxu0 0
        %1972 = vmatpush1.bf16.msra.mxu0 0
        %1973 = vmatprep.subr.bf16.mxu0 0
        %1974 = vmatpush1.bf16.msra.mxu0 0
        %1975 = vmatprep.subr.bf16.mxu0 0
        %1976 = vmatpush1.bf16.msra.mxu0 0
        %1977 = vmatprep.subr.bf16.mxu0 0
        %1978 = vmatpush1.bf16.msra.mxu0 0
        %1979 = vmatprep.subr.bf16.mxu0 0
        %1980 = vmatpush1.bf16.msra.mxu0 0
        %1981 = vmatprep.subr.bf16.mxu0 0
        %1982 = vmatpush1.bf16.msra.mxu0 0
        %1983 = vmatprep.subr.bf16.mxu0 0
        %1984 = vmatpush1.bf16.msra.mxu0 0
        %1985 = vmatprep.mubr.bf16.mxu0 0
        %1986 = vmatmul.mubr.bf16.gmra.mrb[0].mxu0 %v1951
        %v1987 = vpop.f32.mrb[0].mxu0
        %v1988 = vadd.f32 0.0, %v1987
        %v1989 = vpop.f32.mrb[0].mxu0
        %v1990 = vpop.f32.mrb[0].mxu0
        %v1991 = vpop.f32.mrb[0].mxu0
        %1992 = vdwg.mxu0
        %v1997 = vunpack.c.l.b16 %v1875
        %v1998 = vunpack.c.l.b16 %v1876
        %v1999 = vunpack.c.l.b16 %v1877
        %v2000 = vunpack.c.l.b16 %v1878
        %v2001 = vpack.c.b16 %v1998, %v1997
        %v2002 = vpack.c.b16 %v2000, %v1999
        %v2006 = vsel %vm1436, %v1865, 0
        %2008 = vmatprep.subr.bf16.mxu0 0
        %2009 = vmatpush1.bf16.msra.mxu0 %v2001
        %2010 = vmatprep.subr.bf16.mxu0 0
        %2011 = vmatpush1.bf16.msra.mxu0 %v2002
        %2012 = vmatprep.subr.bf16.mxu0 0
        %2013 = vmatpush1.bf16.msra.mxu0 0
        %2014 = vmatprep.subr.bf16.mxu0 0
        %2015 = vmatpush1.bf16.msra.mxu0 0
        %2016 = vmatprep.subr.bf16.mxu0 0
        %2017 = vmatpush1.bf16.msra.mxu0 0
        %2018 = vmatprep.subr.bf16.mxu0 0
        %2019 = vmatpush1.bf16.msra.mxu0 0
        %2020 = vmatprep.subr.bf16.mxu0 0
        %2021 = vmatpush1.bf16.msra.mxu0 0
        %2022 = vmatprep.subr.bf16.mxu0 0
        %2023 = vmatpush1.bf16.msra.mxu0 0
        %2024 = vmatprep.subr.bf16.mxu0 0
        %2025 = vmatpush1.bf16.msra.mxu0 0
        %2026 = vmatprep.subr.bf16.mxu0 0
        %2027 = vmatpush1.bf16.msra.mxu0 0
        %2028 = vmatprep.subr.bf16.mxu0 0
        %2029 = vmatpush1.bf16.msra.mxu0 0
        %2030 = vmatprep.subr.bf16.mxu0 0
        %2031 = vmatpush1.bf16.msra.mxu0 0
        %2032 = vmatprep.subr.bf16.mxu0 0
        %2033 = vmatpush1.bf16.msra.mxu0 0
        %2034 = vmatprep.subr.bf16.mxu0 0
        %2035 = vmatpush1.bf16.msra.mxu0 0
        %2036 = vmatprep.subr.bf16.mxu0 0
        %2037 = vmatpush1.bf16.msra.mxu0 0
        %2038 = vmatprep.subr.bf16.mxu0 0
        %2039 = vmatpush1.bf16.msra.mxu0 0
        %2040 = vmatprep.mubr.bf16.mxu0 0
        %2041 = vmatmul.mubr.bf16.gmra.mrb[0].mxu0 %v2006
        %v2042 = vpop.f32.mrb[0].mxu0
        %v2043 = vadd.f32 0.0, %v2042
        %v2044 = vpop.f32.mrb[0].mxu0
        %v2045 = vpop.f32.mrb[0].mxu0
        %v2046 = vpop.f32.mrb[0].mxu0
        %2047 = vdwg.mxu0
        %v2052 = vunpack.c.l.b16 %v1879
        %v2053 = vunpack.c.l.b16 %v1880
        %v2054 = vunpack.c.l.b16 %v1881
        %v2055 = vunpack.c.l.b16 %v1882
        %v2056 = vpack.c.b16 %v2053, %v2052
        %v2057 = vpack.c.b16 %v2055, %v2054
        %v2061 = vsel %vm1436, %v1866, 0
        %2063 = vmatprep.subr.bf16.mxu0 0
        %2064 = vmatpush1.bf16.msra.mxu0 %v2056
        %2065 = vmatprep.subr.bf16.mxu0 0
        %2066 = vmatpush1.bf16.msra.mxu0 %v2057
        %2067 = vmatprep.subr.bf16.mxu0 0
        %2068 = vmatpush1.bf16.msra.mxu0 0
        %2069 = vmatprep.subr.bf16.mxu0 0
        %2070 = vmatpush1.bf16.msra.mxu0 0
        %2071 = vmatprep.subr.bf16.mxu0 0
        %2072 = vmatpush1.bf16.msra.mxu0 0
        %2073 = vmatprep.subr.bf16.mxu0 0
        %2074 = vmatpush1.bf16.msra.mxu0 0
        %2075 = vmatprep.subr.bf16.mxu0 0
        %2076 = vmatpush1.bf16.msra.mxu0 0
        %2077 = vmatprep.subr.bf16.mxu0 0
        %2078 = vmatpush1.bf16.msra.mxu0 0
        %2079 = vmatprep.subr.bf16.mxu0 0
        %2080 = vmatpush1.bf16.msra.mxu0 0
        %2081 = vmatprep.subr.bf16.mxu0 0
        %2082 = vmatpush1.bf16.msra.mxu0 0
        %2083 = vmatprep.subr.bf16.mxu0 0
        %2084 = vmatpush1.bf16.msra.mxu0 0
        %2085 = vmatprep.subr.bf16.mxu0 0
        %2086 = vmatpush1.bf16.msra.mxu0 0
        %2087 = vmatprep.subr.bf16.mxu0 0
        %2088 = vmatpush1.bf16.msra.mxu0 0
        %2089 = vmatprep.subr.bf16.mxu0 0
        %2090 = vmatpush1.bf16.msra.mxu0 0
        %2091 = vmatprep.subr.bf16.mxu0 0
        %2092 = vmatpush1.bf16.msra.mxu0 0
        %2093 = vmatprep.subr.bf16.mxu0 0
        %2094 = vmatpush1.bf16.msra.mxu0 0
        %2095 = vmatprep.mubr.bf16.mxu0 0
        %2096 = vmatmul.mubr.bf16.gmra.mrb[0].mxu0 %v2061
        %v2097 = vpop.f32.mrb[0].mxu0
        %v2098 = vadd.f32 0.0, %v2097
        %v2099 = vpop.f32.mrb[0].mxu0
        %v2100 = vpop.f32.mrb[0].mxu0
        %v2101 = vpop.f32.mrb[0].mxu0
        %2102 = vdwg.mxu0
        %v2103 = vsel %vm757, %v1933, 0.0
        %v2104 = vsel %vm757, %v1988, 0.0
        %v2105 = vadd.f32 %v2103, %v2104
        %v2106 = vsel %vm757, %v2043, 0.0
        %v2107 = vadd.f32 %v2105, %v2106
        %v2108 = vsel %vm757, %v2098, 0.0
        %v2109 = vadd.f32 %v2107, %v2108
        %v2110 = vadd.f32 %v754, %v2109
        %v2111 = vld [vmem:[%s9] sm:$0x1]
        %v2112 = vmul.f32 %v2110, %v2110
        %v2113 = vsel %vm757, %v2112, 0.0
        %2114 = vadd.xlane.f32.xlu0 %v2113
        %v2115 = vpop.xlane.xlu0 %2114
        %v2116 = vmul.f32 %v2115, %v761
        %v2117 = vadd.f32 %v2116, 1e-06
        %v2118 = vrsqrt.pop %v2117
        %v2119 = vmul.f32 %v2110, %v2118
        %v2121 = vlaneseq
        %v2122 = vshrl.u32 %v2121, 7
        %v2123 = vsub.s32 0, %v2122
        %v2124 = vrot.slane %v2111, %v2123
        %v2126 = vmul.f32 %v2119, %v2124
        %v2127 = vpack.c.bf16 %v2126, %v2126
        %v2128 = vld [vmem:[%s10] sm:$0xff]
        %v2129 = vld [vmem:[%s10 + $0x8] sm:$0xff]
        %v2130 = vld [vmem:[%s10 + $0x10] sm:$0xff]
        %v2131 = vld [vmem:[%s10 + $0x18] sm:$0xff]
        %v2132 = vld [vmem:[%s10 + $0x20] sm:$0xff]
        %v2133 = vld [vmem:[%s10 + $0x28] sm:$0xff]
        %v2134 = vld [vmem:[%s10 + $0x30] sm:$0xff]
        %v2135 = vld [vmem:[%s10 + $0x38] sm:$0xff]
        %v2144 = vunpack.c.l.b16 %v2128
        %v2145 = vunpack.c.h.b16 %v2128
        %v2146 = vunpack.c.l.b16 %v2129
        %v2147 = vunpack.c.h.b16 %v2129
        %v2148 = vunpack.c.l.b16 %v2130
        %v2149 = vunpack.c.h.b16 %v2130
        %v2150 = vunpack.c.l.b16 %v2131
        %v2151 = vunpack.c.h.b16 %v2131
        %v2152 = vunpack.c.l.b16 %v2132
        %v2153 = vunpack.c.h.b16 %v2132
        %v2154 = vunpack.c.l.b16 %v2133
        %v2155 = vunpack.c.h.b16 %v2133
        %v2156 = vunpack.c.l.b16 %v2134
        %v2157 = vunpack.c.h.b16 %v2134
        %v2158 = vunpack.c.l.b16 %v2135
        %v2159 = vunpack.c.h.b16 %v2135
        %v2160 = vpack.c.b16 %v2146, %v2144
        %v2161 = vpack.c.b16 %v2147, %v2145
        %v2162 = vpack.c.b16 %v2150, %v2148
        %v2163 = vpack.c.b16 %v2151, %v2149
        %v2164 = vpack.c.b16 %v2154, %v2152
        %v2165 = vpack.c.b16 %v2155, %v2153
        %v2166 = vpack.c.b16 %v2158, %v2156
        %v2167 = vpack.c.b16 %v2159, %v2157
        %v2177 = vsel %vm757, %v2127, 0
        %2179 = vmatprep.subr.bf16.mxu0 %v2161
        %2180 = vmatpush1.bf16.msra.mxu0 %v2160
        %2181 = vmatprep.subr.bf16.mxu0 %v2163
        %2182 = vmatpush1.bf16.msra.mxu0 %v2162
        %2183 = vmatprep.subr.bf16.mxu0 %v2165
        %2184 = vmatpush1.bf16.msra.mxu0 %v2164
        %2185 = vmatprep.subr.bf16.mxu0 %v2167
        %2186 = vmatpush1.bf16.msra.mxu0 %v2166
        %2187 = vmatprep.subr.bf16.mxu0 0
        %2188 = vmatpush1.bf16.msra.mxu0 0
        %2189 = vmatprep.subr.bf16.mxu0 0
        %2190 = vmatpush1.bf16.msra.mxu0 0
        %2191 = vmatprep.subr.bf16.mxu0 0
        %2192 = vmatpush1.bf16.msra.mxu0 0
        %2193 = vmatprep.subr.bf16.mxu0 0
        %2194 = vmatpush1.bf16.msra.mxu0 0
        %2195 = vmatprep.subr.bf16.mxu0 0
        %2196 = vmatpush1.bf16.msra.mxu0 0
        %2197 = vmatprep.subr.bf16.mxu0 0
        %2198 = vmatpush1.bf16.msra.mxu0 0
        %2199 = vmatprep.subr.bf16.mxu0 0
        %2200 = vmatpush1.bf16.msra.mxu0 0
        %2201 = vmatprep.subr.bf16.mxu0 0
        %2202 = vmatpush1.bf16.msra.mxu0 0
        %2203 = vmatprep.subr.bf16.mxu0 0
        %2204 = vmatpush1.bf16.msra.mxu0 0
        %2205 = vmatprep.subr.bf16.mxu0 0
        %2206 = vmatpush1.bf16.msra.mxu0 0
        %2207 = vmatprep.subr.bf16.mxu0 0
        %2208 = vmatpush1.bf16.msra.mxu0 0
        %2209 = vmatprep.subr.bf16.mxu0 0
        %2210 = vmatpush1.bf16.msra.mxu0 0
        %2211 = vmatprep.mubr.bf16.mxu0 0
        %2212 = vmatmul.mubr.bf16.gmra.mrb[0].mxu0 %v2177
        %v2213 = vpop.f32.mrb[0].mxu0
        %v2214 = vadd.f32 0.0, %v2213
        %v2215 = vpop.f32.mrb[0].mxu0
        %v2216 = vadd.f32 0.0, %v2215
        %v2217 = vpop.f32.mrb[0].mxu0
        %v2218 = vpop.f32.mrb[0].mxu0
        %2219 = vdwg.mxu0
        %v2220 = vld [vmem:[%s11] sm:$0xff]
        %v2221 = vld [vmem:[%s11 + $0x8] sm:$0xff]
        %v2222 = vld [vmem:[%s11 + $0x10] sm:$0xff]
        %v2223 = vld [vmem:[%s11 + $0x18] sm:$0xff]
        %v2224 = vld [vmem:[%s11 + $0x20] sm:$0xff]
        %v2225 = vld [vmem:[%s11 + $0x28] sm:$0xff]
        %v2226 = vld [vmem:[%s11 + $0x30] sm:$0xff]
        %v2227 = vld [vmem:[%s11 + $0x38] sm:$0xff]
        %v2236 = vunpack.c.l.b16 %v2220
        %v2237 = vunpack.c.h.b16 %v2220
        %v2238 = vunpack.c.l.b16 %v2221
        %v2239 = vunpack.c.h.b16 %v2221
        %v2240 = vunpack.c.l.b16 %v2222
        %v2241 = vunpack.c.h.b16 %v2222
        %v2242 = vunpack.c.l.b16 %v2223
        %v2243 = vunpack.c.h.b16 %v2223
        %v2244 = vunpack.c.l.b16 %v2224
        %v2245 = vunpack.c.h.b16 %v2224
        %v2246 = vunpack.c.l.b16 %v2225
        %v2247 = vunpack.c.h.b16 %v2225
        %v2248 = vunpack.c.l.b16 %v2226
        %v2249 = vunpack.c.h.b16 %v2226
        %v2250 = vunpack.c.l.b16 %v2227
        %v2251 = vunpack.c.h.b16 %v2227
        %v2252 = vpack.c.b16 %v2238, %v2236
        %v2253 = vpack.c.b16 %v2239, %v2237
        %v2254 = vpack.c.b16 %v2242, %v2240
        %v2255 = vpack.c.b16 %v2243, %v2241
        %v2256 = vpack.c.b16 %v2246, %v2244
        %v2257 = vpack.c.b16 %v2247, %v2245
        %v2258 = vpack.c.b16 %v2250, %v2248
        %v2259 = vpack.c.b16 %v2251, %v2249
        %2268 = vmatprep.subr.bf16.mxu0 %v2253
        %2269 = vmatpush1.bf16.msra.mxu0 %v2252
        %2270 = vmatprep.subr.bf16.mxu0 %v2255
        %2271 = vmatpush1.bf16.msra.mxu0 %v2254
        %2272 = vmatprep.subr.bf16.mxu0 %v2257
        %2273 = vmatpush1.bf16.msra.mxu0 %v2256
        %2274 = vmatprep.subr.bf16.mxu0 %v2259
        %2275 = vmatpush1.bf16.msra.mxu0 %v2258
        %2276 = vmatprep.subr.bf16.mxu0 0
        %2277 = vmatpush1.bf16.msra.mxu0 0
        %2278 = vmatprep.subr.bf16.mxu0 0
        %2279 = vmatpush1.bf16.msra.mxu0 0
        %2280 = vmatprep.subr.bf16.mxu0 0
        %2281 = vmatpush1.bf16.msra.mxu0 0
        %2282 = vmatprep.subr.bf16.mxu0 0
        %2283 = vmatpush1.bf16.msra.mxu0 0
        %2284 = vmatprep.subr.bf16.mxu0 0
        %2285 = vmatpush1.bf16.msra.mxu0 0
        %2286 = vmatprep.subr.bf16.mxu0 0
        %2287 = vmatpush1.bf16.msra.mxu0 0
        %2288 = vmatprep.subr.bf16.mxu0 0
        %2289 = vmatpush1.bf16.msra.mxu0 0
        %2290 = vmatprep.subr.bf16.mxu0 0
        %2291 = vmatpush1.bf16.msra.mxu0 0
        %2292 = vmatprep.subr.bf16.mxu0 0
        %2293 = vmatpush1.bf16.msra.mxu0 0
        %2294 = vmatprep.subr.bf16.mxu0 0
        %2295 = vmatpush1.bf16.msra.mxu0 0
        %2296 = vmatprep.subr.bf16.mxu0 0
        %2297 = vmatpush1.bf16.msra.mxu0 0
        %2298 = vmatprep.subr.bf16.mxu0 0
        %2299 = vmatpush1.bf16.msra.mxu0 0
        %2300 = vmatprep.mubr.bf16.mxu0 0
        %2301 = vmatmul.mubr.bf16.gmra.mrb[0].mxu0 %v2177
        %v2302 = vpop.f32.mrb[0].mxu0
        %v2303 = vadd.f32 0.0, %v2302
        %v2304 = vpop.f32.mrb[0].mxu0
        %v2305 = vadd.f32 0.0, %v2304
        %v2306 = vpop.f32.mrb[0].mxu0
        %v2307 = vpop.f32.mrb[0].mxu0
        %2308 = vdwg.mxu0
        %v2309 = vxor.u32 %v2214, 2147483648
        %v2310 = vxor.u32 %v2216, 2147483648
        %v2311 = vmul.f32 %v2309, 1.442695
        %v2312 = vpow.pop %v2311
        %v2313 = vmul.f32 %v2310, 1.442695
        %v2314 = vpow.pop %v2313
        %v2315 = vadd.f32 %v2312, 1.0
        %v2316 = vadd.f32 %v2314, 1.0
        %v2317 = vrcp.pop %v2315
        %v2318 = vmul.f32 1.0, %v2317
        %v2319 = vrcp.pop %v2316
        %v2320 = vmul.f32 1.0, %v2319
        %v2321 = vmul.f32 %v2214, %v2318
        %v2322 = vmul.f32 %v2216, %v2320
        %v2323 = vmul.f32 %v2321, %v2303
        %v2324 = vmul.f32 %v2322, %v2305
        %v2325 = vpack.c.bf16 %v2323, %v2323
        %v2326 = vpack.c.bf16 %v2324, %v2324
        %v2327 = vld [vmem:[%s12] sm:$0xf]
        %v2328 = vld [vmem:[%s12 + $0x4] sm:$0xf]
        %v2329 = vld [vmem:[%s12 + $0x8] sm:$0xf]
        %v2330 = vld [vmem:[%s12 + $0xc] sm:$0xf]
        %v2331 = vld [vmem:[%s12 + $0x10] sm:$0xf]
        %v2332 = vld [vmem:[%s12 + $0x14] sm:$0xf]
        %v2333 = vld [vmem:[%s12 + $0x18] sm:$0xf]
        %v2334 = vld [vmem:[%s12 + $0x1c] sm:$0xf]
        %v2335 = vld [vmem:[%s12 + $0x20] sm:$0xf]
        %v2336 = vld [vmem:[%s12 + $0x24] sm:$0xf]
        %v2337 = vld [vmem:[%s12 + $0x28] sm:$0xf]
        %v2338 = vld [vmem:[%s12 + $0x2c] sm:$0xf]
        %v2339 = vld [vmem:[%s12 + $0x30] sm:$0xf]
        %v2340 = vld [vmem:[%s12 + $0x34] sm:$0xf]
        %v2341 = vld [vmem:[%s12 + $0x38] sm:$0xf]
        %v2342 = vld [vmem:[%s12 + $0x3c] sm:$0xf]
        %v2343 = vld [vmem:[%s12 + $0x40] sm:$0xf]
        %v2344 = vld [vmem:[%s12 + $0x44] sm:$0xf]
        %v2345 = vld [vmem:[%s12 + $0x48] sm:$0xf]
        %v2346 = vld [vmem:[%s12 + $0x4c] sm:$0xf]
        %v2347 = vld [vmem:[%s12 + $0x50] sm:$0xf]
        %v2348 = vld [vmem:[%s12 + $0x54] sm:$0xf]
        %v2349 = vld [vmem:[%s12 + $0x58] sm:$0xf]
        %v2350 = vld [vmem:[%s12 + $0x5c] sm:$0xf]
        %v2351 = vld [vmem:[%s12 + $0x60] sm:$0xf]
        %v2352 = vld [vmem:[%s12 + $0x64] sm:$0xf]
        %v2353 = vld [vmem:[%s12 + $0x68] sm:$0xf]
        %v2354 = vld [vmem:[%s12 + $0x6c] sm:$0xf]
        %v2355 = vld [vmem:[%s12 + $0x70] sm:$0xf]
        %v2356 = vld [vmem:[%s12 + $0x74] sm:$0xf]
        %v2357 = vld [vmem:[%s12 + $0x78] sm:$0xf]
        %v2358 = vld [vmem:[%s12 + $0x7c] sm:$0xf]
        %v2391 = vunpack.c.l.b16 %v2327
        %v2392 = vunpack.c.l.b16 %v2328
        %v2393 = vunpack.c.l.b16 %v2329
        %v2394 = vunpack.c.l.b16 %v2330
        %v2395 = vunpack.c.l.b16 %v2331
        %v2396 = vunpack.c.l.b16 %v2332
        %v2397 = vunpack.c.l.b16 %v2333
        %v2398 = vunpack.c.l.b16 %v2334
        %v2399 = vunpack.c.l.b16 %v2335
        %v2400 = vunpack.c.l.b16 %v2336
        %v2401 = vunpack.c.l.b16 %v2337
        %v2402 = vunpack.c.l.b16 %v2338
        %v2403 = vunpack.c.l.b16 %v2339
        %v2404 = vunpack.c.l.b16 %v2340
        %v2405 = vunpack.c.l.b16 %v2341
        %v2406 = vunpack.c.l.b16 %v2342
        %v2407 = vunpack.c.l.b16 %v2343
        %v2408 = vunpack.c.l.b16 %v2344
        %v2409 = vunpack.c.l.b16 %v2345
        %v2410 = vunpack.c.l.b16 %v2346
        %v2411 = vunpack.c.l.b16 %v2347
        %v2412 = vunpack.c.l.b16 %v2348
        %v2413 = vunpack.c.l.b16 %v2349
        %v2414 = vunpack.c.l.b16 %v2350
        %v2415 = vunpack.c.l.b16 %v2351
        %v2416 = vunpack.c.l.b16 %v2352
        %v2417 = vunpack.c.l.b16 %v2353
        %v2418 = vunpack.c.l.b16 %v2354
        %v2419 = vunpack.c.l.b16 %v2355
        %v2420 = vunpack.c.l.b16 %v2356
        %v2421 = vunpack.c.l.b16 %v2357
        %v2422 = vunpack.c.l.b16 %v2358
        %v2423 = vpack.c.b16 %v2392, %v2391
        %v2424 = vpack.c.b16 %v2394, %v2393
        %v2425 = vpack.c.b16 %v2396, %v2395
        %v2426 = vpack.c.b16 %v2398, %v2397
        %v2427 = vpack.c.b16 %v2400, %v2399
        %v2428 = vpack.c.b16 %v2402, %v2401
        %v2429 = vpack.c.b16 %v2404, %v2403
        %v2430 = vpack.c.b16 %v2406, %v2405
        %v2431 = vpack.c.b16 %v2408, %v2407
        %v2432 = vpack.c.b16 %v2410, %v2409
        %v2433 = vpack.c.b16 %v2412, %v2411
        %v2434 = vpack.c.b16 %v2414, %v2413
        %v2435 = vpack.c.b16 %v2416, %v2415
        %v2436 = vpack.c.b16 %v2418, %v2417
        %v2437 = vpack.c.b16 %v2420, %v2419
        %v2438 = vpack.c.b16 %v2422, %v2421
        %2455 = vmatprep.subr.bf16.mxu0 0
        %2456 = vmatpush1.bf16.msra.mxu0 %v2423
        %2457 = vmatprep.subr.bf16.mxu0 0
        %2458 = vmatpush1.bf16.msra.mxu0 %v2424
        %2459 = vmatprep.subr.bf16.mxu0 0
        %2460 = vmatpush1.bf16.msra.mxu0 %v2425
        %2461 = vmatprep.subr.bf16.mxu0 0
        %2462 = vmatpush1.bf16.msra.mxu0 %v2426
        %2463 = vmatprep.subr.bf16.mxu0 0
        %2464 = vmatpush1.bf16.msra.mxu0 %v2427
        %2465 = vmatprep.subr.bf16.mxu0 0
        %2466 = vmatpush1.bf16.msra.mxu0 %v2428
        %2467 = vmatprep.subr.bf16.mxu0 0
        %2468 = vmatpush1.bf16.msra.mxu0 %v2429
        %2469 = vmatprep.subr.bf16.mxu0 0
        %2470 = vmatpush1.bf16.msra.mxu0 %v2430
        %2471 = vmatprep.subr.bf16.mxu0 0
        %2472 = vmatpush1.bf16.msra.mxu0 %v2431
        %2473 = vmatprep.subr.bf16.mxu0 0
        %2474 = vmatpush1.bf16.msra.mxu0 %v2432
        %2475 = vmatprep.subr.bf16.mxu0 0
        %2476 = vmatpush1.bf16.msra.mxu0 %v2433
        %2477 = vmatprep.subr.bf16.mxu0 0
        %2478 = vmatpush1.bf16.msra.mxu0 %v2434
        %2479 = vmatprep.subr.bf16.mxu0 0
        %2480 = vmatpush1.bf16.msra.mxu0 %v2435
        %2481 = vmatprep.subr.bf16.mxu0 0
        %2482 = vmatpush1.bf16.msra.mxu0 %v2436
        %2483 = vmatprep.subr.bf16.mxu0 0
        %2484 = vmatpush1.bf16.msra.mxu0 %v2437
        %2485 = vmatprep.subr.bf16.mxu0 0
        %2486 = vmatpush1.bf16.msra.mxu0 %v2438
        %2487 = vmatprep.mubr.bf16.mxu0 %v2326
        %2488 = vmatmul.mubr.bf16.gmra.mrb[0].mxu0 %v2325
        %v2489 = vpop.f32.mrb[0].mxu0
        %v2490 = vadd.f32 0.0, %v2489
        %v2491 = vpop.f32.mrb[0].mxu0
        %v2492 = vpop.f32.mrb[0].mxu0
        %v2493 = vpop.f32.mrb[0].mxu0
        %2494 = vdwg.mxu0
        %v2495 = vadd.f32 %v2110, %v2490
        %v2496 = vld [vmem:[%s13] sm:$0x1]
        %v2497 = vmul.f32 %v2495, %v2495
        %v2498 = vsel %vm757, %v2497, 0.0
        %2499 = vadd.xlane.f32.xlu0 %v2498
        %v2500 = vpop.xlane.xlu0 %2499
        %v2501 = vmul.f32 %v2500, %v761
        %v2502 = vadd.f32 %v2501, 1e-06
        %v2503 = vrsqrt.pop %v2502
        %v2504 = vmul.f32 %v2495, %v2503
        %v2506 = vlaneseq
        %v2507 = vshrl.u32 %v2506, 7
        %v2508 = vsub.s32 0, %v2507
        %v2509 = vrot.slane %v2496, %v2508
        %v2511 = vmul.f32 %v2504, %v2509
        %v2512 = vld [vmem:[%s14] sm:$0x1]
        %v2514 = vlaneseq
        %v2515 = vshrl.u32 %v2514, 7
        %v2516 = vsub.s32 0, %v2515
        %v2517 = vrot.slane %v2512, %v2516
        %v2519 = vmul.f32 %v788, %v2517
        %v2520 = vmul.f32 %v789, %v2517
        %2521 = vst.msk [vmem:[#allocation2] sm:$0xff] %vm757, %v2519
        %2522 = vst.msk [vmem:[#allocation2 + $0x8] sm:$0xff] %vm757, %v2520
        %2523 = vst.msk [vmem:[#allocation2 + $0x10] sm:$0xff] %vm757, %v2511
        %v2524 = vpack.c.bf16 %v2511, %v2511
        %v2525 = vld [vmem:[#allocation2] sm:$0xff]
        %v2526 = vld [vmem:[#allocation2 + $0x8] sm:$0xff]
        %v2527 = vld [vmem:[#allocation2 + $0x10] sm:$0xff]
        %v2528 = vpack.c.bf16 %v2526, %v2525
        %v2529 = vpack.c.bf16 %v2527, %v2527
        %v2530 = vld [vmem:[%s15] sm:$0xf]
        %v2531 = vld [vmem:[%s15 + $0x4] sm:$0xf]
        %v2532 = vld [vmem:[%s15 + $0x8] sm:$0xf]
        %v2533 = vld [vmem:[%s15 + $0xc] sm:$0xf]
        %v2534 = vld [vmem:[%s15 + $0x10] sm:$0xf]
        %v2535 = vld [vmem:[%s15 + $0x14] sm:$0xf]
        %v2536 = vld [vmem:[%s15 + $0x18] sm:$0xf]
        %v2537 = vld [vmem:[%s15 + $0x1c] sm:$0xf]
        %v2538 = vld [vmem:[%s15 + $0x20] sm:$0xf]
        %v2539 = vld [vmem:[%s15 + $0x24] sm:$0xf]
        %v2540 = vld [vmem:[%s15 + $0x28] sm:$0xf]
        %v2541 = vld [vmem:[%s15 + $0x2c] sm:$0xf]
        %v2542 = vld [vmem:[%s15 + $0x30] sm:$0xf]
        %v2543 = vld [vmem:[%s15 + $0x34] sm:$0xf]
        %v2544 = vld [vmem:[%s15 + $0x38] sm:$0xf]
        %v2545 = vld [vmem:[%s15 + $0x3c] sm:$0xf]
        %v2546 = vld [vmem:[%s15 + $0x40] sm:$0xf]
        %v2547 = vld [vmem:[%s15 + $0x44] sm:$0xf]
        %v2548 = vld [vmem:[%s15 + $0x48] sm:$0xf]
        %v2549 = vld [vmem:[%s15 + $0x4c] sm:$0xf]
        %v2550 = vld [vmem:[%s15 + $0x50] sm:$0xf]
        %v2551 = vld [vmem:[%s15 + $0x54] sm:$0xf]
        %v2552 = vld [vmem:[%s15 + $0x58] sm:$0xf]
        %v2553 = vld [vmem:[%s15 + $0x5c] sm:$0xf]
        %v2554 = vld [vmem:[%s15 + $0x60] sm:$0xf]
        %v2555 = vld [vmem:[%s15 + $0x64] sm:$0xf]
        %v2556 = vld [vmem:[%s15 + $0x68] sm:$0xf]
        %v2557 = vld [vmem:[%s15 + $0x6c] sm:$0xf]
        %v2558 = vld [vmem:[%s15 + $0x70] sm:$0xf]
        %v2559 = vld [vmem:[%s15 + $0x74] sm:$0xf]
        %v2560 = vld [vmem:[%s15 + $0x78] sm:$0xf]
        %v2561 = vld [vmem:[%s15 + $0x7c] sm:$0xf]
        %v2570 = vunpack.c.l.b16 %v2530
        %v2571 = vunpack.c.l.b16 %v2531
        %v2572 = vunpack.c.l.b16 %v2532
        %v2573 = vunpack.c.l.b16 %v2533
        %v2574 = vunpack.c.l.b16 %v2534
        %v2575 = vunpack.c.l.b16 %v2535
        %v2576 = vunpack.c.l.b16 %v2536
        %v2577 = vunpack.c.l.b16 %v2537
        %v2578 = vpack.c.b16 %v2571, %v2570
        %v2579 = vpack.c.b16 %v2573, %v2572
        %v2580 = vpack.c.b16 %v2575, %v2574
        %v2581 = vpack.c.b16 %v2577, %v2576
        %v2587 = vsel %vm757, %v2524, 0
        %2589 = vmatprep.subr.bf16.mxu0 0
        %2590 = vmatpush1.bf16.msra.mxu0 %v2578
        %2591 = vmatprep.subr.bf16.mxu0 0
        %2592 = vmatpush1.bf16.msra.mxu0 %v2579
        %2593 = vmatprep.subr.bf16.mxu0 0
        %2594 = vmatpush1.bf16.msra.mxu0 %v2580
        %2595 = vmatprep.subr.bf16.mxu0 0
        %2596 = vmatpush1.bf16.msra.mxu0 %v2581
        %2597 = vmatprep.subr.bf16.mxu0 0
        %2598 = vmatpush1.bf16.msra.mxu0 0
        %2599 = vmatprep.subr.bf16.mxu0 0
        %2600 = vmatpush1.bf16.msra.mxu0 0
        %2601 = vmatprep.subr.bf16.mxu0 0
        %2602 = vmatpush1.bf16.msra.mxu0 0
        %2603 = vmatprep.subr.bf16.mxu0 0
        %2604 = vmatpush1.bf16.msra.mxu0 0
        %2605 = vmatprep.subr.bf16.mxu0 0
        %2606 = vmatpush1.bf16.msra.mxu0 0
        %2607 = vmatprep.subr.bf16.mxu0 0
        %2608 = vmatpush1.bf16.msra.mxu0 0
        %2609 = vmatprep.subr.bf16.mxu0 0
        %2610 = vmatpush1.bf16.msra.mxu0 0
        %2611 = vmatprep.subr.bf16.mxu0 0
        %2612 = vmatpush1.bf16.msra.mxu0 0
        %2613 = vmatprep.subr.bf16.mxu0 0
        %2614 = vmatpush1.bf16.msra.mxu0 0
        %2615 = vmatprep.subr.bf16.mxu0 0
        %2616 = vmatpush1.bf16.msra.mxu0 0
        %2617 = vmatprep.subr.bf16.mxu0 0
        %2618 = vmatpush1.bf16.msra.mxu0 0
        %2619 = vmatprep.subr.bf16.mxu0 0
        %2620 = vmatpush1.bf16.msra.mxu0 0
        %2621 = vmatprep.mubr.bf16.mxu0 0
        %2622 = vmatmul.mubr.bf16.gmra.mrb[0].mxu0 %v2587
        %v2623 = vpop.f32.mrb[0].mxu0
        %v2624 = vadd.f32 0.0, %v2623
        %v2625 = vpop.f32.mrb[0].mxu0
        %v2626 = vpop.f32.mrb[0].mxu0
        %v2627 = vpop.f32.mrb[0].mxu0
        %2628 = vdwg.mxu0
        %v2637 = vunpack.c.l.b16 %v2538
        %v2638 = vunpack.c.l.b16 %v2539
        %v2639 = vunpack.c.l.b16 %v2540
        %v2640 = vunpack.c.l.b16 %v2541
        %v2641 = vunpack.c.l.b16 %v2542
        %v2642 = vunpack.c.l.b16 %v2543
        %v2643 = vunpack.c.l.b16 %v2544
        %v2644 = vunpack.c.l.b16 %v2545
        %v2645 = vpack.c.b16 %v2638, %v2637
        %v2646 = vpack.c.b16 %v2640, %v2639
        %v2647 = vpack.c.b16 %v2642, %v2641
        %v2648 = vpack.c.b16 %v2644, %v2643
        %2653 = vmatprep.subr.bf16.mxu0 0
        %2654 = vmatpush1.bf16.msra.mxu0 %v2645
        %2655 = vmatprep.subr.bf16.mxu0 0
        %2656 = vmatpush1.bf16.msra.mxu0 %v2646
        %2657 = vmatprep.subr.bf16.mxu0 0
        %2658 = vmatpush1.bf16.msra.mxu0 %v2647
        %2659 = vmatprep.subr.bf16.mxu0 0
        %2660 = vmatpush1.bf16.msra.mxu0 %v2648
        %2661 = vmatprep.subr.bf16.mxu0 0
        %2662 = vmatpush1.bf16.msra.mxu0 0
        %2663 = vmatprep.subr.bf16.mxu0 0
        %2664 = vmatpush1.bf16.msra.mxu0 0
        %2665 = vmatprep.subr.bf16.mxu0 0
        %2666 = vmatpush1.bf16.msra.mxu0 0
        %2667 = vmatprep.subr.bf16.mxu0 0
        %2668 = vmatpush1.bf16.msra.mxu0 0
        %2669 = vmatprep.subr.bf16.mxu0 0
        %2670 = vmatpush1.bf16.msra.mxu0 0
        %2671 = vmatprep.subr.bf16.mxu0 0
        %2672 = vmatpush1.bf16.msra.mxu0 0
        %2673 = vmatprep.subr.bf16.mxu0 0
        %2674 = vmatpush1.bf16.msra.mxu0 0
        %2675 = vmatprep.subr.bf16.mxu0 0
        %2676 = vmatpush1.bf16.msra.mxu0 0
        %2677 = vmatprep.subr.bf16.mxu0 0
        %2678 = vmatpush1.bf16.msra.mxu0 0
        %2679 = vmatprep.subr.bf16.mxu0 0
        %2680 = vmatpush1.bf16.msra.mxu0 0
        %2681 = vmatprep.subr.bf16.mxu0 0
        %2682 = vmatpush1.bf16.msra.mxu0 0
        %2683 = vmatprep.subr.bf16.mxu0 0
        %2684 = vmatpush1.bf16.msra.mxu0 0
        %2685 = vmatprep.mubr.bf16.mxu0 0
        %2686 = vmatmul.mubr.bf16.gmra.mrb[0].mxu0 %v2587
        %v2687 = vpop.f32.mrb[0].mxu0
        %v2688 = vadd.f32 0.0, %v2687
        %v2689 = vpop.f32.mrb[0].mxu0
        %v2690 = vpop.f32.mrb[0].mxu0
        %v2691 = vpop.f32.mrb[0].mxu0
        %2692 = vdwg.mxu0
        %v2701 = vunpack.c.l.b16 %v2546
        %v2702 = vunpack.c.l.b16 %v2547
        %v2703 = vunpack.c.l.b16 %v2548
        %v2704 = vunpack.c.l.b16 %v2549
        %v2705 = vunpack.c.l.b16 %v2550
        %v2706 = vunpack.c.l.b16 %v2551
        %v2707 = vunpack.c.l.b16 %v2552
        %v2708 = vunpack.c.l.b16 %v2553
        %v2709 = vpack.c.b16 %v2702, %v2701
        %v2710 = vpack.c.b16 %v2704, %v2703
        %v2711 = vpack.c.b16 %v2706, %v2705
        %v2712 = vpack.c.b16 %v2708, %v2707
        %2717 = vmatprep.subr.bf16.mxu0 0
        %2718 = vmatpush1.bf16.msra.mxu0 %v2709
        %2719 = vmatprep.subr.bf16.mxu0 0
        %2720 = vmatpush1.bf16.msra.mxu0 %v2710
        %2721 = vmatprep.subr.bf16.mxu0 0
        %2722 = vmatpush1.bf16.msra.mxu0 %v2711
        %2723 = vmatprep.subr.bf16.mxu0 0
        %2724 = vmatpush1.bf16.msra.mxu0 %v2712
        %2725 = vmatprep.subr.bf16.mxu0 0
        %2726 = vmatpush1.bf16.msra.mxu0 0
        %2727 = vmatprep.subr.bf16.mxu0 0
        %2728 = vmatpush1.bf16.msra.mxu0 0
        %2729 = vmatprep.subr.bf16.mxu0 0
        %2730 = vmatpush1.bf16.msra.mxu0 0
        %2731 = vmatprep.subr.bf16.mxu0 0
        %2732 = vmatpush1.bf16.msra.mxu0 0
        %2733 = vmatprep.subr.bf16.mxu0 0
        %2734 = vmatpush1.bf16.msra.mxu0 0
        %2735 = vmatprep.subr.bf16.mxu0 0
        %2736 = vmatpush1.bf16.msra.mxu0 0
        %2737 = vmatprep.subr.bf16.mxu0 0
        %2738 = vmatpush1.bf16.msra.mxu0 0
        %2739 = vmatprep.subr.bf16.mxu0 0
        %2740 = vmatpush1.bf16.msra.mxu0 0
        %2741 = vmatprep.subr.bf16.mxu0 0
        %2742 = vmatpush1.bf16.msra.mxu0 0
        %2743 = vmatprep.subr.bf16.mxu0 0
        %2744 = vmatpush1.bf16.msra.mxu0 0
        %2745 = vmatprep.subr.bf16.mxu0 0
        %2746 = vmatpush1.bf16.msra.mxu0 0
        %2747 = vmatprep.subr.bf16.mxu0 0
        %2748 = vmatpush1.bf16.msra.mxu0 0
        %2749 = vmatprep.mubr.bf16.mxu0 0
        %2750 = vmatmul.mubr.bf16.gmra.mrb[0].mxu0 %v2587
        %v2751 = vpop.f32.mrb[0].mxu0
        %v2752 = vadd.f32 0.0, %v2751
        %v2753 = vpop.f32.mrb[0].mxu0
        %v2754 = vpop.f32.mrb[0].mxu0
        %v2755 = vpop.f32.mrb[0].mxu0
        %2756 = vdwg.mxu0
        %v2765 = vunpack.c.l.b16 %v2554
        %v2766 = vunpack.c.l.b16 %v2555
        %v2767 = vunpack.c.l.b16 %v2556
        %v2768 = vunpack.c.l.b16 %v2557
        %v2769 = vunpack.c.l.b16 %v2558
        %v2770 = vunpack.c.l.b16 %v2559
        %v2771 = vunpack.c.l.b16 %v2560
        %v2772 = vunpack.c.l.b16 %v2561
        %v2773 = vpack.c.b16 %v2766, %v2765
        %v2774 = vpack.c.b16 %v2768, %v2767
        %v2775 = vpack.c.b16 %v2770, %v2769
        %v2776 = vpack.c.b16 %v2772, %v2771
        %2781 = vmatprep.subr.bf16.mxu0 0
        %2782 = vmatpush1.bf16.msra.mxu0 %v2773
        %2783 = vmatprep.subr.bf16.mxu0 0
        %2784 = vmatpush1.bf16.msra.mxu0 %v2774
        %2785 = vmatprep.subr.bf16.mxu0 0
        %2786 = vmatpush1.bf16.msra.mxu0 %v2775
        %2787 = vmatprep.subr.bf16.mxu0 0
        %2788 = vmatpush1.bf16.msra.mxu0 %v2776
        %2789 = vmatprep.subr.bf16.mxu0 0
        %2790 = vmatpush1.bf16.msra.mxu0 0
        %2791 = vmatprep.subr.bf16.mxu0 0
        %2792 = vmatpush1.bf16.msra.mxu0 0
        %2793 = vmatprep.subr.bf16.mxu0 0
        %2794 = vmatpush1.bf16.msra.mxu0 0
        %2795 = vmatprep.subr.bf16.mxu0 0
        %2796 = vmatpush1.bf16.msra.mxu0 0
        %2797 = vmatprep.subr.bf16.mxu0 0
        %2798 = vmatpush1.bf16.msra.mxu0 0
        %2799 = vmatprep.subr.bf16.mxu0 0
        %2800 = vmatpush1.bf16.msra.mxu0 0
        %2801 = vmatprep.subr.bf16.mxu0 0
        %2802 = vmatpush1.bf16.msra.mxu0 0
        %2803 = vmatprep.subr.bf16.mxu0 0
        %2804 = vmatpush1.bf16.msra.mxu0 0
        %2805 = vmatprep.subr.bf16.mxu0 0
        %2806 = vmatpush1.bf16.msra.mxu0 0
        %2807 = vmatprep.subr.bf16.mxu0 0
        %2808 = vmatpush1.bf16.msra.mxu0 0
        %2809 = vmatprep.subr.bf16.mxu0 0
        %2810 = vmatpush1.bf16.msra.mxu0 0
        %2811 = vmatprep.subr.bf16.mxu0 0
        %2812 = vmatpush1.bf16.msra.mxu0 0
        %2813 = vmatprep.mubr.bf16.mxu0 0
        %2814 = vmatmul.mubr.bf16.gmra.mrb[0].mxu0 %v2587
        %v2815 = vpop.f32.mrb[0].mxu0
        %v2816 = vadd.f32 0.0, %v2815
        %v2817 = vpop.f32.mrb[0].mxu0
        %v2818 = vpop.f32.mrb[0].mxu0
        %v2819 = vpop.f32.mrb[0].mxu0
        %2820 = vdwg.mxu0
        %v2821 = vld [vmem:[%s16] sm:$0xf]
        %v2822 = vld [vmem:[%s16 + $0x4] sm:$0xf]
        %v2823 = vld [vmem:[%s16 + $0x8] sm:$0xf]
        %v2824 = vld [vmem:[%s16 + $0xc] sm:$0xf]
        %v2825 = vld [vmem:[%s16 + $0x10] sm:$0xf]
        %v2826 = vld [vmem:[%s16 + $0x14] sm:$0xf]
        %v2827 = vld [vmem:[%s16 + $0x18] sm:$0xf]
        %v2828 = vld [vmem:[%s16 + $0x1c] sm:$0xf]
        %v2829 = vld [vmem:[%s16 + $0x20] sm:$0xf]
        %v2830 = vld [vmem:[%s16 + $0x24] sm:$0xf]
        %v2831 = vld [vmem:[%s16 + $0x28] sm:$0xf]
        %v2832 = vld [vmem:[%s16 + $0x2c] sm:$0xf]
        %v2833 = vld [vmem:[%s16 + $0x30] sm:$0xf]
        %v2834 = vld [vmem:[%s16 + $0x34] sm:$0xf]
        %v2835 = vld [vmem:[%s16 + $0x38] sm:$0xf]
        %v2836 = vld [vmem:[%s16 + $0x3c] sm:$0xf]
        %v2845 = vunpack.c.l.b16 %v2821
        %v2846 = vunpack.c.l.b16 %v2822
        %v2847 = vunpack.c.l.b16 %v2823
        %v2848 = vunpack.c.l.b16 %v2824
        %v2849 = vunpack.c.l.b16 %v2825
        %v2850 = vunpack.c.l.b16 %v2826
        %v2851 = vunpack.c.l.b16 %v2827
        %v2852 = vunpack.c.l.b16 %v2828
        %v2853 = vpack.c.b16 %v2846, %v2845
        %v2854 = vpack.c.b16 %v2848, %v2847
        %v2855 = vpack.c.b16 %v2850, %v2849
        %v2856 = vpack.c.b16 %v2852, %v2851
        %v2862 = vsel %vm757, %v2528, 0
        %v2865 = vsel %vm757, %v2529, 0
        %2867 = vmatprep.subr.bf16.mxu0 0
        %2868 = vmatpush1.bf16.msra.mxu0 %v2853
        %2869 = vmatprep.subr.bf16.mxu0 0
        %2870 = vmatpush1.bf16.msra.mxu0 %v2854
        %2871 = vmatprep.subr.bf16.mxu0 0
        %2872 = vmatpush1.bf16.msra.mxu0 %v2855
        %2873 = vmatprep.subr.bf16.mxu0 0
        %2874 = vmatpush1.bf16.msra.mxu0 %v2856
        %2875 = vmatprep.subr.bf16.mxu0 0
        %2876 = vmatpush1.bf16.msra.mxu0 0
        %2877 = vmatprep.subr.bf16.mxu0 0
        %2878 = vmatpush1.bf16.msra.mxu0 0
        %2879 = vmatprep.subr.bf16.mxu0 0
        %2880 = vmatpush1.bf16.msra.mxu0 0
        %2881 = vmatprep.subr.bf16.mxu0 0
        %2882 = vmatpush1.bf16.msra.mxu0 0
        %2883 = vmatprep.subr.bf16.mxu0 0
        %2884 = vmatpush1.bf16.msra.mxu0 0
        %2885 = vmatprep.subr.bf16.mxu0 0
        %2886 = vmatpush1.bf16.msra.mxu0 0
        %2887 = vmatprep.subr.bf16.mxu0 0
        %2888 = vmatpush1.bf16.msra.mxu0 0
        %2889 = vmatprep.subr.bf16.mxu0 0
        %2890 = vmatpush1.bf16.msra.mxu0 0
        %2891 = vmatprep.subr.bf16.mxu0 0
        %2892 = vmatpush1.bf16.msra.mxu0 0
        %2893 = vmatprep.subr.bf16.mxu0 0
        %2894 = vmatpush1.bf16.msra.mxu0 0
        %2895 = vmatprep.subr.bf16.mxu0 0
        %2896 = vmatpush1.bf16.msra.mxu0 0
        %2897 = vmatprep.subr.bf16.mxu0 0
        %2898 = vmatpush1.bf16.msra.mxu0 0
        %2899 = vmatprep.mubr.bf16.mxu0 0
        %2900 = vmatmul.mubr.bf16.gmra.mrb[0].mxu0 %v2862
        %v2901 = vpop.f32.mrb[0].mxu0
        %v2902 = vadd.f32 0.0, %v2901
        %v2903 = vpop.f32.mrb[0].mxu0
        %v2904 = vpop.f32.mrb[0].mxu0
        %v2905 = vadd.f32 0.0, %v2904
        %v2906 = vpop.f32.mrb[0].mxu0
        %2907 = vmatprep.mubr.bf16.mxu0 0
        %2908 = vmatmul.mubr.bf16.gmra.mrb[0].mxu0 %v2865
        %v2909 = vpop.f32.mrb[0].mxu0
        %v2910 = vadd.f32 0.0, %v2909
        %v2911 = vpop.f32.mrb[0].mxu0
        %v2912 = vpop.f32.mrb[0].mxu0
        %v2913 = vpop.f32.mrb[0].mxu0
        %2914 = vdwg.mxu0
        %v2923 = vunpack.c.l.b16 %v2829
        %v2924 = vunpack.c.l.b16 %v2830
        %v2925 = vunpack.c.l.b16 %v2831
        %v2926 = vunpack.c.l.b16 %v2832
        %v2927 = vunpack.c.l.b16 %v2833
        %v2928 = vunpack.c.l.b16 %v2834
        %v2929 = vunpack.c.l.b16 %v2835
        %v2930 = vunpack.c.l.b16 %v2836
        %v2931 = vpack.c.b16 %v2924, %v2923
        %v2932 = vpack.c.b16 %v2926, %v2925
        %v2933 = vpack.c.b16 %v2928, %v2927
        %v2934 = vpack.c.b16 %v2930, %v2929
        %2939 = vmatprep.subr.bf16.mxu0 0
        %2940 = vmatpush1.bf16.msra.mxu0 %v2931
        %2941 = vmatprep.subr.bf16.mxu0 0
        %2942 = vmatpush1.bf16.msra.mxu0 %v2932
        %2943 = vmatprep.subr.bf16.mxu0 0
        %2944 = vmatpush1.bf16.msra.mxu0 %v2933
        %2945 = vmatprep.subr.bf16.mxu0 0
        %2946 = vmatpush1.bf16.msra.mxu0 %v2934
        %2947 = vmatprep.subr.bf16.mxu0 0
        %2948 = vmatpush1.bf16.msra.mxu0 0
        %2949 = vmatprep.subr.bf16.mxu0 0
        %2950 = vmatpush1.bf16.msra.mxu0 0
        %2951 = vmatprep.subr.bf16.mxu0 0
        %2952 = vmatpush1.bf16.msra.mxu0 0
        %2953 = vmatprep.subr.bf16.mxu0 0
        %2954 = vmatpush1.bf16.msra.mxu0 0
        %2955 = vmatprep.subr.bf16.mxu0 0
        %2956 = vmatpush1.bf16.msra.mxu0 0
        %2957 = vmatprep.subr.bf16.mxu0 0
        %2958 = vmatpush1.bf16.msra.mxu0 0
        %2959 = vmatprep.subr.bf16.mxu0 0
        %2960 = vmatpush1.bf16.msra.mxu0 0
        %2961 = vmatprep.subr.bf16.mxu0 0
        %2962 = vmatpush1.bf16.msra.mxu0 0
        %2963 = vmatprep.subr.bf16.mxu0 0
        %2964 = vmatpush1.bf16.msra.mxu0 0
        %2965 = vmatprep.subr.bf16.mxu0 0
        %2966 = vmatpush1.bf16.msra.mxu0 0
        %2967 = vmatprep.subr.bf16.mxu0 0
        %2968 = vmatpush1.bf16.msra.mxu0 0
        %2969 = vmatprep.subr.bf16.mxu0 0
        %2970 = vmatpush1.bf16.msra.mxu0 0
        %2971 = vmatprep.mubr.bf16.mxu0 0
        %2972 = vmatmul.mubr.bf16.gmra.mrb[0].mxu0 %v2862
        %v2973 = vpop.f32.mrb[0].mxu0
        %v2974 = vadd.f32 0.0, %v2973
        %v2975 = vpop.f32.mrb[0].mxu0
        %v2976 = vpop.f32.mrb[0].mxu0
        %v2977 = vadd.f32 0.0, %v2976
        %v2978 = vpop.f32.mrb[0].mxu0
        %2979 = vmatprep.mubr.bf16.mxu0 0
        %2980 = vmatmul.mubr.bf16.gmra.mrb[0].mxu0 %v2865
        %v2981 = vpop.f32.mrb[0].mxu0
        %v2982 = vadd.f32 0.0, %v2981
        %v2983 = vpop.f32.mrb[0].mxu0
        %v2984 = vpop.f32.mrb[0].mxu0
        %v2985 = vpop.f32.mrb[0].mxu0
        %2986 = vdwg.mxu0
        %v2987 = vld [vmem:[%s17] sm:$0xf]
        %v2988 = vld [vmem:[%s17 + $0x4] sm:$0xf]
        %v2989 = vld [vmem:[%s17 + $0x8] sm:$0xf]
        %v2990 = vld [vmem:[%s17 + $0xc] sm:$0xf]
        %v2991 = vld [vmem:[%s17 + $0x10] sm:$0xf]
        %v2992 = vld [vmem:[%s17 + $0x14] sm:$0xf]
        %v2993 = vld [vmem:[%s17 + $0x18] sm:$0xf]
        %v2994 = vld [vmem:[%s17 + $0x1c] sm:$0xf]
        %v2995 = vld [vmem:[%s17 + $0x20] sm:$0xf]
        %v2996 = vld [vmem:[%s17 + $0x24] sm:$0xf]
        %v2997 = vld [vmem:[%s17 + $0x28] sm:$0xf]
        %v2998 = vld [vmem:[%s17 + $0x2c] sm:$0xf]
        %v2999 = vld [vmem:[%s17 + $0x30] sm:$0xf]
        %v3000 = vld [vmem:[%s17 + $0x34] sm:$0xf]
        %v3001 = vld [vmem:[%s17 + $0x38] sm:$0xf]
        %v3002 = vld [vmem:[%s17 + $0x3c] sm:$0xf]
        %v3011 = vunpack.c.l.b16 %v2987
        %v3012 = vunpack.c.l.b16 %v2988
        %v3013 = vunpack.c.l.b16 %v2989
        %v3014 = vunpack.c.l.b16 %v2990
        %v3015 = vunpack.c.l.b16 %v2991
        %v3016 = vunpack.c.l.b16 %v2992
        %v3017 = vunpack.c.l.b16 %v2993
        %v3018 = vunpack.c.l.b16 %v2994
        %v3019 = vpack.c.b16 %v3012, %v3011
        %v3020 = vpack.c.b16 %v3014, %v3013
        %v3021 = vpack.c.b16 %v3016, %v3015
        %v3022 = vpack.c.b16 %v3018, %v3017
        %3027 = vmatprep.subr.bf16.mxu0 0
        %3028 = vmatpush1.bf16.msra.mxu0 %v3019
        %3029 = vmatprep.subr.bf16.mxu0 0
        %3030 = vmatpush1.bf16.msra.mxu0 %v3020
        %3031 = vmatprep.subr.bf16.mxu0 0
        %3032 = vmatpush1.bf16.msra.mxu0 %v3021
        %3033 = vmatprep.subr.bf16.mxu0 0
        %3034 = vmatpush1.bf16.msra.mxu0 %v3022
        %3035 = vmatprep.subr.bf16.mxu0 0
        %3036 = vmatpush1.bf16.msra.mxu0 0
        %3037 = vmatprep.subr.bf16.mxu0 0
        %3038 = vmatpush1.bf16.msra.mxu0 0
        %3039 = vmatprep.subr.bf16.mxu0 0
        %3040 = vmatpush1.bf16.msra.mxu0 0
        %3041 = vmatprep.subr.bf16.mxu0 0
        %3042 = vmatpush1.bf16.msra.mxu0 0
        %3043 = vmatprep.subr.bf16.mxu0 0
        %3044 = vmatpush1.bf16.msra.mxu0 0
        %3045 = vmatprep.subr.bf16.mxu0 0
        %3046 = vmatpush1.bf16.msra.mxu0 0
        %3047 = vmatprep.subr.bf16.mxu0 0
        %3048 = vmatpush1.bf16.msra.mxu0 0
        %3049 = vmatprep.subr.bf16.mxu0 0
        %3050 = vmatpush1.bf16.msra.mxu0 0
        %3051 = vmatprep.subr.bf16.mxu0 0
        %3052 = vmatpush1.bf16.msra.mxu0 0
        %3053 = vmatprep.subr.bf16.mxu0 0
        %3054 = vmatpush1.bf16.msra.mxu0 0
        %3055 = vmatprep.subr.bf16.mxu0 0
        %3056 = vmatpush1.bf16.msra.mxu0 0
        %3057 = vmatprep.subr.bf16.mxu0 0
        %3058 = vmatpush1.bf16.msra.mxu0 0
        %3059 = vmatprep.mubr.bf16.mxu0 0
        %3060 = vmatmul.mubr.bf16.gmra.mrb[0].mxu0 %v2862
        %v3061 = vpop.f32.mrb[0].mxu0
        %v3062 = vadd.f32 0.0, %v3061
        %v3063 = vpop.f32.mrb[0].mxu0
        %v3064 = vpop.f32.mrb[0].mxu0
        %v3065 = vadd.f32 0.0, %v3064
        %v3066 = vpop.f32.mrb[0].mxu0
        %3067 = vmatprep.mubr.bf16.mxu0 0
        %3068 = vmatmul.mubr.bf16.gmra.mrb[0].mxu0 %v2865
        %v3069 = vpop.f32.mrb[0].mxu0
        %v3070 = vadd.f32 0.0, %v3069
        %v3071 = vpop.f32.mrb[0].mxu0
        %v3072 = vpop.f32.mrb[0].mxu0
        %v3073 = vpop.f32.mrb[0].mxu0
        %3074 = vdwg.mxu0
        %v3083 = vunpack.c.l.b16 %v2995
        %v3084 = vunpack.c.l.b16 %v2996
        %v3085 = vunpack.c.l.b16 %v2997
        %v3086 = vunpack.c.l.b16 %v2998
        %v3087 = vunpack.c.l.b16 %v2999
        %v3088 = vunpack.c.l.b16 %v3000
        %v3089 = vunpack.c.l.b16 %v3001
        %v3090 = vunpack.c.l.b16 %v3002
        %v3091 = vpack.c.b16 %v3084, %v3083
        %v3092 = vpack.c.b16 %v3086, %v3085
        %v3093 = vpack.c.b16 %v3088, %v3087
        %v3094 = vpack.c.b16 %v3090, %v3089
        %3099 = vmatprep.subr.bf16.mxu0 0
        %3100 = vmatpush1.bf16.msra.mxu0 %v3091
        %3101 = vmatprep.subr.bf16.mxu0 0
        %3102 = vmatpush1.bf16.msra.mxu0 %v3092
        %3103 = vmatprep.subr.bf16.mxu0 0
        %3104 = vmatpush1.bf16.msra.mxu0 %v3093
        %3105 = vmatprep.subr.bf16.mxu0 0
        %3106 = vmatpush1.bf16.msra.mxu0 %v3094
        %3107 = vmatprep.subr.bf16.mxu0 0
        %3108 = vmatpush1.bf16.msra.mxu0 0
        %3109 = vmatprep.subr.bf16.mxu0 0
        %3110 = vmatpush1.bf16.msra.mxu0 0
        %3111 = vmatprep.subr.bf16.mxu0 0
        %3112 = vmatpush1.bf16.msra.mxu0 0
        %3113 = vmatprep.subr.bf16.mxu0 0
        %3114 = vmatpush1.bf16.msra.mxu0 0
        %3115 = vmatprep.subr.bf16.mxu0 0
        %3116 = vmatpush1.bf16.msra.mxu0 0
        %3117 = vmatprep.subr.bf16.mxu0 0
        %3118 = vmatpush1.bf16.msra.mxu0 0
        %3119 = vmatprep.subr.bf16.mxu0 0
        %3120 = vmatpush1.bf16.msra.mxu0 0
        %3121 = vmatprep.subr.bf16.mxu0 0
        %3122 = vmatpush1.bf16.msra.mxu0 0
        %3123 = vmatprep.subr.bf16.mxu0 0
        %3124 = vmatpush1.bf16.msra.mxu0 0
        %3125 = vmatprep.subr.bf16.mxu0 0
        %3126 = vmatpush1.bf16.msra.mxu0 0
        %3127 = vmatprep.subr.bf16.mxu0 0
        %3128 = vmatpush1.bf16.msra.mxu0 0
        %3129 = vmatprep.subr.bf16.mxu0 0
        %3130 = vmatpush1.bf16.msra.mxu0 0
        %3131 = vmatprep.mubr.bf16.mxu0 0
        %3132 = vmatmul.mubr.bf16.gmra.mrb[0].mxu0 %v2862
        %v3133 = vpop.f32.mrb[0].mxu0
        %v3134 = vadd.f32 0.0, %v3133
        %v3135 = vpop.f32.mrb[0].mxu0
        %v3136 = vpop.f32.mrb[0].mxu0
        %v3137 = vadd.f32 0.0, %v3136
        %v3138 = vpop.f32.mrb[0].mxu0
        %3139 = vmatprep.mubr.bf16.mxu0 0
        %3140 = vmatmul.mubr.bf16.gmra.mrb[0].mxu0 %v2865
        %v3141 = vpop.f32.mrb[0].mxu0
        %v3142 = vadd.f32 0.0, %v3141
        %v3143 = vpop.f32.mrb[0].mxu0
        %v3144 = vpop.f32.mrb[0].mxu0
        %v3145 = vpop.f32.mrb[0].mxu0
        %3146 = vdwg.mxu0
        %v3147 = vpack.c.bf16 %v2905, %v2902
        %v3148 = vpack.c.bf16 %v2910, %v2910
        %v3149 = vpack.c.bf16 %v2977, %v2974
        %v3150 = vpack.c.bf16 %v2982, %v2982
        %v3151 = vpack.c.bf16 %v3065, %v3062
        %v3152 = vpack.c.bf16 %v3070, %v3070
        %v3153 = vpack.c.bf16 %v3137, %v3134
        %v3154 = vpack.c.bf16 %v3142, %v3142
        %v3155 = vpack.c.bf16 %v2624, %v2624
        %v3156 = vpack.c.bf16 %v2688, %v2688
        %v3157 = vpack.c.bf16 %v2752, %v2752
        %v3158 = vpack.c.bf16 %v2816, %v2816
        %v3160 = vsel %vm1436, %v3155, 0
        %v3163 = vsel %vm1436, %v3147, 0
        %v3166 = vsel %vm1436, %v3148, 0
        %3168 = vmatprep.subr.bf16.mxu0 0
        %3169 = vmatpush1.bf16.xpose.msra.mxu0 %v3163
        %3170 = vmatprep.subr.bf16.mxu0 0
        %3171 = vmatpush1.bf16.xpose.msra.mxu0 %v3166
        %3172 = vmatprep.subr.bf16.mxu0 0
        %3173 = vmatpush1.bf16.xpose.msra.mxu0 0
        %3174 = vmatprep.subr.bf16.mxu0 0
        %3175 = vmatpush1.bf16.xpose.msra.mxu0 0
        %3176 = vmatprep.subr.bf16.mxu0 0
        %3177 = vmatpush1.bf16.xpose.msra.mxu0 0
        %3178 = vmatprep.subr.bf16.mxu0 0
        %3179 = vmatpush1.bf16.xpose.msra.mxu0 0
        %3180 = vmatprep.subr.bf16.mxu0 0
        %3181 = vmatpush1.bf16.xpose.msra.mxu0 0
        %3182 = vmatprep.subr.bf16.mxu0 0
        %3183 = vmatpush1.bf16.xpose.msra.mxu0 0
        %3184 = vmatprep.subr.bf16.mxu0 0
        %3185 = vmatpush1.bf16.xpose.msra.mxu0 0
        %3186 = vmatprep.subr.bf16.mxu0 0
        %3187 = vmatpush1.bf16.xpose.msra.mxu0 0
        %3188 = vmatprep.subr.bf16.mxu0 0
        %3189 = vmatpush1.bf16.xpose.msra.mxu0 0
        %3190 = vmatprep.subr.bf16.mxu0 0
        %3191 = vmatpush1.bf16.xpose.msra.mxu0 0
        %3192 = vmatprep.subr.bf16.mxu0 0
        %3193 = vmatpush1.bf16.xpose.msra.mxu0 0
        %3194 = vmatprep.subr.bf16.mxu0 0
        %3195 = vmatpush1.bf16.xpose.msra.mxu0 0
        %3196 = vmatprep.subr.bf16.mxu0 0
        %3197 = vmatpush1.bf16.xpose.msra.mxu0 0
        %3198 = vmatprep.subr.bf16.mxu0 0
        %3199 = vmatpush1.bf16.xpose.msra.mxu0 0
        %3200 = vmatprep.mubr.bf16.mxu0 0
        %3201 = vmatmul.mubr.bf16.gmra.mrb[0].mxu0 %v3160
        %v3202 = vpop.f32.mrb[0].mxu0
        %v3203 = vadd.f32 0.0, %v3202
        %v3204 = vpop.f32.mrb[0].mxu0
        %v3205 = vpop.f32.mrb[0].mxu0
        %v3206 = vpop.f32.mrb[0].mxu0
        %3207 = vdwg.mxu0
        %v3209 = vsel %vm1436, %v3156, 0
        %3211 = vmatprep.subr.bf16.mxu0 0
        %3212 = vmatpush1.bf16.xpose.msra.mxu0 %v3163
        %3213 = vmatprep.subr.bf16.mxu0 0
        %3214 = vmatpush1.bf16.xpose.msra.mxu0 %v3166
        %3215 = vmatprep.subr.bf16.mxu0 0
        %3216 = vmatpush1.bf16.xpose.msra.mxu0 0
        %3217 = vmatprep.subr.bf16.mxu0 0
        %3218 = vmatpush1.bf16.xpose.msra.mxu0 0
        %3219 = vmatprep.subr.bf16.mxu0 0
        %3220 = vmatpush1.bf16.xpose.msra.mxu0 0
        %3221 = vmatprep.subr.bf16.mxu0 0
        %3222 = vmatpush1.bf16.xpose.msra.mxu0 0
        %3223 = vmatprep.subr.bf16.mxu0 0
        %3224 = vmatpush1.bf16.xpose.msra.mxu0 0
        %3225 = vmatprep.subr.bf16.mxu0 0
        %3226 = vmatpush1.bf16.xpose.msra.mxu0 0
        %3227 = vmatprep.subr.bf16.mxu0 0
        %3228 = vmatpush1.bf16.xpose.msra.mxu0 0
        %3229 = vmatprep.subr.bf16.mxu0 0
        %3230 = vmatpush1.bf16.xpose.msra.mxu0 0
        %3231 = vmatprep.subr.bf16.mxu0 0
        %3232 = vmatpush1.bf16.xpose.msra.mxu0 0
        %3233 = vmatprep.subr.bf16.mxu0 0
        %3234 = vmatpush1.bf16.xpose.msra.mxu0 0
        %3235 = vmatprep.subr.bf16.mxu0 0
        %3236 = vmatpush1.bf16.xpose.msra.mxu0 0
        %3237 = vmatprep.subr.bf16.mxu0 0
        %3238 = vmatpush1.bf16.xpose.msra.mxu0 0
        %3239 = vmatprep.subr.bf16.mxu0 0
        %3240 = vmatpush1.bf16.xpose.msra.mxu0 0
        %3241 = vmatprep.subr.bf16.mxu0 0
        %3242 = vmatpush1.bf16.xpose.msra.mxu0 0
        %3243 = vmatprep.mubr.bf16.mxu0 0
        %3244 = vmatmul.mubr.bf16.gmra.mrb[0].mxu0 %v3209
        %v3245 = vpop.f32.mrb[0].mxu0
        %v3246 = vadd.f32 0.0, %v3245
        %v3247 = vpop.f32.mrb[0].mxu0
        %v3248 = vpop.f32.mrb[0].mxu0
        %v3249 = vpop.f32.mrb[0].mxu0
        %3250 = vdwg.mxu0
        %v3252 = vsel %vm1436, %v3157, 0
        %v3255 = vsel %vm1436, %v3149, 0
        %v3258 = vsel %vm1436, %v3150, 0
        %3260 = vmatprep.subr.bf16.mxu0 0
        %3261 = vmatpush1.bf16.xpose.msra.mxu0 %v3255
        %3262 = vmatprep.subr.bf16.mxu0 0
        %3263 = vmatpush1.bf16.xpose.msra.mxu0 %v3258
        %3264 = vmatprep.subr.bf16.mxu0 0
        %3265 = vmatpush1.bf16.xpose.msra.mxu0 0
        %3266 = vmatprep.subr.bf16.mxu0 0
        %3267 = vmatpush1.bf16.xpose.msra.mxu0 0
        %3268 = vmatprep.subr.bf16.mxu0 0
        %3269 = vmatpush1.bf16.xpose.msra.mxu0 0
        %3270 = vmatprep.subr.bf16.mxu0 0
        %3271 = vmatpush1.bf16.xpose.msra.mxu0 0
        %3272 = vmatprep.subr.bf16.mxu0 0
        %3273 = vmatpush1.bf16.xpose.msra.mxu0 0
        %3274 = vmatprep.subr.bf16.mxu0 0
        %3275 = vmatpush1.bf16.xpose.msra.mxu0 0
        %3276 = vmatprep.subr.bf16.mxu0 0
        %3277 = vmatpush1.bf16.xpose.msra.mxu0 0
        %3278 = vmatprep.subr.bf16.mxu0 0
        %3279 = vmatpush1.bf16.xpose.msra.mxu0 0
        %3280 = vmatprep.subr.bf16.mxu0 0
        %3281 = vmatpush1.bf16.xpose.msra.mxu0 0
        %3282 = vmatprep.subr.bf16.mxu0 0
        %3283 = vmatpush1.bf16.xpose.msra.mxu0 0
        %3284 = vmatprep.subr.bf16.mxu0 0
        %3285 = vmatpush1.bf16.xpose.msra.mxu0 0
        %3286 = vmatprep.subr.bf16.mxu0 0
        %3287 = vmatpush1.bf16.xpose.msra.mxu0 0
        %3288 = vmatprep.subr.bf16.mxu0 0
        %3289 = vmatpush1.bf16.xpose.msra.mxu0 0
        %3290 = vmatprep.subr.bf16.mxu0 0
        %3291 = vmatpush1.bf16.xpose.msra.mxu0 0
        %3292 = vmatprep.mubr.bf16.mxu0 0
        %3293 = vmatmul.mubr.bf16.gmra.mrb[0].mxu0 %v3252
        %v3294 = vpop.f32.mrb[0].mxu0
        %v3295 = vadd.f32 0.0, %v3294
        %v3296 = vpop.f32.mrb[0].mxu0
        %v3297 = vpop.f32.mrb[0].mxu0
        %v3298 = vpop.f32.mrb[0].mxu0
        %3299 = vdwg.mxu0
        %v3301 = vsel %vm1436, %v3158, 0
        %3303 = vmatprep.subr.bf16.mxu0 0
        %3304 = vmatpush1.bf16.xpose.msra.mxu0 %v3255
        %3305 = vmatprep.subr.bf16.mxu0 0
        %3306 = vmatpush1.bf16.xpose.msra.mxu0 %v3258
        %3307 = vmatprep.subr.bf16.mxu0 0
        %3308 = vmatpush1.bf16.xpose.msra.mxu0 0
        %3309 = vmatprep.subr.bf16.mxu0 0
        %3310 = vmatpush1.bf16.xpose.msra.mxu0 0
        %3311 = vmatprep.subr.bf16.mxu0 0
        %3312 = vmatpush1.bf16.xpose.msra.mxu0 0
        %3313 = vmatprep.subr.bf16.mxu0 0
        %3314 = vmatpush1.bf16.xpose.msra.mxu0 0
        %3315 = vmatprep.subr.bf16.mxu0 0
        %3316 = vmatpush1.bf16.xpose.msra.mxu0 0
        %3317 = vmatprep.subr.bf16.mxu0 0
        %3318 = vmatpush1.bf16.xpose.msra.mxu0 0
        %3319 = vmatprep.subr.bf16.mxu0 0
        %3320 = vmatpush1.bf16.xpose.msra.mxu0 0
        %3321 = vmatprep.subr.bf16.mxu0 0
        %3322 = vmatpush1.bf16.xpose.msra.mxu0 0
        %3323 = vmatprep.subr.bf16.mxu0 0
        %3324 = vmatpush1.bf16.xpose.msra.mxu0 0
        %3325 = vmatprep.subr.bf16.mxu0 0
        %3326 = vmatpush1.bf16.xpose.msra.mxu0 0
        %3327 = vmatprep.subr.bf16.mxu0 0
        %3328 = vmatpush1.bf16.xpose.msra.mxu0 0
        %3329 = vmatprep.subr.bf16.mxu0 0
        %3330 = vmatpush1.bf16.xpose.msra.mxu0 0
        %3331 = vmatprep.subr.bf16.mxu0 0
        %3332 = vmatpush1.bf16.xpose.msra.mxu0 0
        %3333 = vmatprep.subr.bf16.mxu0 0
        %3334 = vmatpush1.bf16.xpose.msra.mxu0 0
        %3335 = vmatprep.mubr.bf16.mxu0 0
        %3336 = vmatmul.mubr.bf16.gmra.mrb[0].mxu0 %v3301
        %v3337 = vpop.f32.mrb[0].mxu0
        %v3338 = vadd.f32 0.0, %v3337
        %v3339 = vpop.f32.mrb[0].mxu0
        %v3340 = vpop.f32.mrb[0].mxu0
        %v3341 = vpop.f32.mrb[0].mxu0
        %3342 = vdwg.mxu0
        %v3343 = vmul.f32 %v3203, 0.17677669
        %v3344 = vmul.f32 %v3246, 0.17677669
        %v3345 = vmul.f32 %v3295, 0.17677669
        %v3346 = vmul.f32 %v3338, 0.17677669
        %v3347 = vadd.f32 %v3343, %v1629
        %v3348 = vadd.f32 %v3344, %v1629
        %v3349 = vadd.f32 %v3345, %v1629
        %v3350 = vadd.f32 %v3346, %v1629
        %v3351 = vsel %vm1635, %v3347, -inf
        %3352 = vmax.xlane.f32.xlu0 %v3351
        %v3353 = vpop.xlane.xlu0 %3352
        %v3354 = vsel %vm1635, %v3348, -inf
        %3355 = vmax.xlane.f32.xlu0 %v3354
        %v3356 = vpop.xlane.xlu0 %3355
        %v3357 = vsel %vm1635, %v3349, -inf
        %3358 = vmax.xlane.f32.xlu0 %v3357
        %v3359 = vpop.xlane.xlu0 %3358
        %v3360 = vsel %vm1635, %v3350, -inf
        %3361 = vmax.xlane.f32.xlu0 %v3360
        %v3362 = vpop.xlane.xlu0 %3361
        %v3363 = vsub.f32 %v3347, %v3353
        %v3364 = vsub.f32 %v3348, %v3356
        %v3365 = vsub.f32 %v3349, %v3359
        %v3366 = vsub.f32 %v3350, %v3362
        %v3367 = vmul.f32 %v3363, 1.442695
        %v3368 = vpow.pop %v3367
        %v3369 = vmul.f32 %v3364, 1.442695
        %v3370 = vpow.pop %v3369
        %v3371 = vmul.f32 %v3365, 1.442695
        %v3372 = vpow.pop %v3371
        %v3373 = vmul.f32 %v3366, 1.442695
        %v3374 = vpow.pop %v3373
        %v3375 = vsel %vm1635, %v3368, 0.0
        %3376 = vadd.xlane.f32.xlu0 %v3375
        %v3377 = vpop.xlane.xlu0 %3376
        %v3378 = vsel %vm1635, %v3370, 0.0
        %3379 = vadd.xlane.f32.xlu0 %v3378
        %v3380 = vpop.xlane.xlu0 %3379
        %v3381 = vsel %vm1635, %v3372, 0.0
        %3382 = vadd.xlane.f32.xlu0 %v3381
        %v3383 = vpop.xlane.xlu0 %3382
        %v3384 = vsel %vm1635, %v3374, 0.0
        %3385 = vadd.xlane.f32.xlu0 %v3384
        %v3386 = vpop.xlane.xlu0 %3385
        %v3387 = vrcp.pop %v3377
        %v3388 = vrcp.pop %v3380
        %v3389 = vrcp.pop %v3383
        %v3390 = vrcp.pop %v3386
        %v3391 = vmul.f32 %v3368, %v3387
        %v3392 = vmul.f32 %v3370, %v3388
        %v3393 = vmul.f32 %v3372, %v3389
        %v3394 = vmul.f32 %v3374, %v3390
        %v3395 = vpack.c.bf16 %v3391, %v3391
        %v3396 = vpack.c.bf16 %v3392, %v3392
        %v3397 = vpack.c.bf16 %v3393, %v3393
        %v3398 = vpack.c.bf16 %v3394, %v3394
        %v3400 = vsel %vm1635, %v3395, 0
        %v3403 = vsel %vm1687, %v3152, 0
        %3405 = vmatprep.subr.bf16.mxu0 0
        %3406 = vmatpush1.bf16.msra.mxu0 %v3151
        %3407 = vmatprep.subr.bf16.mxu0 0
        %3408 = vmatpush1.bf16.msra.mxu0 %v3403
        %3409 = vmatprep.subr.bf16.mxu0 0
        %3410 = vmatpush1.bf16.msra.mxu0 0
        %3411 = vmatprep.subr.bf16.mxu0 0
        %3412 = vmatpush1.bf16.msra.mxu0 0
        %3413 = vmatprep.subr.bf16.mxu0 0
        %3414 = vmatpush1.bf16.msra.mxu0 0
        %3415 = vmatprep.subr.bf16.mxu0 0
        %3416 = vmatpush1.bf16.msra.mxu0 0
        %3417 = vmatprep.subr.bf16.mxu0 0
        %3418 = vmatpush1.bf16.msra.mxu0 0
        %3419 = vmatprep.subr.bf16.mxu0 0
        %3420 = vmatpush1.bf16.msra.mxu0 0
        %3421 = vmatprep.subr.bf16.mxu0 0
        %3422 = vmatpush1.bf16.msra.mxu0 0
        %3423 = vmatprep.subr.bf16.mxu0 0
        %3424 = vmatpush1.bf16.msra.mxu0 0
        %3425 = vmatprep.subr.bf16.mxu0 0
        %3426 = vmatpush1.bf16.msra.mxu0 0
        %3427 = vmatprep.subr.bf16.mxu0 0
        %3428 = vmatpush1.bf16.msra.mxu0 0
        %3429 = vmatprep.subr.bf16.mxu0 0
        %3430 = vmatpush1.bf16.msra.mxu0 0
        %3431 = vmatprep.subr.bf16.mxu0 0
        %3432 = vmatpush1.bf16.msra.mxu0 0
        %3433 = vmatprep.subr.bf16.mxu0 0
        %3434 = vmatpush1.bf16.msra.mxu0 0
        %3435 = vmatprep.subr.bf16.mxu0 0
        %3436 = vmatpush1.bf16.msra.mxu0 0
        %3437 = vmatprep.mubr.bf16.mxu0 0
        %3438 = vmatmul.mubr.bf16.gmra.mrb[0].mxu0 %v3400
        %v3439 = vpop.f32.mrb[0].mxu0
        %v3440 = vadd.f32 0.0, %v3439
        %v3441 = vpop.f32.mrb[0].mxu0
        %v3442 = vpop.f32.mrb[0].mxu0
        %v3443 = vpop.f32.mrb[0].mxu0
        %3444 = vdwg.mxu0
        %v3446 = vsel %vm1635, %v3396, 0
        %3448 = vmatprep.subr.bf16.mxu0 0
        %3449 = vmatpush1.bf16.msra.mxu0 %v3151
        %3450 = vmatprep.subr.bf16.mxu0 0
        %3451 = vmatpush1.bf16.msra.mxu0 %v3403
        %3452 = vmatprep.subr.bf16.mxu0 0
        %3453 = vmatpush1.bf16.msra.mxu0 0
        %3454 = vmatprep.subr.bf16.mxu0 0
        %3455 = vmatpush1.bf16.msra.mxu0 0
        %3456 = vmatprep.subr.bf16.mxu0 0
        %3457 = vmatpush1.bf16.msra.mxu0 0
        %3458 = vmatprep.subr.bf16.mxu0 0
        %3459 = vmatpush1.bf16.msra.mxu0 0
        %3460 = vmatprep.subr.bf16.mxu0 0
        %3461 = vmatpush1.bf16.msra.mxu0 0
        %3462 = vmatprep.subr.bf16.mxu0 0
        %3463 = vmatpush1.bf16.msra.mxu0 0
        %3464 = vmatprep.subr.bf16.mxu0 0
        %3465 = vmatpush1.bf16.msra.mxu0 0
        %3466 = vmatprep.subr.bf16.mxu0 0
        %3467 = vmatpush1.bf16.msra.mxu0 0
        %3468 = vmatprep.subr.bf16.mxu0 0
        %3469 = vmatpush1.bf16.msra.mxu0 0
        %3470 = vmatprep.subr.bf16.mxu0 0
        %3471 = vmatpush1.bf16.msra.mxu0 0
        %3472 = vmatprep.subr.bf16.mxu0 0
        %3473 = vmatpush1.bf16.msra.mxu0 0
        %3474 = vmatprep.subr.bf16.mxu0 0
        %3475 = vmatpush1.bf16.msra.mxu0 0
        %3476 = vmatprep.subr.bf16.mxu0 0
        %3477 = vmatpush1.bf16.msra.mxu0 0
        %3478 = vmatprep.subr.bf16.mxu0 0
        %3479 = vmatpush1.bf16.msra.mxu0 0
        %3480 = vmatprep.mubr.bf16.mxu0 0
        %3481 = vmatmul.mubr.bf16.gmra.mrb[0].mxu0 %v3446
        %v3482 = vpop.f32.mrb[0].mxu0
        %v3483 = vadd.f32 0.0, %v3482
        %v3484 = vpop.f32.mrb[0].mxu0
        %v3485 = vpop.f32.mrb[0].mxu0
        %v3486 = vpop.f32.mrb[0].mxu0
        %3487 = vdwg.mxu0
        %v3489 = vsel %vm1635, %v3397, 0
        %v3492 = vsel %vm1687, %v3154, 0
        %3494 = vmatprep.subr.bf16.mxu0 0
        %3495 = vmatpush1.bf16.msra.mxu0 %v3153
        %3496 = vmatprep.subr.bf16.mxu0 0
        %3497 = vmatpush1.bf16.msra.mxu0 %v3492
        %3498 = vmatprep.subr.bf16.mxu0 0
        %3499 = vmatpush1.bf16.msra.mxu0 0
        %3500 = vmatprep.subr.bf16.mxu0 0
        %3501 = vmatpush1.bf16.msra.mxu0 0
        %3502 = vmatprep.subr.bf16.mxu0 0
        %3503 = vmatpush1.bf16.msra.mxu0 0
        %3504 = vmatprep.subr.bf16.mxu0 0
        %3505 = vmatpush1.bf16.msra.mxu0 0
        %3506 = vmatprep.subr.bf16.mxu0 0
        %3507 = vmatpush1.bf16.msra.mxu0 0
        %3508 = vmatprep.subr.bf16.mxu0 0
        %3509 = vmatpush1.bf16.msra.mxu0 0
        %3510 = vmatprep.subr.bf16.mxu0 0
        %3511 = vmatpush1.bf16.msra.mxu0 0
        %3512 = vmatprep.subr.bf16.mxu0 0
        %3513 = vmatpush1.bf16.msra.mxu0 0
        %3514 = vmatprep.subr.bf16.mxu0 0
        %3515 = vmatpush1.bf16.msra.mxu0 0
        %3516 = vmatprep.subr.bf16.mxu0 0
        %3517 = vmatpush1.bf16.msra.mxu0 0
        %3518 = vmatprep.subr.bf16.mxu0 0
        %3519 = vmatpush1.bf16.msra.mxu0 0
        %3520 = vmatprep.subr.bf16.mxu0 0
        %3521 = vmatpush1.bf16.msra.mxu0 0
        %3522 = vmatprep.subr.bf16.mxu0 0
        %3523 = vmatpush1.bf16.msra.mxu0 0
        %3524 = vmatprep.subr.bf16.mxu0 0
        %3525 = vmatpush1.bf16.msra.mxu0 0
        %3526 = vmatprep.mubr.bf16.mxu0 0
        %3527 = vmatmul.mubr.bf16.gmra.mrb[0].mxu0 %v3489
        %v3528 = vpop.f32.mrb[0].mxu0
        %v3529 = vadd.f32 0.0, %v3528
        %v3530 = vpop.f32.mrb[0].mxu0
        %v3531 = vpop.f32.mrb[0].mxu0
        %v3532 = vpop.f32.mrb[0].mxu0
        %3533 = vdwg.mxu0
        %v3535 = vsel %vm1635, %v3398, 0
        %3537 = vmatprep.subr.bf16.mxu0 0
        %3538 = vmatpush1.bf16.msra.mxu0 %v3153
        %3539 = vmatprep.subr.bf16.mxu0 0
        %3540 = vmatpush1.bf16.msra.mxu0 %v3492
        %3541 = vmatprep.subr.bf16.mxu0 0
        %3542 = vmatpush1.bf16.msra.mxu0 0
        %3543 = vmatprep.subr.bf16.mxu0 0
        %3544 = vmatpush1.bf16.msra.mxu0 0
        %3545 = vmatprep.subr.bf16.mxu0 0
        %3546 = vmatpush1.bf16.msra.mxu0 0
        %3547 = vmatprep.subr.bf16.mxu0 0
        %3548 = vmatpush1.bf16.msra.mxu0 0
        %3549 = vmatprep.subr.bf16.mxu0 0
        %3550 = vmatpush1.bf16.msra.mxu0 0
        %3551 = vmatprep.subr.bf16.mxu0 0
        %3552 = vmatpush1.bf16.msra.mxu0 0
        %3553 = vmatprep.subr.bf16.mxu0 0
        %3554 = vmatpush1.bf16.msra.mxu0 0
        %3555 = vmatprep.subr.bf16.mxu0 0
        %3556 = vmatpush1.bf16.msra.mxu0 0
        %3557 = vmatprep.subr.bf16.mxu0 0
        %3558 = vmatpush1.bf16.msra.mxu0 0
        %3559 = vmatprep.subr.bf16.mxu0 0
        %3560 = vmatpush1.bf16.msra.mxu0 0
        %3561 = vmatprep.subr.bf16.mxu0 0
        %3562 = vmatpush1.bf16.msra.mxu0 0
        %3563 = vmatprep.subr.bf16.mxu0 0
        %3564 = vmatpush1.bf16.msra.mxu0 0
        %3565 = vmatprep.subr.bf16.mxu0 0
        %3566 = vmatpush1.bf16.msra.mxu0 0
        %3567 = vmatprep.subr.bf16.mxu0 0
        %3568 = vmatpush1.bf16.msra.mxu0 0
        %3569 = vmatprep.mubr.bf16.mxu0 0
        %3570 = vmatmul.mubr.bf16.gmra.mrb[0].mxu0 %v3535
        %v3571 = vpop.f32.mrb[0].mxu0
        %v3572 = vadd.f32 0.0, %v3571
        %v3573 = vpop.f32.mrb[0].mxu0
        %v3574 = vpop.f32.mrb[0].mxu0
        %v3575 = vpop.f32.mrb[0].mxu0
        %3576 = vdwg.mxu0
        %v3577 = vpack.c.bf16 %v3440, %v3440
        %v3578 = vpack.c.bf16 %v3483, %v3483
        %v3579 = vpack.c.bf16 %v3529, %v3529
        %v3580 = vpack.c.bf16 %v3572, %v3572
        %v3581 = vld [vmem:[%s18] sm:$0xf]
        %v3582 = vld [vmem:[%s18 + $0x4] sm:$0xf]
        %v3583 = vld [vmem:[%s18 + $0x8] sm:$0xf]
        %v3584 = vld [vmem:[%s18 + $0xc] sm:$0xf]
        %v3585 = vld [vmem:[%s18 + $0x10] sm:$0xf]
        %v3586 = vld [vmem:[%s18 + $0x14] sm:$0xf]
        %v3587 = vld [vmem:[%s18 + $0x18] sm:$0xf]
        %v3588 = vld [vmem:[%s18 + $0x1c] sm:$0xf]
        %v3589 = vld [vmem:[%s18 + $0x20] sm:$0xf]
        %v3590 = vld [vmem:[%s18 + $0x24] sm:$0xf]
        %v3591 = vld [vmem:[%s18 + $0x28] sm:$0xf]
        %v3592 = vld [vmem:[%s18 + $0x2c] sm:$0xf]
        %v3593 = vld [vmem:[%s18 + $0x30] sm:$0xf]
        %v3594 = vld [vmem:[%s18 + $0x34] sm:$0xf]
        %v3595 = vld [vmem:[%s18 + $0x38] sm:$0xf]
        %v3596 = vld [vmem:[%s18 + $0x3c] sm:$0xf]
        %v3601 = vunpack.c.l.b16 %v3581
        %v3602 = vunpack.c.l.b16 %v3582
        %v3603 = vunpack.c.l.b16 %v3583
        %v3604 = vunpack.c.l.b16 %v3584
        %v3605 = vpack.c.b16 %v3602, %v3601
        %v3606 = vpack.c.b16 %v3604, %v3603
        %v3610 = vsel %vm1436, %v3577, 0
        %3612 = vmatprep.subr.bf16.mxu0 0
        %3613 = vmatpush1.bf16.msra.mxu0 %v3605
        %3614 = vmatprep.subr.bf16.mxu0 0
        %3615 = vmatpush1.bf16.msra.mxu0 %v3606
        %3616 = vmatprep.subr.bf16.mxu0 0
        %3617 = vmatpush1.bf16.msra.mxu0 0
        %3618 = vmatprep.subr.bf16.mxu0 0
        %3619 = vmatpush1.bf16.msra.mxu0 0
        %3620 = vmatprep.subr.bf16.mxu0 0
        %3621 = vmatpush1.bf16.msra.mxu0 0
        %3622 = vmatprep.subr.bf16.mxu0 0
        %3623 = vmatpush1.bf16.msra.mxu0 0
        %3624 = vmatprep.subr.bf16.mxu0 0
        %3625 = vmatpush1.bf16.msra.mxu0 0
        %3626 = vmatprep.subr.bf16.mxu0 0
        %3627 = vmatpush1.bf16.msra.mxu0 0
        %3628 = vmatprep.subr.bf16.mxu0 0
        %3629 = vmatpush1.bf16.msra.mxu0 0
        %3630 = vmatprep.subr.bf16.mxu0 0
        %3631 = vmatpush1.bf16.msra.mxu0 0
        %3632 = vmatprep.subr.bf16.mxu0 0
        %3633 = vmatpush1.bf16.msra.mxu0 0
        %3634 = vmatprep.subr.bf16.mxu0 0
        %3635 = vmatpush1.bf16.msra.mxu0 0
        %3636 = vmatprep.subr.bf16.mxu0 0
        %3637 = vmatpush1.bf16.msra.mxu0 0
        %3638 = vmatprep.subr.bf16.mxu0 0
        %3639 = vmatpush1.bf16.msra.mxu0 0
        %3640 = vmatprep.subr.bf16.mxu0 0
        %3641 = vmatpush1.bf16.msra.mxu0 0
        %3642 = vmatprep.subr.bf16.mxu0 0
        %3643 = vmatpush1.bf16.msra.mxu0 0
        %3644 = vmatprep.mubr.bf16.mxu0 0
        %3645 = vmatmul.mubr.bf16.gmra.mrb[0].mxu0 %v3610
        %v3646 = vpop.f32.mrb[0].mxu0
        %v3647 = vadd.f32 0.0, %v3646
        %v3648 = vpop.f32.mrb[0].mxu0
        %v3649 = vpop.f32.mrb[0].mxu0
        %v3650 = vpop.f32.mrb[0].mxu0
        %3651 = vdwg.mxu0
        %v3656 = vunpack.c.l.b16 %v3585
        %v3657 = vunpack.c.l.b16 %v3586
        %v3658 = vunpack.c.l.b16 %v3587
        %v3659 = vunpack.c.l.b16 %v3588
        %v3660 = vpack.c.b16 %v3657, %v3656
        %v3661 = vpack.c.b16 %v3659, %v3658
        %v3665 = vsel %vm1436, %v3578, 0
        %3667 = vmatprep.subr.bf16.mxu0 0
        %3668 = vmatpush1.bf16.msra.mxu0 %v3660
        %3669 = vmatprep.subr.bf16.mxu0 0
        %3670 = vmatpush1.bf16.msra.mxu0 %v3661
        %3671 = vmatprep.subr.bf16.mxu0 0
        %3672 = vmatpush1.bf16.msra.mxu0 0
        %3673 = vmatprep.subr.bf16.mxu0 0
        %3674 = vmatpush1.bf16.msra.mxu0 0
        %3675 = vmatprep.subr.bf16.mxu0 0
        %3676 = vmatpush1.bf16.msra.mxu0 0
        %3677 = vmatprep.subr.bf16.mxu0 0
        %3678 = vmatpush1.bf16.msra.mxu0 0
        %3679 = vmatprep.subr.bf16.mxu0 0
        %3680 = vmatpush1.bf16.msra.mxu0 0
        %3681 = vmatprep.subr.bf16.mxu0 0
        %3682 = vmatpush1.bf16.msra.mxu0 0
        %3683 = vmatprep.subr.bf16.mxu0 0
        %3684 = vmatpush1.bf16.msra.mxu0 0
        %3685 = vmatprep.subr.bf16.mxu0 0
        %3686 = vmatpush1.bf16.msra.mxu0 0
        %3687 = vmatprep.subr.bf16.mxu0 0
        %3688 = vmatpush1.bf16.msra.mxu0 0
        %3689 = vmatprep.subr.bf16.mxu0 0
        %3690 = vmatpush1.bf16.msra.mxu0 0
        %3691 = vmatprep.subr.bf16.mxu0 0
        %3692 = vmatpush1.bf16.msra.mxu0 0
        %3693 = vmatprep.subr.bf16.mxu0 0
        %3694 = vmatpush1.bf16.msra.mxu0 0
        %3695 = vmatprep.subr.bf16.mxu0 0
        %3696 = vmatpush1.bf16.msra.mxu0 0
        %3697 = vmatprep.subr.bf16.mxu0 0
        %3698 = vmatpush1.bf16.msra.mxu0 0
        %3699 = vmatprep.mubr.bf16.mxu0 0
        %3700 = vmatmul.mubr.bf16.gmra.mrb[0].mxu0 %v3665
        %v3701 = vpop.f32.mrb[0].mxu0
        %v3702 = vadd.f32 0.0, %v3701
        %v3703 = vpop.f32.mrb[0].mxu0
        %v3704 = vpop.f32.mrb[0].mxu0
        %v3705 = vpop.f32.mrb[0].mxu0
        %3706 = vdwg.mxu0
        %v3711 = vunpack.c.l.b16 %v3589
        %v3712 = vunpack.c.l.b16 %v3590
        %v3713 = vunpack.c.l.b16 %v3591
        %v3714 = vunpack.c.l.b16 %v3592
        %v3715 = vpack.c.b16 %v3712, %v3711
        %v3716 = vpack.c.b16 %v3714, %v3713
        %v3720 = vsel %vm1436, %v3579, 0
        %3722 = vmatprep.subr.bf16.mxu0 0
        %3723 = vmatpush1.bf16.msra.mxu0 %v3715
        %3724 = vmatprep.subr.bf16.mxu0 0
        %3725 = vmatpush1.bf16.msra.mxu0 %v3716
        %3726 = vmatprep.subr.bf16.mxu0 0
        %3727 = vmatpush1.bf16.msra.mxu0 0
        %3728 = vmatprep.subr.bf16.mxu0 0
        %3729 = vmatpush1.bf16.msra.mxu0 0
        %3730 = vmatprep.subr.bf16.mxu0 0
        %3731 = vmatpush1.bf16.msra.mxu0 0
        %3732 = vmatprep.subr.bf16.mxu0 0
        %3733 = vmatpush1.bf16.msra.mxu0 0
        %3734 = vmatprep.subr.bf16.mxu0 0
        %3735 = vmatpush1.bf16.msra.mxu0 0
        %3736 = vmatprep.subr.bf16.mxu0 0
        %3737 = vmatpush1.bf16.msra.mxu0 0
        %3738 = vmatprep.subr.bf16.mxu0 0
        %3739 = vmatpush1.bf16.msra.mxu0 0
        %3740 = vmatprep.subr.bf16.mxu0 0
        %3741 = vmatpush1.bf16.msra.mxu0 0
        %3742 = vmatprep.subr.bf16.mxu0 0
        %3743 = vmatpush1.bf16.msra.mxu0 0
        %3744 = vmatprep.subr.bf16.mxu0 0
        %3745 = vmatpush1.bf16.msra.mxu0 0
        %3746 = vmatprep.subr.bf16.mxu0 0
        %3747 = vmatpush1.bf16.msra.mxu0 0
        %3748 = vmatprep.subr.bf16.mxu0 0
        %3749 = vmatpush1.bf16.msra.mxu0 0
        %3750 = vmatprep.subr.bf16.mxu0 0
        %3751 = vmatpush1.bf16.msra.mxu0 0
        %3752 = vmatprep.subr.bf16.mxu0 0
        %3753 = vmatpush1.bf16.msra.mxu0 0
        %3754 = vmatprep.mubr.bf16.mxu0 0
        %3755 = vmatmul.mubr.bf16.gmra.mrb[0].mxu0 %v3720
        %v3756 = vpop.f32.mrb[0].mxu0
        %v3757 = vadd.f32 0.0, %v3756
        %v3758 = vpop.f32.mrb[0].mxu0
        %v3759 = vpop.f32.mrb[0].mxu0
        %v3760 = vpop.f32.mrb[0].mxu0
        %3761 = vdwg.mxu0
        %v3766 = vunpack.c.l.b16 %v3593
        %v3767 = vunpack.c.l.b16 %v3594
        %v3768 = vunpack.c.l.b16 %v3595
        %v3769 = vunpack.c.l.b16 %v3596
        %v3770 = vpack.c.b16 %v3767, %v3766
        %v3771 = vpack.c.b16 %v3769, %v3768
        %v3775 = vsel %vm1436, %v3580, 0
        %3777 = vmatprep.subr.bf16.mxu0 0
        %3778 = vmatpush1.bf16.msra.mxu0 %v3770
        %3779 = vmatprep.subr.bf16.mxu0 0
        %3780 = vmatpush1.bf16.msra.mxu0 %v3771
        %3781 = vmatprep.subr.bf16.mxu0 0
        %3782 = vmatpush1.bf16.msra.mxu0 0
        %3783 = vmatprep.subr.bf16.mxu0 0
        %3784 = vmatpush1.bf16.msra.mxu0 0
        %3785 = vmatprep.subr.bf16.mxu0 0
        %3786 = vmatpush1.bf16.msra.mxu0 0
        %3787 = vmatprep.subr.bf16.mxu0 0
        %3788 = vmatpush1.bf16.msra.mxu0 0
        %3789 = vmatprep.subr.bf16.mxu0 0
        %3790 = vmatpush1.bf16.msra.mxu0 0
        %3791 = vmatprep.subr.bf16.mxu0 0
        %3792 = vmatpush1.bf16.msra.mxu0 0
        %3793 = vmatprep.subr.bf16.mxu0 0
        %3794 = vmatpush1.bf16.msra.mxu0 0
        %3795 = vmatprep.subr.bf16.mxu0 0
        %3796 = vmatpush1.bf16.msra.mxu0 0
        %3797 = vmatprep.subr.bf16.mxu0 0
        %3798 = vmatpush1.bf16.msra.mxu0 0
        %3799 = vmatprep.subr.bf16.mxu0 0
        %3800 = vmatpush1.bf16.msra.mxu0 0
        %3801 = vmatprep.subr.bf16.mxu0 0
        %3802 = vmatpush1.bf16.msra.mxu0 0
        %3803 = vmatprep.subr.bf16.mxu0 0
        %3804 = vmatpush1.bf16.msra.mxu0 0
        %3805 = vmatprep.subr.bf16.mxu0 0
        %3806 = vmatpush1.bf16.msra.mxu0 0
        %3807 = vmatprep.subr.bf16.mxu0 0
        %3808 = vmatpush1.bf16.msra.mxu0 0
        %3809 = vmatprep.mubr.bf16.mxu0 0
        %3810 = vmatmul.mubr.bf16.gmra.mrb[0].mxu0 %v3775
        %v3811 = vpop.f32.mrb[0].mxu0
        %v3812 = vadd.f32 0.0, %v3811
        %v3813 = vpop.f32.mrb[0].mxu0
        %v3814 = vpop.f32.mrb[0].mxu0
        %v3815 = vpop.f32.mrb[0].mxu0
        %3816 = vdwg.mxu0
        %v3817 = vsel %vm757, %v3647, 0.0
        %v3818 = vsel %vm757, %v3702, 0.0
        %v3819 = vadd.f32 %v3817, %v3818
        %v3820 = vsel %vm757, %v3757, 0.0
        %v3821 = vadd.f32 %v3819, %v3820
        %v3822 = vsel %vm757, %v3812, 0.0
        %v3823 = vadd.f32 %v3821, %v3822
        %v3824 = vadd.f32 %v2495, %v3823
        %v3825 = vld [vmem:[%s19] sm:$0x1]
        %v3826 = vmul.f32 %v3824, %v3824
        %v3827 = vsel %vm757, %v3826, 0.0
        %3828 = vadd.xlane.f32.xlu0 %v3827
        %v3829 = vpop.xlane.xlu0 %3828
        %v3830 = vmul.f32 %v3829, %v761
        %v3831 = vadd.f32 %v3830, 1e-06
        %v3832 = vrsqrt.pop %v3831
        %v3833 = vmul.f32 %v3824, %v3832
        %v3835 = vlaneseq
        %v3836 = vshrl.u32 %v3835, 7
        %v3837 = vsub.s32 0, %v3836
        %v3838 = vrot.slane %v3825, %v3837
        %v3840 = vmul.f32 %v3833, %v3838
        %v3841 = vpack.c.bf16 %v3840, %v3840
        %v3842 = vld [vmem:[%s20] sm:$0xff]
        %v3843 = vld [vmem:[%s20 + $0x8] sm:$0xff]
        %v3844 = vld [vmem:[%s20 + $0x10] sm:$0xff]
        %v3845 = vld [vmem:[%s20 + $0x18] sm:$0xff]
        %v3846 = vld [vmem:[%s20 + $0x20] sm:$0xff]
        %v3847 = vld [vmem:[%s20 + $0x28] sm:$0xff]
        %v3848 = vld [vmem:[%s20 + $0x30] sm:$0xff]
        %v3849 = vld [vmem:[%s20 + $0x38] sm:$0xff]
        %v3858 = vunpack.c.l.b16 %v3842
        %v3859 = vunpack.c.h.b16 %v3842
        %v3860 = vunpack.c.l.b16 %v3843
        %v3861 = vunpack.c.h.b16 %v3843
        %v3862 = vunpack.c.l.b16 %v3844
        %v3863 = vunpack.c.h.b16 %v3844
        %v3864 = vunpack.c.l.b16 %v3845
        %v3865 = vunpack.c.h.b16 %v3845
        %v3866 = vunpack.c.l.b16 %v3846
        %v3867 = vunpack.c.h.b16 %v3846
        %v3868 = vunpack.c.l.b16 %v3847
        %v3869 = vunpack.c.h.b16 %v3847
        %v3870 = vunpack.c.l.b16 %v3848
        %v3871 = vunpack.c.h.b16 %v3848
        %v3872 = vunpack.c.l.b16 %v3849
        %v3873 = vunpack.c.h.b16 %v3849
        %v3874 = vpack.c.b16 %v3860, %v3858
        %v3875 = vpack.c.b16 %v3861, %v3859
        %v3876 = vpack.c.b16 %v3864, %v3862
        %v3877 = vpack.c.b16 %v3865, %v3863
        %v3878 = vpack.c.b16 %v3868, %v3866
        %v3879 = vpack.c.b16 %v3869, %v3867
        %v3880 = vpack.c.b16 %v3872, %v3870
        %v3881 = vpack.c.b16 %v3873, %v3871
        %v3891 = vsel %vm757, %v3841, 0
        %3893 = vmatprep.subr.bf16.mxu0 %v3875
        %3894 = vmatpush1.bf16.msra.mxu0 %v3874
        %3895 = vmatprep.subr.bf16.mxu0 %v3877
        %3896 = vmatpush1.bf16.msra.mxu0 %v3876
        %3897 = vmatprep.subr.bf16.mxu0 %v3879
        %3898 = vmatpush1.bf16.msra.mxu0 %v3878
        %3899 = vmatprep.subr.bf16.mxu0 %v3881
        %3900 = vmatpush1.bf16.msra.mxu0 %v3880
        %3901 = vmatprep.subr.bf16.mxu0 0
        %3902 = vmatpush1.bf16.msra.mxu0 0
        %3903 = vmatprep.subr.bf16.mxu0 0
        %3904 = vmatpush1.bf16.msra.mxu0 0
        %3905 = vmatprep.subr.bf16.mxu0 0
        %3906 = vmatpush1.bf16.msra.mxu0 0
        %3907 = vmatprep.subr.bf16.mxu0 0
        %3908 = vmatpush1.bf16.msra.mxu0 0
        %3909 = vmatprep.subr.bf16.mxu0 0
        %3910 = vmatpush1.bf16.msra.mxu0 0
        %3911 = vmatprep.subr.bf16.mxu0 0
        %3912 = vmatpush1.bf16.msra.mxu0 0
        %3913 = vmatprep.subr.bf16.mxu0 0
        %3914 = vmatpush1.bf16.msra.mxu0 0
        %3915 = vmatprep.subr.bf16.mxu0 0
        %3916 = vmatpush1.bf16.msra.mxu0 0
        %3917 = vmatprep.subr.bf16.mxu0 0
        %3918 = vmatpush1.bf16.msra.mxu0 0
        %3919 = vmatprep.subr.bf16.mxu0 0
        %3920 = vmatpush1.bf16.msra.mxu0 0
        %3921 = vmatprep.subr.bf16.mxu0 0
        %3922 = vmatpush1.bf16.msra.mxu0 0
        %3923 = vmatprep.subr.bf16.mxu0 0
        %3924 = vmatpush1.bf16.msra.mxu0 0
        %3925 = vmatprep.mubr.bf16.mxu0 0
        %3926 = vmatmul.mubr.bf16.gmra.mrb[0].mxu0 %v3891
        %v3927 = vpop.f32.mrb[0].mxu0
        %v3928 = vadd.f32 0.0, %v3927
        %v3929 = vpop.f32.mrb[0].mxu0
        %v3930 = vadd.f32 0.0, %v3929
        %v3931 = vpop.f32.mrb[0].mxu0
        %v3932 = vpop.f32.mrb[0].mxu0
        %3933 = vdwg.mxu0
        %v3934 = vld [vmem:[%s21] sm:$0xff]
        %v3935 = vld [vmem:[%s21 + $0x8] sm:$0xff]
        %v3936 = vld [vmem:[%s21 + $0x10] sm:$0xff]
        %v3937 = vld [vmem:[%s21 + $0x18] sm:$0xff]
        %v3938 = vld [vmem:[%s21 + $0x20] sm:$0xff]
        %v3939 = vld [vmem:[%s21 + $0x28] sm:$0xff]
        %v3940 = vld [vmem:[%s21 + $0x30] sm:$0xff]
        %v3941 = vld [vmem:[%s21 + $0x38] sm:$0xff]
        %v3950 = vunpack.c.l.b16 %v3934
        %v3951 = vunpack.c.h.b16 %v3934
        %v3952 = vunpack.c.l.b16 %v3935
        %v3953 = vunpack.c.h.b16 %v3935
        %v3954 = vunpack.c.l.b16 %v3936
        %v3955 = vunpack.c.h.b16 %v3936
        %v3956 = vunpack.c.l.b16 %v3937
        %v3957 = vunpack.c.h.b16 %v3937
        %v3958 = vunpack.c.l.b16 %v3938
        %v3959 = vunpack.c.h.b16 %v3938
        %v3960 = vunpack.c.l.b16 %v3939
        %v3961 = vunpack.c.h.b16 %v3939
        %v3962 = vunpack.c.l.b16 %v3940
        %v3963 = vunpack.c.h.b16 %v3940
        %v3964 = vunpack.c.l.b16 %v3941
        %v3965 = vunpack.c.h.b16 %v3941
        %v3966 = vpack.c.b16 %v3952, %v3950
        %v3967 = vpack.c.b16 %v3953, %v3951
        %v3968 = vpack.c.b16 %v3956, %v3954
        %v3969 = vpack.c.b16 %v3957, %v3955
        %v3970 = vpack.c.b16 %v3960, %v3958
        %v3971 = vpack.c.b16 %v3961, %v3959
        %v3972 = vpack.c.b16 %v3964, %v3962
        %v3973 = vpack.c.b16 %v3965, %v3963
        %3982 = vmatprep.subr.bf16.mxu0 %v3967
        %3983 = vmatpush1.bf16.msra.mxu0 %v3966
        %3984 = vmatprep.subr.bf16.mxu0 %v3969
        %3985 = vmatpush1.bf16.msra.mxu0 %v3968
        %3986 = vmatprep.subr.bf16.mxu0 %v3971
        %3987 = vmatpush1.bf16.msra.mxu0 %v3970
        %3988 = vmatprep.subr.bf16.mxu0 %v3973
        %3989 = vmatpush1.bf16.msra.mxu0 %v3972
        %3990 = vmatprep.subr.bf16.mxu0 0
        %3991 = vmatpush1.bf16.msra.mxu0 0
        %3992 = vmatprep.subr.bf16.mxu0 0
        %3993 = vmatpush1.bf16.msra.mxu0 0
        %3994 = vmatprep.subr.bf16.mxu0 0
        %3995 = vmatpush1.bf16.msra.mxu0 0
        %3996 = vmatprep.subr.bf16.mxu0 0
        %3997 = vmatpush1.bf16.msra.mxu0 0
        %3998 = vmatprep.subr.bf16.mxu0 0
        %3999 = vmatpush1.bf16.msra.mxu0 0
        %4000 = vmatprep.subr.bf16.mxu0 0
        %4001 = vmatpush1.bf16.msra.mxu0 0
        %4002 = vmatprep.subr.bf16.mxu0 0
        %4003 = vmatpush1.bf16.msra.mxu0 0
        %4004 = vmatprep.subr.bf16.mxu0 0
        %4005 = vmatpush1.bf16.msra.mxu0 0
        %4006 = vmatprep.subr.bf16.mxu0 0
        %4007 = vmatpush1.bf16.msra.mxu0 0
        %4008 = vmatprep.subr.bf16.mxu0 0
        %4009 = vmatpush1.bf16.msra.mxu0 0
        %4010 = vmatprep.subr.bf16.mxu0 0
        %4011 = vmatpush1.bf16.msra.mxu0 0
        %4012 = vmatprep.subr.bf16.mxu0 0
        %4013 = vmatpush1.bf16.msra.mxu0 0
        %4014 = vmatprep.mubr.bf16.mxu0 0
        %4015 = vmatmul.mubr.bf16.gmra.mrb[0].mxu0 %v3891
        %v4016 = vpop.f32.mrb[0].mxu0
        %v4017 = vadd.f32 0.0, %v4016
        %v4018 = vpop.f32.mrb[0].mxu0
        %v4019 = vadd.f32 0.0, %v4018
        %v4020 = vpop.f32.mrb[0].mxu0
        %v4021 = vpop.f32.mrb[0].mxu0
        %4022 = vdwg.mxu0
        %v4023 = vxor.u32 %v3928, 2147483648
        %v4024 = vxor.u32 %v3930, 2147483648
        %v4025 = vmul.f32 %v4023, 1.442695
        %v4026 = vpow.pop %v4025
        %v4027 = vmul.f32 %v4024, 1.442695
        %v4028 = vpow.pop %v4027
        %v4029 = vadd.f32 %v4026, 1.0
        %v4030 = vadd.f32 %v4028, 1.0
        %v4031 = vrcp.pop %v4029
        %v4032 = vmul.f32 1.0, %v4031
        %v4033 = vrcp.pop %v4030
        %v4034 = vmul.f32 1.0, %v4033
        %v4035 = vmul.f32 %v3928, %v4032
        %v4036 = vmul.f32 %v3930, %v4034
        %v4037 = vmul.f32 %v4035, %v4017
        %v4038 = vmul.f32 %v4036, %v4019
        %v4039 = vpack.c.bf16 %v4037, %v4037
        %v4040 = vpack.c.bf16 %v4038, %v4038
        %v4041 = vld [vmem:[%s22] sm:$0xf]
        %v4042 = vld [vmem:[%s22 + $0x4] sm:$0xf]
        %v4043 = vld [vmem:[%s22 + $0x8] sm:$0xf]
        %v4044 = vld [vmem:[%s22 + $0xc] sm:$0xf]
        %v4045 = vld [vmem:[%s22 + $0x10] sm:$0xf]
        %v4046 = vld [vmem:[%s22 + $0x14] sm:$0xf]
        %v4047 = vld [vmem:[%s22 + $0x18] sm:$0xf]
        %v4048 = vld [vmem:[%s22 + $0x1c] sm:$0xf]
        %v4049 = vld [vmem:[%s22 + $0x20] sm:$0xf]
        %v4050 = vld [vmem:[%s22 + $0x24] sm:$0xf]
        %v4051 = vld [vmem:[%s22 + $0x28] sm:$0xf]
        %v4052 = vld [vmem:[%s22 + $0x2c] sm:$0xf]
        %v4053 = vld [vmem:[%s22 + $0x30] sm:$0xf]
        %v4054 = vld [vmem:[%s22 + $0x34] sm:$0xf]
        %v4055 = vld [vmem:[%s22 + $0x38] sm:$0xf]
        %v4056 = vld [vmem:[%s22 + $0x3c] sm:$0xf]
        %v4057 = vld [vmem:[%s22 + $0x40] sm:$0xf]
        %v4058 = vld [vmem:[%s22 + $0x44] sm:$0xf]
        %v4059 = vld [vmem:[%s22 + $0x48] sm:$0xf]
        %v4060 = vld [vmem:[%s22 + $0x4c] sm:$0xf]
        %v4061 = vld [vmem:[%s22 + $0x50] sm:$0xf]
        %v4062 = vld [vmem:[%s22 + $0x54] sm:$0xf]
        %v4063 = vld [vmem:[%s22 + $0x58] sm:$0xf]
        %v4064 = vld [vmem:[%s22 + $0x5c] sm:$0xf]
        %v4065 = vld [vmem:[%s22 + $0x60] sm:$0xf]
        %v4066 = vld [vmem:[%s22 + $0x64] sm:$0xf]
        %v4067 = vld [vmem:[%s22 + $0x68] sm:$0xf]
        %v4068 = vld [vmem:[%s22 + $0x6c] sm:$0xf]
        %v4069 = vld [vmem:[%s22 + $0x70] sm:$0xf]
        %v4070 = vld [vmem:[%s22 + $0x74] sm:$0xf]
        %v4071 = vld [vmem:[%s22 + $0x78] sm:$0xf]
        %v4072 = vld [vmem:[%s22 + $0x7c] sm:$0xf]
        %v4105 = vunpack.c.l.b16 %v4041
        %v4106 = vunpack.c.l.b16 %v4042
        %v4107 = vunpack.c.l.b16 %v4043
        %v4108 = vunpack.c.l.b16 %v4044
        %v4109 = vunpack.c.l.b16 %v4045
        %v4110 = vunpack.c.l.b16 %v4046
        %v4111 = vunpack.c.l.b16 %v4047
        %v4112 = vunpack.c.l.b16 %v4048
        %v4113 = vunpack.c.l.b16 %v4049
        %v4114 = vunpack.c.l.b16 %v4050
        %v4115 = vunpack.c.l.b16 %v4051
        %v4116 = vunpack.c.l.b16 %v4052
        %v4117 = vunpack.c.l.b16 %v4053
        %v4118 = vunpack.c.l.b16 %v4054
        %v4119 = vunpack.c.l.b16 %v4055
        %v4120 = vunpack.c.l.b16 %v4056
        %v4121 = vunpack.c.l.b16 %v4057
        %v4122 = vunpack.c.l.b16 %v4058
        %v4123 = vunpack.c.l.b16 %v4059
        %v4124 = vunpack.c.l.b16 %v4060
        %v4125 = vunpack.c.l.b16 %v4061
        %v4126 = vunpack.c.l.b16 %v4062
        %v4127 = vunpack.c.l.b16 %v4063
        %v4128 = vunpack.c.l.b16 %v4064
        %v4129 = vunpack.c.l.b16 %v4065
        %v4130 = vunpack.c.l.b16 %v4066
        %v4131 = vunpack.c.l.b16 %v4067
        %v4132 = vunpack.c.l.b16 %v4068
        %v4133 = vunpack.c.l.b16 %v4069
        %v4134 = vunpack.c.l.b16 %v4070
        %v4135 = vunpack.c.l.b16 %v4071
        %v4136 = vunpack.c.l.b16 %v4072
        %v4137 = vpack.c.b16 %v4106, %v4105
        %v4138 = vpack.c.b16 %v4108, %v4107
        %v4139 = vpack.c.b16 %v4110, %v4109
        %v4140 = vpack.c.b16 %v4112, %v4111
        %v4141 = vpack.c.b16 %v4114, %v4113
        %v4142 = vpack.c.b16 %v4116, %v4115
        %v4143 = vpack.c.b16 %v4118, %v4117
        %v4144 = vpack.c.b16 %v4120, %v4119
        %v4145 = vpack.c.b16 %v4122, %v4121
        %v4146 = vpack.c.b16 %v4124, %v4123
        %v4147 = vpack.c.b16 %v4126, %v4125
        %v4148 = vpack.c.b16 %v4128, %v4127
        %v4149 = vpack.c.b16 %v4130, %v4129
        %v4150 = vpack.c.b16 %v4132, %v4131
        %v4151 = vpack.c.b16 %v4134, %v4133
        %v4152 = vpack.c.b16 %v4136, %v4135
        %4169 = vmatprep.subr.bf16.mxu0 0
        %4170 = vmatpush1.bf16.msra.mxu0 %v4137
        %4171 = vmatprep.subr.bf16.mxu0 0
        %4172 = vmatpush1.bf16.msra.mxu0 %v4138
        %4173 = vmatprep.subr.bf16.mxu0 0
        %4174 = vmatpush1.bf16.msra.mxu0 %v4139
        %4175 = vmatprep.subr.bf16.mxu0 0
        %4176 = vmatpush1.bf16.msra.mxu0 %v4140
        %4177 = vmatprep.subr.bf16.mxu0 0
        %4178 = vmatpush1.bf16.msra.mxu0 %v4141
        %4179 = vmatprep.subr.bf16.mxu0 0
        %4180 = vmatpush1.bf16.msra.mxu0 %v4142
        %4181 = vmatprep.subr.bf16.mxu0 0
        %4182 = vmatpush1.bf16.msra.mxu0 %v4143
        %4183 = vmatprep.subr.bf16.mxu0 0
        %4184 = vmatpush1.bf16.msra.mxu0 %v4144
        %4185 = vmatprep.subr.bf16.mxu0 0
        %4186 = vmatpush1.bf16.msra.mxu0 %v4145
        %4187 = vmatprep.subr.bf16.mxu0 0
        %4188 = vmatpush1.bf16.msra.mxu0 %v4146
        %4189 = vmatprep.subr.bf16.mxu0 0
        %4190 = vmatpush1.bf16.msra.mxu0 %v4147
        %4191 = vmatprep.subr.bf16.mxu0 0
        %4192 = vmatpush1.bf16.msra.mxu0 %v4148
        %4193 = vmatprep.subr.bf16.mxu0 0
        %4194 = vmatpush1.bf16.msra.mxu0 %v4149
        %4195 = vmatprep.subr.bf16.mxu0 0
        %4196 = vmatpush1.bf16.msra.mxu0 %v4150
        %4197 = vmatprep.subr.bf16.mxu0 0
        %4198 = vmatpush1.bf16.msra.mxu0 %v4151
        %4199 = vmatprep.subr.bf16.mxu0 0
        %4200 = vmatpush1.bf16.msra.mxu0 %v4152
        %4201 = vmatprep.mubr.bf16.mxu0 %v4040
        %4202 = vmatmul.mubr.bf16.gmra.mrb[0].mxu0 %v4039
        %v4203 = vpop.f32.mrb[0].mxu0
        %v4204 = vadd.f32 0.0, %v4203
        %v4205 = vpop.f32.mrb[0].mxu0
        %v4206 = vpop.f32.mrb[0].mxu0
        %v4207 = vpop.f32.mrb[0].mxu0
        %4208 = vdwg.mxu0
        %v4209 = vadd.f32 %v3824, %v4204
        %v4210 = vld [vmem:[%s23] sm:$0x1]
        %v4211 = vmul.f32 %v4209, %v4209
        %v4212 = vsel %vm757, %v4211, 0.0
        %4213 = vadd.xlane.f32.xlu0 %v4212
        %v4214 = vpop.xlane.xlu0 %4213
        %v4215 = vmul.f32 %v4214, %v761
        %v4216 = vadd.f32 %v4215, 1e-06
        %v4217 = vrsqrt.pop %v4216
        %v4218 = vmul.f32 %v4209, %v4217
        %v4220 = vlaneseq
        %v4221 = vshrl.u32 %v4220, 7
        %v4222 = vsub.s32 0, %v4221
        %v4223 = vrot.slane %v4210, %v4222
        %v4225 = vmul.f32 %v4218, %v4223
        %4226 = vst.msk [vmem:[%s741] sm:$0xff] %vm757, %v4225
        %s4227 = sand.u32 %s560, 1
        %s4228 = scalar_lea.sflag [#allocation4], %s4227
        %s4229 = sand.u32 %s560, 1
        %s4230 = smul.addr %s4229, 8
        %s4231 = scalar_lea.vmem [#allocation3], %s4230
        // Predicated region
        $region117: #{idefics2_perceiver_resampler.1} parent=115 // pred_check
          %p4232 = pneg %p570
        $region118: #{idefics2_perceiver_resampler.1} parent=115 // pred_check_branch
          %4234 = sbr.rel (%p4232) target = $region120
        $region119: #{idefics2_perceiver_resampler.1} parent=115 // pred_region
          %s4236 = ssub.s32 128, 128
          %4237 = vsyncadd %s4228, %s4236
          %s4238 = smul.addr %s38, 128
          %s4239 = scalar_lea.hbm %s24, %s4238
          %s4241 = sshll.u32 %s4231, 4
          %s4242 = int_to_ptr.vmem [resolvable:$true] %s4241
          %4244 = dma.vmem_to_hbm [thread:$0]  %s4242, 128, %s4239, %s4228
        $region120: #{idefics2_perceiver_resampler.1} parent=115 // pred_fallthru
          _
      $region116: #{idefics2_perceiver_resampler.1} parent=5 // pred_fallthru
        _
      %p4245 = scmp.le.s32.totalorder 2, %s33
      // Predicated region
      $region121: #{idefics2_perceiver_resampler.1} parent=5 // pred_check
        %p4246 = pneg %p4245
      $region122: #{idefics2_perceiver_resampler.1} parent=5 // pred_check_branch
        %4248 = sbr.rel (%p4246) target = $region124
      $region123: #{idefics2_perceiver_resampler.1} parent=5 // pred_region
        %s4249 = ssub.s32 %s33, 2
        // Predicated region
        $region125: #{idefics2_perceiver_resampler.1} parent=123 // pred_check
          %p4250 = pneg %p576
        $region126: #{idefics2_perceiver_resampler.1} parent=123 // pred_check_branch
          %4252 = sbr.rel (%p4250) target = $region128
        $region127: #{idefics2_perceiver_resampler.1} parent=123 // pred_region
          %s4253 = sand.u32 %s561, 1
          %s4254 = scalar_lea.sflag [#allocation4], %s4253
          %s4255 = sand.u32 %s561, 1
          %s4256 = smul.addr %s4255, 8
          %s4257 = scalar_lea.vmem [#allocation3], %s4256
          %4258 = dma.done %s4254, 128
        $region128: #{idefics2_perceiver_resampler.1} parent=123 // pred_fallthru
          _
      $region124: #{idefics2_perceiver_resampler.1} parent=5 // pred_fallthru
        _
    $region6: #{idefics2_perceiver_resampler.1} parent=1 // loop_footer
      %s37 = sadd.s32 1, %s33
    $region7: #{idefics2_perceiver_resampler.1} parent=1 // loop_footer_branch
      %32 = sbr.rel target = $region3
    $region8: #{idefics2_perceiver_resampler.1} parent=1 // loop_exit
      _
    %4259 = vsyncpa [#allocation4], 1
    %s4260 = scalar_lea.sflag [#allocation4], 1
    %4261 = vsyncpa %s4260, 1

</llo_original>
